<compile_context>
chip_gen: v5e
topology: v5e:2x2
jax: 0.10.0
libtpu: 0.0.40
codegen_flags: <defaults>
</compile_context>

<pallas_src>
import jax
import jax.numpy as jnp
from jax.experimental import pallas as pl
from jax.experimental.pallas import tpu as pltpu

IN_FEATURES = 28 * 28   # 784
IN_PADDED = 896         # 7 * 128 : lane-aligned K for the first matmul
HIDDEN = 512
OUT_FEATURES = 10
OUT_PADDED = 128        # lane-dense output tile (unmasked vst)
BATCH_TILE = 128        # multiple of 8 sublanes; fills MXU M on v5e


def mlp_kernel(x_ref, w1_ref, b1_ref, w2_ref, b2_ref, w3_ref, b3_ref, o_ref):
    # Layer 1: (TB, 896)bf16 @ (896, 512)bf16 -> f32 accumulator, +bias, ReLU
    h1 = jnp.dot(x_ref[...], w1_ref[...], preferred_element_type=jnp.float32)
    h1 = jnp.maximum(h1 + b1_ref[...], 0.0)
    # Layer 2: (TB, 512) @ (512, 512)
    h2 = jnp.dot(h1.astype(jnp.bfloat16), w2_ref[...],
                 preferred_element_type=jnp.float32)
    h2 = jnp.maximum(h2 + b2_ref[...], 0.0)
    # Layer 3: (TB, 512) @ (512, 128) -- output padded to 128 lanes
    logits = jnp.dot(h2.astype(jnp.bfloat16), w3_ref[...],
                     preferred_element_type=jnp.float32)
    o_ref[...] = (logits + b3_ref[...]).astype(o_ref.dtype)


def init_params(key):
    """Deterministic init matching the nn.Linear shapes (weights stored as (in, out))."""
    k1, k2, k3, k4, k5, k6 = jax.random.split(key, 6)

    def uniform_init(k, shape, fan_in):
        bound = 1.0 / jnp.sqrt(fan_in)
        return jax.random.uniform(k, shape, jnp.float32, -bound, bound)

    w1 = uniform_init(k1, (IN_FEATURES, HIDDEN), IN_FEATURES)
    b1 = uniform_init(k2, (1, HIDDEN), IN_FEATURES)
    w2 = uniform_init(k3, (HIDDEN, HIDDEN), HIDDEN)
    b2 = uniform_init(k4, (1, HIDDEN), HIDDEN)
    w3 = uniform_init(k5, (HIDDEN, OUT_FEATURES), HIDDEN)
    b3 = uniform_init(k6, (1, OUT_FEATURES), HIDDEN)
    return (w1, b1, w2, b2, w3, b3)


def prepare_kernel_params(params):
    """One-time (amortized) prep: pad K 784->896 and N 10->128, cast weights to bf16.
    Biases stay f32 (added to the f32 accumulator)."""
    w1, b1, w2, b2, w3, b3 = params
    w1p = jnp.zeros((IN_PADDED, HIDDEN), jnp.bfloat16)
    w1p = w1p.at[:IN_FEATURES, :].set(w1.astype(jnp.bfloat16))
    w3p = jnp.zeros((HIDDEN, OUT_PADDED), jnp.bfloat16)
    w3p = w3p.at[:, :OUT_FEATURES].set(w3.astype(jnp.bfloat16))
    b3p = jnp.zeros((1, OUT_PADDED), jnp.float32)
    b3p = b3p.at[:, :OUT_FEATURES].set(b3)
    return (w1p, b1.astype(jnp.float32), w2.astype(jnp.bfloat16),
            b2.astype(jnp.float32), w3p, b3p)


def neural_network_forward(x_nchw, kernel_params, *, batch_tile=BATCH_TILE):
    """x_nchw: (B, 1, 28, 28) float32. Returns logits (B, 10) float32."""
    w1, b1, w2, b2, w3, b3 = kernel_params
    B = x_nchw.shape[0]
    x2d = x_nchw.reshape(B, -1).astype(jnp.bfloat16)      # nn.Flatten()

    # Pad batch to a multiple of the batch tile and features 784 -> 896.
    Bp = pl.cdiv(B, batch_tile) * batch_tile
    xp = jnp.zeros((Bp, IN_PADDED), jnp.bfloat16)
    xp = xp.at[:B, :IN_FEATURES].set(x2d)

    resident = lambda i: (0, 0)   # constant block index -> weights stay VMEM-resident
    out_padded = pl.pallas_call(
        mlp_kernel,
        out_shape=jax.ShapeDtypeStruct((Bp, OUT_PADDED), jnp.float32),
        grid=(Bp // batch_tile,),
        in_specs=[
            pl.BlockSpec((batch_tile, IN_PADDED), lambda i: (i, 0)),
            pl.BlockSpec((IN_PADDED, HIDDEN), resident),
            pl.BlockSpec((1, HIDDEN), resident),
            pl.BlockSpec((HIDDEN, HIDDEN), resident),
            pl.BlockSpec((1, HIDDEN), resident),
            pl.BlockSpec((HIDDEN, OUT_PADDED), resident),
            pl.BlockSpec((1, OUT_PADDED), resident),
        ],
        out_specs=pl.BlockSpec((batch_tile, OUT_PADDED), lambda i: (i, 0)),
        compiler_params=pltpu.CompilerParams(
            dimension_semantics=("parallel",)),  # v7x: shard batch tiles across both TCs
    )(xp, w1, b1, w2, b2, w3, b3)

    return out_padded[:B, :OUT_FEATURES]


if __name__ == "__main__":
    key = jax.random.PRNGKey(0)
    pkey, xkey = jax.random.split(key)
    params = init_params(pkey)
    kparams = prepare_kernel_params(params)

    # Small batch of MNIST-shaped inputs: NCHW (B=8, C=1, H=28, W=28)
    x = jax.random.normal(xkey, (8, 1, 28, 28), dtype=jnp.float32)

    logits = neural_network_forward(x, kparams)
    logits = jax.block_until_ready(logits)
    assert logits.shape == (8, 10) and logits.dtype == jnp.float32

    # f32 reference; bf16 weights/activations in the kernel -> loosened tolerance.
    w1, b1, w2, b2, w3, b3 = params
    xf = x.reshape(8, -1)
    ref = jnp.maximum(xf @ w1 + b1, 0.0)
    ref = jnp.maximum(ref @ w2 + b2, 0.0)
    ref = ref @ w3 + b3
    assert jnp.allclose(logits, ref, atol=5e-2, rtol=5e-2), float(
        jnp.max(jnp.abs(logits - ref)))

    print("KERNEL_OK")
</pallas_src>

<mosaic_0001>
module attributes {stable_mosaic.version = 11 : i64} {
  func.func @mlp_kernel(%arg0: i32, %arg1: memref<128x896xbf16, #tpu.memory_space<vmem>>, %arg2: memref<896x512xbf16, #tpu.memory_space<vmem>>, %arg3: memref<1x512xf32, #tpu.memory_space<vmem>>, %arg4: memref<512x512xbf16, #tpu.memory_space<vmem>>, %arg5: memref<1x512xf32, #tpu.memory_space<vmem>>, %arg6: memref<512x128xbf16, #tpu.memory_space<vmem>>, %arg7: memref<1x128xf32, #tpu.memory_space<vmem>>, %arg8: memref<128x128xf32, #tpu.memory_space<vmem>>) attributes {dimension_semantics = [#tpu.dimension_semantics<parallel>], iteration_bounds = array<i64: 1>, scalar_prefetch = 0 : i64, scratch_operands = 0 : i64, tpu.core_type = #tpu.core_type<tc>, window_params = [{transform_indices = @transform_0, window_bounds = array<i64: 128, 896>}, {pipeline_mode = #tpu.pipeline_mode<synchronous>, transform_indices = @transform_1, window_bounds = array<i64: 896, 512>}, {pipeline_mode = #tpu.pipeline_mode<synchronous>, transform_indices = @transform_2, window_bounds = array<i64: 1, 512>}, {pipeline_mode = #tpu.pipeline_mode<synchronous>, transform_indices = @transform_3, window_bounds = array<i64: 512, 512>}, {pipeline_mode = #tpu.pipeline_mode<synchronous>, transform_indices = @transform_4, window_bounds = array<i64: 1, 512>}, {pipeline_mode = #tpu.pipeline_mode<synchronous>, transform_indices = @transform_5, window_bounds = array<i64: 512, 128>}, {pipeline_mode = #tpu.pipeline_mode<synchronous>, transform_indices = @transform_6, window_bounds = array<i64: 1, 128>}, {transform_indices = @transform_7, window_bounds = array<i64: 128, 128>}]} {
    %c0 = arith.constant 0 : index
    %c0_0 = arith.constant 0 : index
    %0 = vector.load %arg1[%c0, %c0_0] : memref<128x896xbf16, #tpu.memory_space<vmem>>, vector<128x896xbf16>
    %c0_1 = arith.constant 0 : index
    %c0_2 = arith.constant 0 : index
    %1 = vector.load %arg2[%c0_1, %c0_2] : memref<896x512xbf16, #tpu.memory_space<vmem>>, vector<896x512xbf16>
    %cst = arith.constant dense<0.000000e+00> : vector<128x512xf32>
    %2 = tpu.matmul %0, %1, %cst {dimension_numbers = #tpu.dot_dimension_numbers<[1], [0], [0], [1], [0, 0, 1, 1], [], []>} : vector<128x896xbf16>, vector<896x512xbf16>, vector<128x512xf32> -> vector<128x512xf32>
    %c0_3 = arith.constant 0 : index
    %c0_4 = arith.constant 0 : index
    %3 = vector.load %arg3[%c0_3, %c0_4] : memref<1x512xf32, #tpu.memory_space<vmem>>, vector<1x512xf32>
    %4 = vector.broadcast %3 : vector<1x512xf32> to vector<128x512xf32>
    %5 = arith.addf %2, %4 : vector<128x512xf32>
    %cst_5 = arith.constant 0.000000e+00 : f32
    %6 = vector.broadcast %cst_5 : f32 to vector<128x512xf32>
    %7 = arith.maximumf %5, %6 : vector<128x512xf32>
    %8 = arith.truncf %7 : vector<128x512xf32> to vector<128x512xbf16>
    %c0_6 = arith.constant 0 : index
    %c0_7 = arith.constant 0 : index
    %9 = vector.load %arg4[%c0_6, %c0_7] : memref<512x512xbf16, #tpu.memory_space<vmem>>, vector<512x512xbf16>
    %cst_8 = arith.constant dense<0.000000e+00> : vector<128x512xf32>
    %10 = tpu.matmul %8, %9, %cst_8 {dimension_numbers = #tpu.dot_dimension_numbers<[1], [0], [0], [1], [0, 0, 1, 1], [], []>} : vector<128x512xbf16>, vector<512x512xbf16>, vector<128x512xf32> -> vector<128x512xf32>
    %c0_9 = arith.constant 0 : index
    %c0_10 = arith.constant 0 : index
    %11 = vector.load %arg5[%c0_9, %c0_10] : memref<1x512xf32, #tpu.memory_space<vmem>>, vector<1x512xf32>
    %12 = vector.broadcast %11 : vector<1x512xf32> to vector<128x512xf32>
    %13 = arith.addf %10, %12 : vector<128x512xf32>
    %cst_11 = arith.constant 0.000000e+00 : f32
    %14 = vector.broadcast %cst_11 : f32 to vector<128x512xf32>
    %15 = arith.maximumf %13, %14 : vector<128x512xf32>
    %16 = arith.truncf %15 : vector<128x512xf32> to vector<128x512xbf16>
    %c0_12 = arith.constant 0 : index
    %c0_13 = arith.constant 0 : index
    %17 = vector.load %arg6[%c0_12, %c0_13] : memref<512x128xbf16, #tpu.memory_space<vmem>>, vector<512x128xbf16>
    %cst_14 = arith.constant dense<0.000000e+00> : vector<128x128xf32>
    %18 = tpu.matmul %16, %17, %cst_14 {dimension_numbers = #tpu.dot_dimension_numbers<[1], [0], [0], [1], [0, 0, 1, 1], [], []>} : vector<128x512xbf16>, vector<512x128xbf16>, vector<128x128xf32> -> vector<128x128xf32>
    %c0_15 = arith.constant 0 : index
    %c0_16 = arith.constant 0 : index
    %19 = vector.load %arg7[%c0_15, %c0_16] : memref<1x128xf32, #tpu.memory_space<vmem>>, vector<1x128xf32>
    %20 = vector.broadcast %19 : vector<1x128xf32> to vector<128x128xf32>
    %21 = arith.addf %18, %20 : vector<128x128xf32>
    %c0_17 = arith.constant 0 : index
    %c0_18 = arith.constant 0 : index
    %22 = vector.load %arg8[%c0_17, %c0_18] : memref<128x128xf32, #tpu.memory_space<vmem>>, vector<128x128xf32>
    tpu.vector_store %arg8[%c0_17, %c0_18], %21 {strides = array<i32>} : memref<128x128xf32, #tpu.memory_space<vmem>>, vector<128x128xf32>,
    return
  }
  func.func @transform_0(%arg0: i32) -> (i32, i32) {
    %c0_i32 = arith.constant 0 : i32
    %c0_i32_0 = arith.constant 0 : i32
    return %arg0, %c0_i32 : i32, i32
  }
  func.func @transform_1(%arg0: i32) -> (i32, i32) {
    %c0_i32 = arith.constant 0 : i32
    %c0_i32_0 = arith.constant 0 : i32
    %c0_i32_1 = arith.constant 0 : i32
    return %c0_i32, %c0_i32_0 : i32, i32
  }
  func.func @transform_2(%arg0: i32) -> (i32, i32) {
    %c0_i32 = arith.constant 0 : i32
    %c0_i32_0 = arith.constant 0 : i32
    %c0_i32_1 = arith.constant 0 : i32
    return %c0_i32, %c0_i32_0 : i32, i32
  }
  func.func @transform_3(%arg0: i32) -> (i32, i32) {
    %c0_i32 = arith.constant 0 : i32
    %c0_i32_0 = arith.constant 0 : i32
    %c0_i32_1 = arith.constant 0 : i32
    return %c0_i32, %c0_i32_0 : i32, i32
  }
  func.func @transform_4(%arg0: i32) -> (i32, i32) {
    %c0_i32 = arith.constant 0 : i32
    %c0_i32_0 = arith.constant 0 : i32
    %c0_i32_1 = arith.constant 0 : i32
    return %c0_i32, %c0_i32_0 : i32, i32
  }
  func.func @transform_5(%arg0: i32) -> (i32, i32) {
    %c0_i32 = arith.constant 0 : i32
    %c0_i32_0 = arith.constant 0 : i32
    %c0_i32_1 = arith.constant 0 : i32
    return %c0_i32, %c0_i32_0 : i32, i32
  }
  func.func @transform_6(%arg0: i32) -> (i32, i32) {
    %c0_i32 = arith.constant 0 : i32
    %c0_i32_0 = arith.constant 0 : i32
    %c0_i32_1 = arith.constant 0 : i32
    return %c0_i32, %c0_i32_0 : i32, i32
  }
  func.func @transform_7(%arg0: i32) -> (i32, i32) {
    %c0_i32 = arith.constant 0 : i32
    %c0_i32_0 = arith.constant 0 : i32
    return %arg0, %c0_i32 : i32, i32
  }
}

</mosaic_0001>

<llo_original>
// kernel: tpu_custom_call.1
$region0: #{tpu_custom_call.1}
  #allocation0 [shape = 'u32[]', space=smem, size = 0x4, offset = 0x4, fixed_abs, tag = 'smem constant byte address 0x4 - core index']
  #allocation1 [shape = 'u32[72,128]{1,0:T(1,128)}', space=vmem, size = 0x9000, scoped, tag = 'internal scratch']
  %s0 = inlined_call_operand.hbm [shape: bf16[128,896], index: 0, kind: input, shape index: {}]
  %s1 = inlined_call_operand.hbm [shape: bf16[896,512], index: 1, kind: input, shape index: {}]
  %s2 = inlined_call_operand.hbm [shape: f32[1,512], index: 2, kind: input, shape index: {}]
  %s3 = inlined_call_operand.hbm [shape: bf16[512,512], index: 3, kind: input, shape index: {}]
  %s4 = inlined_call_operand.hbm [shape: f32[1,512], index: 4, kind: input, shape index: {}]
  %s5 = inlined_call_operand.hbm [shape: bf16[512,128], index: 5, kind: input, shape index: {}]
  %s6 = inlined_call_operand.vmem [shape: f32[1,128], index: 6, kind: input, shape index: {}]
  %s7 = inlined_call_operand.hbm [shape: f32[128,128], index: 7, kind: output, shape index: {}]
  %s8 = sld [smem:[#allocation0]]
  $region62: #{tpu_custom_call.1} parent=0
    _
  %s10 = ssub.s32 1, %s8
  %s11 = scalar_select 0, %s10, %s8
  $region1: #{tpu_custom_call.1} parent=0
    #allocation2 [shape = 'u8[229376]{0}', space=vmem, size = 0x38000, scoped, tag = 'input window, operand 0, single buffered']
    #allocation3 [shape = 's32[1]{0}', space=sflag, size = 0x4, scoped, tag = 'scoped memory for tpu_custom_call.1']
    #allocation4 [shape = 's32[1]{0}', space=sflag, size = 0x4, scoped, tag = 'scoped memory for tpu_custom_call.1']
    #allocation5 [shape = 'u8[917504]{0}', space=vmem, size = 0xe0000, scoped, tag = 'input window, operand 1, single buffered']
    #allocation6 [shape = 's32[1]{0}', space=sflag, size = 0x4, scoped, tag = 'scoped memory for tpu_custom_call.1']
    #allocation7 [shape = 'u8[2048]{0}', space=vmem, size = 0x800, scoped, tag = 'input window, operand 2, single buffered']
    #allocation8 [shape = 'u8[524288]{0}', space=vmem, size = 0x80000, scoped, tag = 'input window, operand 3, single buffered']
    #allocation9 [shape = 's32[1]{0}', space=sflag, size = 0x4, scoped, tag = 'scoped memory for tpu_custom_call.1']
    #allocation10 [shape = 'u8[2048]{0}', space=vmem, size = 0x800, scoped, tag = 'input window, operand 4, single buffered']
    #allocation11 [shape = 'u8[131072]{0}', space=vmem, size = 0x20000, scoped, tag = 'input window, operand 5, single buffered']
    #allocation12 [shape = 's32[1]{0}', space=sflag, size = 0x4, scoped, tag = 'scoped memory for tpu_custom_call.1']
    #allocation13 [shape = 'u8[65536]{0}', space=vmem, size = 0x10000, scoped, tag = 'output window, operand 0, single buffered']
    %12 = vsyncpa [#allocation3], 0
    %13 = vsyncpa [#allocation6], 0
    %14 = vsyncpa [#allocation9], 0
    %15 = vsyncpa [#allocation12], 0
    %16 = vsyncpa [#allocation4], 0
    // Predicated region
    $region2: #{tpu_custom_call.1} parent=1 // pred_check
      _
    $region3: #{tpu_custom_call.1} parent=1 // pred_check_branch
      %18 = sbr.rel (0) target = $region5
    $region4: #{tpu_custom_call.1} parent=1 // pred_region
      %20 = vsyncadd [#allocation3], 0
      %s21 = sshll.u32 %s0, 4
      %s22 = int_to_ptr.hbm [resolvable:$true] %s21
      %s23 = sshll.u32 [#allocation2], 4
      %s24 = int_to_ptr.vmem [resolvable:$true] %s23
      %29 = dma.hbm_to_vmem [thread:$0]  %s22, 7168, %s24, [#allocation3], 448, 448, 28
    $region5: #{tpu_custom_call.1} parent=1 // pred_fallthru
      _
    // Predicated region
    $region6: #{tpu_custom_call.1} parent=1 // pred_check
      _
    $region7: #{tpu_custom_call.1} parent=1 // pred_check_branch
      %31 = sbr.rel (0) target = $region9
    $region8: #{tpu_custom_call.1} parent=1 // pred_region
      %33 = vsyncadd [#allocation6], 0
      %s34 = sshll.u32 %s1, 4
      %s35 = int_to_ptr.hbm [resolvable:$true] %s34
      %s36 = sshll.u32 [#allocation5], 4
      %s37 = int_to_ptr.vmem [resolvable:$true] %s36
      %42 = dma.hbm_to_vmem [thread:$0]  %s35, 28672, %s37, [#allocation6], 256, 256, 16
    $region9: #{tpu_custom_call.1} parent=1 // pred_fallthru
      _
    // Predicated region
    $region10: #{tpu_custom_call.1} parent=1 // pred_check
      _
    $region11: #{tpu_custom_call.1} parent=1 // pred_check_branch
      %44 = sbr.rel (0) target = $region13
    $region12: #{tpu_custom_call.1} parent=1 // pred_region
      %46 = vsyncadd [#allocation6], 0
      %s48 = sshll.u32 %s2, 4
      %s49 = int_to_ptr.hbm [resolvable:$true] %s48
      %s50 = sshll.u32 [#allocation7], 4
      %s51 = int_to_ptr.vmem [resolvable:$true] %s50
      %53 = dma.hbm_to_vmem [thread:$0]  %s49, 64, %s51, [#allocation6]
    $region13: #{tpu_custom_call.1} parent=1 // pred_fallthru
      _
    // Predicated region
    $region14: #{tpu_custom_call.1} parent=1 // pred_check
      _
    $region15: #{tpu_custom_call.1} parent=1 // pred_check_branch
      %55 = sbr.rel (0) target = $region17
    $region16: #{tpu_custom_call.1} parent=1 // pred_region
      %57 = vsyncadd [#allocation9], 0
      %s58 = sshll.u32 %s3, 4
      %s59 = int_to_ptr.hbm [resolvable:$true] %s58
      %s60 = sshll.u32 [#allocation8], 4
      %s61 = int_to_ptr.vmem [resolvable:$true] %s60
      %66 = dma.hbm_to_vmem [thread:$0]  %s59, 16384, %s61, [#allocation9], 256, 256, 16
    $region17: #{tpu_custom_call.1} parent=1 // pred_fallthru
      _
    // Predicated region
    $region18: #{tpu_custom_call.1} parent=1 // pred_check
      _
    $region19: #{tpu_custom_call.1} parent=1 // pred_check_branch
      %68 = sbr.rel (0) target = $region21
    $region20: #{tpu_custom_call.1} parent=1 // pred_region
      %70 = vsyncadd [#allocation9], 0
      %s72 = sshll.u32 %s4, 4
      %s73 = int_to_ptr.hbm [resolvable:$true] %s72
      %s74 = sshll.u32 [#allocation10], 4
      %s75 = int_to_ptr.vmem [resolvable:$true] %s74
      %77 = dma.hbm_to_vmem [thread:$0]  %s73, 64, %s75, [#allocation9]
    $region21: #{tpu_custom_call.1} parent=1 // pred_fallthru
      _
    // Predicated region
    $region22: #{tpu_custom_call.1} parent=1 // pred_check
      _
    $region23: #{tpu_custom_call.1} parent=1 // pred_check_branch
      %79 = sbr.rel (0) target = $region25
    $region24: #{tpu_custom_call.1} parent=1 // pred_region
      %81 = vsyncadd [#allocation12], 0
      %s82 = sshll.u32 %s5, 4
      %s83 = int_to_ptr.hbm [resolvable:$true] %s82
      %s84 = sshll.u32 [#allocation11], 4
      %s85 = int_to_ptr.vmem [resolvable:$true] %s84
      %90 = dma.hbm_to_vmem [thread:$0]  %s83, 4096, %s85, [#allocation12], 64, 64, 4
    $region25: #{tpu_custom_call.1} parent=1 // pred_fallthru
      _
    // Predicated region
    $region26: #{tpu_custom_call.1} parent=1 // pred_check
      _
    $region27: #{tpu_custom_call.1} parent=1 // pred_check_branch
      %92 = sbr.rel (0) target = $region29
    $region28: #{tpu_custom_call.1} parent=1 // pred_region
      _
    $region29: #{tpu_custom_call.1} parent=1 // pred_fallthru
      _
    // Predicated region
    $region30: #{tpu_custom_call.1} parent=1 // pred_check
      _
    $region31: #{tpu_custom_call.1} parent=1 // pred_check_branch
      %94 = sbr.rel (0) target = $region33
    $region32: #{tpu_custom_call.1} parent=1 // pred_region
      %96 = dma.done [#allocation3], 7168
    $region33: #{tpu_custom_call.1} parent=1 // pred_fallthru
      _
    // Predicated region
    $region34: #{tpu_custom_call.1} parent=1 // pred_check
      _
    $region35: #{tpu_custom_call.1} parent=1 // pred_check_branch
      %98 = sbr.rel (0) target = $region37
    $region36: #{tpu_custom_call.1} parent=1 // pred_region
      %100 = dma.done [#allocation6], 28672
    $region37: #{tpu_custom_call.1} parent=1 // pred_fallthru
      _
    // Predicated region
    $region38: #{tpu_custom_call.1} parent=1 // pred_check
      _
    $region39: #{tpu_custom_call.1} parent=1 // pred_check_branch
      %102 = sbr.rel (0) target = $region41
    $region40: #{tpu_custom_call.1} parent=1 // pred_region
      %104 = dma.done [#allocation6], 64
    $region41: #{tpu_custom_call.1} parent=1 // pred_fallthru
      _
    // Predicated region
    $region42: #{tpu_custom_call.1} parent=1 // pred_check
      _
    $region43: #{tpu_custom_call.1} parent=1 // pred_check_branch
      %106 = sbr.rel (0) target = $region45
    $region44: #{tpu_custom_call.1} parent=1 // pred_region
      %108 = dma.done [#allocation9], 16384
    $region45: #{tpu_custom_call.1} parent=1 // pred_fallthru
      _
    // Predicated region
    $region46: #{tpu_custom_call.1} parent=1 // pred_check
      _
    $region47: #{tpu_custom_call.1} parent=1 // pred_check_branch
      %110 = sbr.rel (0) target = $region49
    $region48: #{tpu_custom_call.1} parent=1 // pred_region
      %112 = dma.done [#allocation9], 64
    $region49: #{tpu_custom_call.1} parent=1 // pred_fallthru
      _
    // Predicated region
    $region50: #{tpu_custom_call.1} parent=1 // pred_check
      _
    $region51: #{tpu_custom_call.1} parent=1 // pred_check_branch
      %114 = sbr.rel (0) target = $region53
    $region52: #{tpu_custom_call.1} parent=1 // pred_region
      %116 = dma.done [#allocation12], 4096
    $region53: #{tpu_custom_call.1} parent=1 // pred_fallthru
      _
    %v117 = vld [vmem:[#allocation2] sm:$0xff]
    %v118 = vld [vmem:[#allocation2 + $0x8] sm:$0xff]
    %v119 = vld [vmem:[#allocation2 + $0x10] sm:$0xff]
    %v120 = vld [vmem:[#allocation2 + $0x18] sm:$0xf]
    %v121 = vld [vmem:[#allocation2 + $0x1c] sm:$0xff]
    %v122 = vld [vmem:[#allocation2 + $0x24] sm:$0xff]
    %v123 = vld [vmem:[#allocation2 + $0x2c] sm:$0xff]
    %v124 = vld [vmem:[#allocation2 + $0x34] sm:$0xf]
    %v125 = vld [vmem:[#allocation2 + $0x38] sm:$0xff]
    %v126 = vld [vmem:[#allocation2 + $0x40] sm:$0xff]
    %v127 = vld [vmem:[#allocation2 + $0x48] sm:$0xff]
    %v128 = vld [vmem:[#allocation2 + $0x50] sm:$0xf]
    %v129 = vld [vmem:[#allocation2 + $0x54] sm:$0xff]
    %v130 = vld [vmem:[#allocation2 + $0x5c] sm:$0xff]
    %v131 = vld [vmem:[#allocation2 + $0x64] sm:$0xff]
    %v132 = vld [vmem:[#allocation2 + $0x6c] sm:$0xf]
    %v133 = vld [vmem:[#allocation2 + $0x70] sm:$0xff]
    %v134 = vld [vmem:[#allocation2 + $0x78] sm:$0xff]
    %v135 = vld [vmem:[#allocation2 + $0x80] sm:$0xff]
    %v136 = vld [vmem:[#allocation2 + $0x88] sm:$0xf]
    %v137 = vld [vmem:[#allocation2 + $0x8c] sm:$0xff]
    %v138 = vld [vmem:[#allocation2 + $0x94] sm:$0xff]
    %v139 = vld [vmem:[#allocation2 + $0x9c] sm:$0xff]
    %v140 = vld [vmem:[#allocation2 + $0xa4] sm:$0xf]
    %v141 = vld [vmem:[#allocation2 + $0xa8] sm:$0xff]
    %v142 = vld [vmem:[#allocation2 + $0xb0] sm:$0xff]
    %v143 = vld [vmem:[#allocation2 + $0xb8] sm:$0xff]
    %v144 = vld [vmem:[#allocation2 + $0xc0] sm:$0xf]
    %v145 = vld [vmem:[#allocation2 + $0xc4] sm:$0xff]
    %v146 = vld [vmem:[#allocation2 + $0xcc] sm:$0xff]
    %v147 = vld [vmem:[#allocation2 + $0xd4] sm:$0xff]
    %v148 = vld [vmem:[#allocation2 + $0xdc] sm:$0xf]
    %v149 = vld [vmem:[#allocation2 + $0xe0] sm:$0xff]
    %v150 = vld [vmem:[#allocation2 + $0xe8] sm:$0xff]
    %v151 = vld [vmem:[#allocation2 + $0xf0] sm:$0xff]
    %v152 = vld [vmem:[#allocation2 + $0xf8] sm:$0xf]
    %v153 = vld [vmem:[#allocation2 + $0xfc] sm:$0xff]
    %v154 = vld [vmem:[#allocation2 + $0x104] sm:$0xff]
    %v155 = vld [vmem:[#allocation2 + $0x10c] sm:$0xff]
    %v156 = vld [vmem:[#allocation2 + $0x114] sm:$0xf]
    %v157 = vld [vmem:[#allocation2 + $0x118] sm:$0xff]
    %v158 = vld [vmem:[#allocation2 + $0x120] sm:$0xff]
    %v159 = vld [vmem:[#allocation2 + $0x128] sm:$0xff]
    %v160 = vld [vmem:[#allocation2 + $0x130] sm:$0xf]
    %v161 = vld [vmem:[#allocation2 + $0x134] sm:$0xff]
    %v162 = vld [vmem:[#allocation2 + $0x13c] sm:$0xff]
    %v163 = vld [vmem:[#allocation2 + $0x144] sm:$0xff]
    %v164 = vld [vmem:[#allocation2 + $0x14c] sm:$0xf]
    %v165 = vld [vmem:[#allocation2 + $0x150] sm:$0xff]
    %v166 = vld [vmem:[#allocation2 + $0x158] sm:$0xff]
    %v167 = vld [vmem:[#allocation2 + $0x160] sm:$0xff]
    %v168 = vld [vmem:[#allocation2 + $0x168] sm:$0xf]
    %v169 = vld [vmem:[#allocation2 + $0x16c] sm:$0xff]
    %v170 = vld [vmem:[#allocation2 + $0x174] sm:$0xff]
    %v171 = vld [vmem:[#allocation2 + $0x17c] sm:$0xff]
    %v172 = vld [vmem:[#allocation2 + $0x184] sm:$0xf]
    %v173 = vld [vmem:[#allocation2 + $0x188] sm:$0xff]
    %v174 = vld [vmem:[#allocation2 + $0x190] sm:$0xff]
    %v175 = vld [vmem:[#allocation2 + $0x198] sm:$0xff]
    %v176 = vld [vmem:[#allocation2 + $0x1a0] sm:$0xf]
    %v177 = vld [vmem:[#allocation2 + $0x1a4] sm:$0xff]
    %v178 = vld [vmem:[#allocation2 + $0x1ac] sm:$0xff]
    %v179 = vld [vmem:[#allocation2 + $0x1b4] sm:$0xff]
    %v180 = vld [vmem:[#allocation2 + $0x1bc] sm:$0xf]
    %v181 = vld [vmem:[#allocation5] sm:$0xff]
    %v182 = vld [vmem:[#allocation5 + $0x8] sm:$0xff]
    %v183 = vld [vmem:[#allocation5 + $0x10] sm:$0xff]
    %v184 = vld [vmem:[#allocation5 + $0x18] sm:$0xff]
    %v185 = vld [vmem:[#allocation5 + $0x20] sm:$0xff]
    %v186 = vld [vmem:[#allocation5 + $0x28] sm:$0xff]
    %v187 = vld [vmem:[#allocation5 + $0x30] sm:$0xff]
    %v188 = vld [vmem:[#allocation5 + $0x38] sm:$0xff]
    %v189 = vld [vmem:[#allocation5 + $0x40] sm:$0xff]
    %v190 = vld [vmem:[#allocation5 + $0x48] sm:$0xff]
    %v191 = vld [vmem:[#allocation5 + $0x50] sm:$0xff]
    %v192 = vld [vmem:[#allocation5 + $0x58] sm:$0xff]
    %v193 = vld [vmem:[#allocation5 + $0x60] sm:$0xff]
    %v194 = vld [vmem:[#allocation5 + $0x68] sm:$0xff]
    %v195 = vld [vmem:[#allocation5 + $0x70] sm:$0xff]
    %v196 = vld [vmem:[#allocation5 + $0x78] sm:$0xff]
    %v197 = vld [vmem:[#allocation5 + $0x80] sm:$0xff]
    %v198 = vld [vmem:[#allocation5 + $0x88] sm:$0xff]
    %v199 = vld [vmem:[#allocation5 + $0x90] sm:$0xff]
    %v200 = vld [vmem:[#allocation5 + $0x98] sm:$0xff]
    %v201 = vld [vmem:[#allocation5 + $0xa0] sm:$0xff]
    %v202 = vld [vmem:[#allocation5 + $0xa8] sm:$0xff]
    %v203 = vld [vmem:[#allocation5 + $0xb0] sm:$0xff]
    %v204 = vld [vmem:[#allocation5 + $0xb8] sm:$0xff]
    %v205 = vld [vmem:[#allocation5 + $0xc0] sm:$0xff]
    %v206 = vld [vmem:[#allocation5 + $0xc8] sm:$0xff]
    %v207 = vld [vmem:[#allocation5 + $0xd0] sm:$0xff]
    %v208 = vld [vmem:[#allocation5 + $0xd8] sm:$0xff]
    %v209 = vld [vmem:[#allocation5 + $0xe0] sm:$0xff]
    %v210 = vld [vmem:[#allocation5 + $0xe8] sm:$0xff]
    %v211 = vld [vmem:[#allocation5 + $0xf0] sm:$0xff]
    %v212 = vld [vmem:[#allocation5 + $0xf8] sm:$0xff]
    %v213 = vld [vmem:[#allocation5 + $0x100] sm:$0xff]
    %v214 = vld [vmem:[#allocation5 + $0x108] sm:$0xff]
    %v215 = vld [vmem:[#allocation5 + $0x110] sm:$0xff]
    %v216 = vld [vmem:[#allocation5 + $0x118] sm:$0xff]
    %v217 = vld [vmem:[#allocation5 + $0x120] sm:$0xff]
    %v218 = vld [vmem:[#allocation5 + $0x128] sm:$0xff]
    %v219 = vld [vmem:[#allocation5 + $0x130] sm:$0xff]
    %v220 = vld [vmem:[#allocation5 + $0x138] sm:$0xff]
    %v221 = vld [vmem:[#allocation5 + $0x140] sm:$0xff]
    %v222 = vld [vmem:[#allocation5 + $0x148] sm:$0xff]
    %v223 = vld [vmem:[#allocation5 + $0x150] sm:$0xff]
    %v224 = vld [vmem:[#allocation5 + $0x158] sm:$0xff]
    %v225 = vld [vmem:[#allocation5 + $0x160] sm:$0xff]
    %v226 = vld [vmem:[#allocation5 + $0x168] sm:$0xff]
    %v227 = vld [vmem:[#allocation5 + $0x170] sm:$0xff]
    %v228 = vld [vmem:[#allocation5 + $0x178] sm:$0xff]
    %v229 = vld [vmem:[#allocation5 + $0x180] sm:$0xff]
    %v230 = vld [vmem:[#allocation5 + $0x188] sm:$0xff]
    %v231 = vld [vmem:[#allocation5 + $0x190] sm:$0xff]
    %v232 = vld [vmem:[#allocation5 + $0x198] sm:$0xff]
    %v233 = vld [vmem:[#allocation5 + $0x1a0] sm:$0xff]
    %v234 = vld [vmem:[#allocation5 + $0x1a8] sm:$0xff]
    %v235 = vld [vmem:[#allocation5 + $0x1b0] sm:$0xff]
    %v236 = vld [vmem:[#allocation5 + $0x1b8] sm:$0xff]
    %v237 = vld [vmem:[#allocation5 + $0x1c0] sm:$0xff]
    %v238 = vld [vmem:[#allocation5 + $0x1c8] sm:$0xff]
    %v239 = vld [vmem:[#allocation5 + $0x1d0] sm:$0xff]
    %v240 = vld [vmem:[#allocation5 + $0x1d8] sm:$0xff]
    %v241 = vld [vmem:[#allocation5 + $0x1e0] sm:$0xff]
    %v242 = vld [vmem:[#allocation5 + $0x1e8] sm:$0xff]
    %v243 = vld [vmem:[#allocation5 + $0x1f0] sm:$0xff]
    %v244 = vld [vmem:[#allocation5 + $0x1f8] sm:$0xff]
    %v245 = vld [vmem:[#allocation5 + $0x200] sm:$0xff]
    %v246 = vld [vmem:[#allocation5 + $0x208] sm:$0xff]
    %v247 = vld [vmem:[#allocation5 + $0x210] sm:$0xff]
    %v248 = vld [vmem:[#allocation5 + $0x218] sm:$0xff]
    %v249 = vld [vmem:[#allocation5 + $0x220] sm:$0xff]
    %v250 = vld [vmem:[#allocation5 + $0x228] sm:$0xff]
    %v251 = vld [vmem:[#allocation5 + $0x230] sm:$0xff]
    %v252 = vld [vmem:[#allocation5 + $0x238] sm:$0xff]
    %v253 = vld [vmem:[#allocation5 + $0x240] sm:$0xff]
    %v254 = vld [vmem:[#allocation5 + $0x248] sm:$0xff]
    %v255 = vld [vmem:[#allocation5 + $0x250] sm:$0xff]
    %v256 = vld [vmem:[#allocation5 + $0x258] sm:$0xff]
    %v257 = vld [vmem:[#allocation5 + $0x260] sm:$0xff]
    %v258 = vld [vmem:[#allocation5 + $0x268] sm:$0xff]
    %v259 = vld [vmem:[#allocation5 + $0x270] sm:$0xff]
    %v260 = vld [vmem:[#allocation5 + $0x278] sm:$0xff]
    %v261 = vld [vmem:[#allocation5 + $0x280] sm:$0xff]
    %v262 = vld [vmem:[#allocation5 + $0x288] sm:$0xff]
    %v263 = vld [vmem:[#allocation5 + $0x290] sm:$0xff]
    %v264 = vld [vmem:[#allocation5 + $0x298] sm:$0xff]
    %v265 = vld [vmem:[#allocation5 + $0x2a0] sm:$0xff]
    %v266 = vld [vmem:[#allocation5 + $0x2a8] sm:$0xff]
    %v267 = vld [vmem:[#allocation5 + $0x2b0] sm:$0xff]
    %v268 = vld [vmem:[#allocation5 + $0x2b8] sm:$0xff]
    %v269 = vld [vmem:[#allocation5 + $0x2c0] sm:$0xff]
    %v270 = vld [vmem:[#allocation5 + $0x2c8] sm:$0xff]
    %v271 = vld [vmem:[#allocation5 + $0x2d0] sm:$0xff]
    %v272 = vld [vmem:[#allocation5 + $0x2d8] sm:$0xff]
    %v273 = vld [vmem:[#allocation5 + $0x2e0] sm:$0xff]
    %v274 = vld [vmem:[#allocation5 + $0x2e8] sm:$0xff]
    %v275 = vld [vmem:[#allocation5 + $0x2f0] sm:$0xff]
    %v276 = vld [vmem:[#allocation5 + $0x2f8] sm:$0xff]
    %v277 = vld [vmem:[#allocation5 + $0x300] sm:$0xff]
    %v278 = vld [vmem:[#allocation5 + $0x308] sm:$0xff]
    %v279 = vld [vmem:[#allocation5 + $0x310] sm:$0xff]
    %v280 = vld [vmem:[#allocation5 + $0x318] sm:$0xff]
    %v281 = vld [vmem:[#allocation5 + $0x320] sm:$0xff]
    %v282 = vld [vmem:[#allocation5 + $0x328] sm:$0xff]
    %v283 = vld [vmem:[#allocation5 + $0x330] sm:$0xff]
    %v284 = vld [vmem:[#allocation5 + $0x338] sm:$0xff]
    %v285 = vld [vmem:[#allocation5 + $0x340] sm:$0xff]
    %v286 = vld [vmem:[#allocation5 + $0x348] sm:$0xff]
    %v287 = vld [vmem:[#allocation5 + $0x350] sm:$0xff]
    %v288 = vld [vmem:[#allocation5 + $0x358] sm:$0xff]
    %v289 = vld [vmem:[#allocation5 + $0x360] sm:$0xff]
    %v290 = vld [vmem:[#allocation5 + $0x368] sm:$0xff]
    %v291 = vld [vmem:[#allocation5 + $0x370] sm:$0xff]
    %v292 = vld [vmem:[#allocation5 + $0x378] sm:$0xff]
    %v293 = vld [vmem:[#allocation5 + $0x380] sm:$0xff]
    %v294 = vld [vmem:[#allocation5 + $0x388] sm:$0xff]
    %v295 = vld [vmem:[#allocation5 + $0x390] sm:$0xff]
    %v296 = vld [vmem:[#allocation5 + $0x398] sm:$0xff]
    %v297 = vld [vmem:[#allocation5 + $0x3a0] sm:$0xff]
    %v298 = vld [vmem:[#allocation5 + $0x3a8] sm:$0xff]
    %v299 = vld [vmem:[#allocation5 + $0x3b0] sm:$0xff]
    %v300 = vld [vmem:[#allocation5 + $0x3b8] sm:$0xff]
    %v301 = vld [vmem:[#allocation5 + $0x3c0] sm:$0xff]
    %v302 = vld [vmem:[#allocation5 + $0x3c8] sm:$0xff]
    %v303 = vld [vmem:[#allocation5 + $0x3d0] sm:$0xff]
    %v304 = vld [vmem:[#allocation5 + $0x3d8] sm:$0xff]
    %v305 = vld [vmem:[#allocation5 + $0x3e0] sm:$0xff]
    %v306 = vld [vmem:[#allocation5 + $0x3e8] sm:$0xff]
    %v307 = vld [vmem:[#allocation5 + $0x3f0] sm:$0xff]
    %v308 = vld [vmem:[#allocation5 + $0x3f8] sm:$0xff]
    %v309 = vld [vmem:[#allocation5 + $0x400] sm:$0xff]
    %v310 = vld [vmem:[#allocation5 + $0x408] sm:$0xff]
    %v311 = vld [vmem:[#allocation5 + $0x410] sm:$0xff]
    %v312 = vld [vmem:[#allocation5 + $0x418] sm:$0xff]
    %v313 = vld [vmem:[#allocation5 + $0x420] sm:$0xff]
    %v314 = vld [vmem:[#allocation5 + $0x428] sm:$0xff]
    %v315 = vld [vmem:[#allocation5 + $0x430] sm:$0xff]
    %v316 = vld [vmem:[#allocation5 + $0x438] sm:$0xff]
    %v317 = vld [vmem:[#allocation5 + $0x440] sm:$0xff]
    %v318 = vld [vmem:[#allocation5 + $0x448] sm:$0xff]
    %v319 = vld [vmem:[#allocation5 + $0x450] sm:$0xff]
    %v320 = vld [vmem:[#allocation5 + $0x458] sm:$0xff]
    %v321 = vld [vmem:[#allocation5 + $0x460] sm:$0xff]
    %v322 = vld [vmem:[#allocation5 + $0x468] sm:$0xff]
    %v323 = vld [vmem:[#allocation5 + $0x470] sm:$0xff]
    %v324 = vld [vmem:[#allocation5 + $0x478] sm:$0xff]
    %v325 = vld [vmem:[#allocation5 + $0x480] sm:$0xff]
    %v326 = vld [vmem:[#allocation5 + $0x488] sm:$0xff]
    %v327 = vld [vmem:[#allocation5 + $0x490] sm:$0xff]
    %v328 = vld [vmem:[#allocation5 + $0x498] sm:$0xff]
    %v329 = vld [vmem:[#allocation5 + $0x4a0] sm:$0xff]
    %v330 = vld [vmem:[#allocation5 + $0x4a8] sm:$0xff]
    %v331 = vld [vmem:[#allocation5 + $0x4b0] sm:$0xff]
    %v332 = vld [vmem:[#allocation5 + $0x4b8] sm:$0xff]
    %v333 = vld [vmem:[#allocation5 + $0x4c0] sm:$0xff]
    %v334 = vld [vmem:[#allocation5 + $0x4c8] sm:$0xff]
    %v335 = vld [vmem:[#allocation5 + $0x4d0] sm:$0xff]
    %v336 = vld [vmem:[#allocation5 + $0x4d8] sm:$0xff]
    %v337 = vld [vmem:[#allocation5 + $0x4e0] sm:$0xff]
    %v338 = vld [vmem:[#allocation5 + $0x4e8] sm:$0xff]
    %v339 = vld [vmem:[#allocation5 + $0x4f0] sm:$0xff]
    %v340 = vld [vmem:[#allocation5 + $0x4f8] sm:$0xff]
    %v341 = vld [vmem:[#allocation5 + $0x500] sm:$0xff]
    %v342 = vld [vmem:[#allocation5 + $0x508] sm:$0xff]
    %v343 = vld [vmem:[#allocation5 + $0x510] sm:$0xff]
    %v344 = vld [vmem:[#allocation5 + $0x518] sm:$0xff]
    %v345 = vld [vmem:[#allocation5 + $0x520] sm:$0xff]
    %v346 = vld [vmem:[#allocation5 + $0x528] sm:$0xff]
    %v347 = vld [vmem:[#allocation5 + $0x530] sm:$0xff]
    %v348 = vld [vmem:[#allocation5 + $0x538] sm:$0xff]
    %v349 = vld [vmem:[#allocation5 + $0x540] sm:$0xff]
    %v350 = vld [vmem:[#allocation5 + $0x548] sm:$0xff]
    %v351 = vld [vmem:[#allocation5 + $0x550] sm:$0xff]
    %v352 = vld [vmem:[#allocation5 + $0x558] sm:$0xff]
    %v353 = vld [vmem:[#allocation5 + $0x560] sm:$0xff]
    %v354 = vld [vmem:[#allocation5 + $0x568] sm:$0xff]
    %v355 = vld [vmem:[#allocation5 + $0x570] sm:$0xff]
    %v356 = vld [vmem:[#allocation5 + $0x578] sm:$0xff]
    %v357 = vld [vmem:[#allocation5 + $0x580] sm:$0xff]
    %v358 = vld [vmem:[#allocation5 + $0x588] sm:$0xff]
    %v359 = vld [vmem:[#allocation5 + $0x590] sm:$0xff]
    %v360 = vld [vmem:[#allocation5 + $0x598] sm:$0xff]
    %v361 = vld [vmem:[#allocation5 + $0x5a0] sm:$0xff]
    %v362 = vld [vmem:[#allocation5 + $0x5a8] sm:$0xff]
    %v363 = vld [vmem:[#allocation5 + $0x5b0] sm:$0xff]
    %v364 = vld [vmem:[#allocation5 + $0x5b8] sm:$0xff]
    %v365 = vld [vmem:[#allocation5 + $0x5c0] sm:$0xff]
    %v366 = vld [vmem:[#allocation5 + $0x5c8] sm:$0xff]
    %v367 = vld [vmem:[#allocation5 + $0x5d0] sm:$0xff]
    %v368 = vld [vmem:[#allocation5 + $0x5d8] sm:$0xff]
    %v369 = vld [vmem:[#allocation5 + $0x5e0] sm:$0xff]
    %v370 = vld [vmem:[#allocation5 + $0x5e8] sm:$0xff]
    %v371 = vld [vmem:[#allocation5 + $0x5f0] sm:$0xff]
    %v372 = vld [vmem:[#allocation5 + $0x5f8] sm:$0xff]
    %v373 = vld [vmem:[#allocation5 + $0x600] sm:$0xff]
    %v374 = vld [vmem:[#allocation5 + $0x608] sm:$0xff]
    %v375 = vld [vmem:[#allocation5 + $0x610] sm:$0xff]
    %v376 = vld [vmem:[#allocation5 + $0x618] sm:$0xff]
    %v377 = vld [vmem:[#allocation5 + $0x620] sm:$0xff]
    %v378 = vld [vmem:[#allocation5 + $0x628] sm:$0xff]
    %v379 = vld [vmem:[#allocation5 + $0x630] sm:$0xff]
    %v380 = vld [vmem:[#allocation5 + $0x638] sm:$0xff]
    %v381 = vld [vmem:[#allocation5 + $0x640] sm:$0xff]
    %v382 = vld [vmem:[#allocation5 + $0x648] sm:$0xff]
    %v383 = vld [vmem:[#allocation5 + $0x650] sm:$0xff]
    %v384 = vld [vmem:[#allocation5 + $0x658] sm:$0xff]
    %v385 = vld [vmem:[#allocation5 + $0x660] sm:$0xff]
    %v386 = vld [vmem:[#allocation5 + $0x668] sm:$0xff]
    %v387 = vld [vmem:[#allocation5 + $0x670] sm:$0xff]
    %v388 = vld [vmem:[#allocation5 + $0x678] sm:$0xff]
    %v389 = vld [vmem:[#allocation5 + $0x680] sm:$0xff]
    %v390 = vld [vmem:[#allocation5 + $0x688] sm:$0xff]
    %v391 = vld [vmem:[#allocation5 + $0x690] sm:$0xff]
    %v392 = vld [vmem:[#allocation5 + $0x698] sm:$0xff]
    %v393 = vld [vmem:[#allocation5 + $0x6a0] sm:$0xff]
    %v394 = vld [vmem:[#allocation5 + $0x6a8] sm:$0xff]
    %v395 = vld [vmem:[#allocation5 + $0x6b0] sm:$0xff]
    %v396 = vld [vmem:[#allocation5 + $0x6b8] sm:$0xff]
    %v397 = vld [vmem:[#allocation5 + $0x6c0] sm:$0xff]
    %v398 = vld [vmem:[#allocation5 + $0x6c8] sm:$0xff]
    %v399 = vld [vmem:[#allocation5 + $0x6d0] sm:$0xff]
    %v400 = vld [vmem:[#allocation5 + $0x6d8] sm:$0xff]
    %v401 = vld [vmem:[#allocation5 + $0x6e0] sm:$0xff]
    %v402 = vld [vmem:[#allocation5 + $0x6e8] sm:$0xff]
    %v403 = vld [vmem:[#allocation5 + $0x6f0] sm:$0xff]
    %v404 = vld [vmem:[#allocation5 + $0x6f8] sm:$0xff]
    %v405 = vld [vmem:[#allocation7] sm:$0xf]
    %v407 = vperm.slane %v405, 0
    %v408 = vperm.slane %v405, 1
    %v409 = vperm.slane %v405, 2
    %v410 = vperm.slane %v405, 3
    %v479 = vunpack.c.l.b16 %v117
    %v480 = vunpack.c.h.b16 %v117
    %v481 = vunpack.c.l.b16 %v118
    %v482 = vunpack.c.h.b16 %v118
    %v483 = vunpack.c.l.b16 %v119
    %v484 = vunpack.c.h.b16 %v119
    %v485 = vunpack.c.l.b16 %v120
    %v486 = vunpack.c.l.b16 %v121
    %v487 = vunpack.c.h.b16 %v121
    %v488 = vunpack.c.l.b16 %v122
    %v489 = vunpack.c.h.b16 %v122
    %v490 = vunpack.c.l.b16 %v123
    %v491 = vunpack.c.h.b16 %v123
    %v492 = vunpack.c.l.b16 %v124
    %v493 = vunpack.c.l.b16 %v125
    %v494 = vunpack.c.h.b16 %v125
    %v495 = vunpack.c.l.b16 %v126
    %v496 = vunpack.c.h.b16 %v126
    %v497 = vunpack.c.l.b16 %v127
    %v498 = vunpack.c.h.b16 %v127
    %v499 = vunpack.c.l.b16 %v128
    %v500 = vunpack.c.l.b16 %v129
    %v501 = vunpack.c.h.b16 %v129
    %v502 = vunpack.c.l.b16 %v130
    %v503 = vunpack.c.h.b16 %v130
    %v504 = vunpack.c.l.b16 %v131
    %v505 = vunpack.c.h.b16 %v131
    %v506 = vunpack.c.l.b16 %v132
    %v507 = vunpack.c.l.b16 %v133
    %v508 = vunpack.c.h.b16 %v133
    %v509 = vunpack.c.l.b16 %v134
    %v510 = vunpack.c.h.b16 %v134
    %v511 = vunpack.c.l.b16 %v135
    %v512 = vunpack.c.h.b16 %v135
    %v513 = vunpack.c.l.b16 %v136
    %v514 = vunpack.c.l.b16 %v137
    %v515 = vunpack.c.h.b16 %v137
    %v516 = vunpack.c.l.b16 %v138
    %v517 = vunpack.c.h.b16 %v138
    %v518 = vunpack.c.l.b16 %v139
    %v519 = vunpack.c.h.b16 %v139
    %v520 = vunpack.c.l.b16 %v140
    %v521 = vunpack.c.l.b16 %v141
    %v522 = vunpack.c.h.b16 %v141
    %v523 = vunpack.c.l.b16 %v142
    %v524 = vunpack.c.h.b16 %v142
    %v525 = vunpack.c.l.b16 %v143
    %v526 = vunpack.c.h.b16 %v143
    %v527 = vunpack.c.l.b16 %v144
    %v528 = vunpack.c.l.b16 %v145
    %v529 = vunpack.c.h.b16 %v145
    %v530 = vunpack.c.l.b16 %v146
    %v531 = vunpack.c.h.b16 %v146
    %v532 = vunpack.c.l.b16 %v147
    %v533 = vunpack.c.h.b16 %v147
    %v534 = vunpack.c.l.b16 %v148
    %v535 = vunpack.c.l.b16 %v149
    %v536 = vunpack.c.h.b16 %v149
    %v537 = vunpack.c.l.b16 %v150
    %v538 = vunpack.c.h.b16 %v150
    %v539 = vunpack.c.l.b16 %v151
    %v540 = vunpack.c.h.b16 %v151
    %v541 = vunpack.c.l.b16 %v152
    %v542 = vunpack.c.l.b16 %v153
    %v543 = vunpack.c.h.b16 %v153
    %v544 = vunpack.c.l.b16 %v154
    %v545 = vunpack.c.h.b16 %v154
    %v546 = vunpack.c.l.b16 %v155
    %v547 = vunpack.c.h.b16 %v155
    %v548 = vunpack.c.l.b16 %v156
    %v549 = vunpack.c.l.b16 %v157
    %v550 = vunpack.c.h.b16 %v157
    %v551 = vunpack.c.l.b16 %v158
    %v552 = vunpack.c.h.b16 %v158
    %v553 = vunpack.c.l.b16 %v159
    %v554 = vunpack.c.h.b16 %v159
    %v555 = vunpack.c.l.b16 %v160
    %v556 = vunpack.c.l.b16 %v161
    %v557 = vunpack.c.h.b16 %v161
    %v558 = vunpack.c.l.b16 %v162
    %v559 = vunpack.c.h.b16 %v162
    %v560 = vunpack.c.l.b16 %v163
    %v561 = vunpack.c.h.b16 %v163
    %v562 = vunpack.c.l.b16 %v164
    %v563 = vunpack.c.l.b16 %v165
    %v564 = vunpack.c.h.b16 %v165
    %v565 = vunpack.c.l.b16 %v166
    %v566 = vunpack.c.h.b16 %v166
    %v567 = vunpack.c.l.b16 %v167
    %v568 = vunpack.c.h.b16 %v167
    %v569 = vunpack.c.l.b16 %v168
    %v570 = vunpack.c.l.b16 %v169
    %v571 = vunpack.c.h.b16 %v169
    %v572 = vunpack.c.l.b16 %v170
    %v573 = vunpack.c.h.b16 %v170
    %v574 = vunpack.c.l.b16 %v171
    %v575 = vunpack.c.h.b16 %v171
    %v576 = vunpack.c.l.b16 %v172
    %v577 = vunpack.c.l.b16 %v173
    %v578 = vunpack.c.h.b16 %v173
    %v579 = vunpack.c.l.b16 %v174
    %v580 = vunpack.c.h.b16 %v174
    %v581 = vunpack.c.l.b16 %v175
    %v582 = vunpack.c.h.b16 %v175
    %v583 = vunpack.c.l.b16 %v176
    %v584 = vunpack.c.l.b16 %v177
    %v585 = vunpack.c.h.b16 %v177
    %v586 = vunpack.c.l.b16 %v178
    %v587 = vunpack.c.h.b16 %v178
    %v588 = vunpack.c.l.b16 %v179
    %v589 = vunpack.c.h.b16 %v179
    %v590 = vunpack.c.l.b16 %v180
    %v591 = vpack.c.b16 %v486, %v479
    %v592 = vpack.c.b16 %v487, %v480
    %v593 = vpack.c.b16 %v488, %v481
    %v594 = vpack.c.b16 %v489, %v482
    %v595 = vpack.c.b16 %v490, %v483
    %v596 = vpack.c.b16 %v491, %v484
    %v597 = vpack.c.b16 %v492, %v485
    %v598 = vpack.c.b16 %v500, %v493
    %v599 = vpack.c.b16 %v501, %v494
    %v600 = vpack.c.b16 %v502, %v495
    %v601 = vpack.c.b16 %v503, %v496
    %v602 = vpack.c.b16 %v504, %v497
    %v603 = vpack.c.b16 %v505, %v498
    %v604 = vpack.c.b16 %v506, %v499
    %v605 = vpack.c.b16 %v514, %v507
    %v606 = vpack.c.b16 %v515, %v508
    %v607 = vpack.c.b16 %v516, %v509
    %v608 = vpack.c.b16 %v517, %v510
    %v609 = vpack.c.b16 %v518, %v511
    %v610 = vpack.c.b16 %v519, %v512
    %v611 = vpack.c.b16 %v520, %v513
    %v612 = vpack.c.b16 %v528, %v521
    %v613 = vpack.c.b16 %v529, %v522
    %v614 = vpack.c.b16 %v530, %v523
    %v615 = vpack.c.b16 %v531, %v524
    %v616 = vpack.c.b16 %v532, %v525
    %v617 = vpack.c.b16 %v533, %v526
    %v618 = vpack.c.b16 %v534, %v527
    %v619 = vpack.c.b16 %v542, %v535
    %v620 = vpack.c.b16 %v543, %v536
    %v621 = vpack.c.b16 %v544, %v537
    %v622 = vpack.c.b16 %v545, %v538
    %v623 = vpack.c.b16 %v546, %v539
    %v624 = vpack.c.b16 %v547, %v540
    %v625 = vpack.c.b16 %v548, %v541
    %v626 = vpack.c.b16 %v556, %v549
    %v627 = vpack.c.b16 %v557, %v550
    %v628 = vpack.c.b16 %v558, %v551
    %v629 = vpack.c.b16 %v559, %v552
    %v630 = vpack.c.b16 %v560, %v553
    %v631 = vpack.c.b16 %v561, %v554
    %v632 = vpack.c.b16 %v562, %v555
    %v633 = vpack.c.b16 %v570, %v563
    %v634 = vpack.c.b16 %v571, %v564
    %v635 = vpack.c.b16 %v572, %v565
    %v636 = vpack.c.b16 %v573, %v566
    %v637 = vpack.c.b16 %v574, %v567
    %v638 = vpack.c.b16 %v575, %v568
    %v639 = vpack.c.b16 %v576, %v569
    %v640 = vpack.c.b16 %v584, %v577
    %v641 = vpack.c.b16 %v585, %v578
    %v642 = vpack.c.b16 %v586, %v579
    %v643 = vpack.c.b16 %v587, %v580
    %v644 = vpack.c.b16 %v588, %v581
    %v645 = vpack.c.b16 %v589, %v582
    %v646 = vpack.c.b16 %v590, %v583
    %v927 = vunpack.c.l.b16 %v181
    %v928 = vunpack.c.h.b16 %v181
    %v929 = vunpack.c.l.b16 %v182
    %v930 = vunpack.c.h.b16 %v182
    %v931 = vunpack.c.l.b16 %v183
    %v932 = vunpack.c.h.b16 %v183
    %v933 = vunpack.c.l.b16 %v184
    %v934 = vunpack.c.h.b16 %v184
    %v935 = vunpack.c.l.b16 %v185
    %v936 = vunpack.c.h.b16 %v185
    %v937 = vunpack.c.l.b16 %v186
    %v938 = vunpack.c.h.b16 %v186
    %v939 = vunpack.c.l.b16 %v187
    %v940 = vunpack.c.h.b16 %v187
    %v941 = vunpack.c.l.b16 %v188
    %v942 = vunpack.c.h.b16 %v188
    %v943 = vunpack.c.l.b16 %v189
    %v944 = vunpack.c.h.b16 %v189
    %v945 = vunpack.c.l.b16 %v190
    %v946 = vunpack.c.h.b16 %v190
    %v947 = vunpack.c.l.b16 %v191
    %v948 = vunpack.c.h.b16 %v191
    %v949 = vunpack.c.l.b16 %v192
    %v950 = vunpack.c.h.b16 %v192
    %v951 = vunpack.c.l.b16 %v193
    %v952 = vunpack.c.h.b16 %v193
    %v953 = vunpack.c.l.b16 %v194
    %v954 = vunpack.c.h.b16 %v194
    %v955 = vunpack.c.l.b16 %v195
    %v956 = vunpack.c.h.b16 %v195
    %v957 = vunpack.c.l.b16 %v196
    %v958 = vunpack.c.h.b16 %v196
    %v959 = vunpack.c.l.b16 %v197
    %v960 = vunpack.c.h.b16 %v197
    %v961 = vunpack.c.l.b16 %v198
    %v962 = vunpack.c.h.b16 %v198
    %v963 = vunpack.c.l.b16 %v199
    %v964 = vunpack.c.h.b16 %v199
    %v965 = vunpack.c.l.b16 %v200
    %v966 = vunpack.c.h.b16 %v200
    %v967 = vunpack.c.l.b16 %v201
    %v968 = vunpack.c.h.b16 %v201
    %v969 = vunpack.c.l.b16 %v202
    %v970 = vunpack.c.h.b16 %v202
    %v971 = vunpack.c.l.b16 %v203
    %v972 = vunpack.c.h.b16 %v203
    %v973 = vunpack.c.l.b16 %v204
    %v974 = vunpack.c.h.b16 %v204
    %v975 = vunpack.c.l.b16 %v205
    %v976 = vunpack.c.h.b16 %v205
    %v977 = vunpack.c.l.b16 %v206
    %v978 = vunpack.c.h.b16 %v206
    %v979 = vunpack.c.l.b16 %v207
    %v980 = vunpack.c.h.b16 %v207
    %v981 = vunpack.c.l.b16 %v208
    %v982 = vunpack.c.h.b16 %v208
    %v983 = vunpack.c.l.b16 %v209
    %v984 = vunpack.c.h.b16 %v209
    %v985 = vunpack.c.l.b16 %v210
    %v986 = vunpack.c.h.b16 %v210
    %v987 = vunpack.c.l.b16 %v211
    %v988 = vunpack.c.h.b16 %v211
    %v989 = vunpack.c.l.b16 %v212
    %v990 = vunpack.c.h.b16 %v212
    %v991 = vunpack.c.l.b16 %v213
    %v992 = vunpack.c.h.b16 %v213
    %v993 = vunpack.c.l.b16 %v214
    %v994 = vunpack.c.h.b16 %v214
    %v995 = vunpack.c.l.b16 %v215
    %v996 = vunpack.c.h.b16 %v215
    %v997 = vunpack.c.l.b16 %v216
    %v998 = vunpack.c.h.b16 %v216
    %v999 = vunpack.c.l.b16 %v217
    %v1000 = vunpack.c.h.b16 %v217
    %v1001 = vunpack.c.l.b16 %v218
    %v1002 = vunpack.c.h.b16 %v218
    %v1003 = vunpack.c.l.b16 %v219
    %v1004 = vunpack.c.h.b16 %v219
    %v1005 = vunpack.c.l.b16 %v220
    %v1006 = vunpack.c.h.b16 %v220
    %v1007 = vunpack.c.l.b16 %v221
    %v1008 = vunpack.c.h.b16 %v221
    %v1009 = vunpack.c.l.b16 %v222
    %v1010 = vunpack.c.h.b16 %v222
    %v1011 = vunpack.c.l.b16 %v223
    %v1012 = vunpack.c.h.b16 %v223
    %v1013 = vunpack.c.l.b16 %v224
    %v1014 = vunpack.c.h.b16 %v224
    %v1015 = vunpack.c.l.b16 %v225
    %v1016 = vunpack.c.h.b16 %v225
    %v1017 = vunpack.c.l.b16 %v226
    %v1018 = vunpack.c.h.b16 %v226
    %v1019 = vunpack.c.l.b16 %v227
    %v1020 = vunpack.c.h.b16 %v227
    %v1021 = vunpack.c.l.b16 %v228
    %v1022 = vunpack.c.h.b16 %v228
    %v1023 = vunpack.c.l.b16 %v229
    %v1024 = vunpack.c.h.b16 %v229
    %v1025 = vunpack.c.l.b16 %v230
    %v1026 = vunpack.c.h.b16 %v230
    %v1027 = vunpack.c.l.b16 %v231
    %v1028 = vunpack.c.h.b16 %v231
    %v1029 = vunpack.c.l.b16 %v232
    %v1030 = vunpack.c.h.b16 %v232
    %v1031 = vunpack.c.l.b16 %v233
    %v1032 = vunpack.c.h.b16 %v233
    %v1033 = vunpack.c.l.b16 %v234
    %v1034 = vunpack.c.h.b16 %v234
    %v1035 = vunpack.c.l.b16 %v235
    %v1036 = vunpack.c.h.b16 %v235
    %v1037 = vunpack.c.l.b16 %v236
    %v1038 = vunpack.c.h.b16 %v236
    %v1039 = vunpack.c.l.b16 %v237
    %v1040 = vunpack.c.h.b16 %v237
    %v1041 = vunpack.c.l.b16 %v238
    %v1042 = vunpack.c.h.b16 %v238
    %v1043 = vunpack.c.l.b16 %v239
    %v1044 = vunpack.c.h.b16 %v239
    %v1045 = vunpack.c.l.b16 %v240
    %v1046 = vunpack.c.h.b16 %v240
    %v1047 = vunpack.c.l.b16 %v241
    %v1048 = vunpack.c.h.b16 %v241
    %v1049 = vunpack.c.l.b16 %v242
    %v1050 = vunpack.c.h.b16 %v242
    %v1051 = vunpack.c.l.b16 %v243
    %v1052 = vunpack.c.h.b16 %v243
    %v1053 = vunpack.c.l.b16 %v244
    %v1054 = vunpack.c.h.b16 %v244
    %v1055 = vunpack.c.l.b16 %v245
    %v1056 = vunpack.c.h.b16 %v245
    %v1057 = vunpack.c.l.b16 %v246
    %v1058 = vunpack.c.h.b16 %v246
    %v1059 = vunpack.c.l.b16 %v247
    %v1060 = vunpack.c.h.b16 %v247
    %v1061 = vunpack.c.l.b16 %v248
    %v1062 = vunpack.c.h.b16 %v248
    %v1063 = vunpack.c.l.b16 %v249
    %v1064 = vunpack.c.h.b16 %v249
    %v1065 = vunpack.c.l.b16 %v250
    %v1066 = vunpack.c.h.b16 %v250
    %v1067 = vunpack.c.l.b16 %v251
    %v1068 = vunpack.c.h.b16 %v251
    %v1069 = vunpack.c.l.b16 %v252
    %v1070 = vunpack.c.h.b16 %v252
    %v1071 = vunpack.c.l.b16 %v253
    %v1072 = vunpack.c.h.b16 %v253
    %v1073 = vunpack.c.l.b16 %v254
    %v1074 = vunpack.c.h.b16 %v254
    %v1075 = vunpack.c.l.b16 %v255
    %v1076 = vunpack.c.h.b16 %v255
    %v1077 = vunpack.c.l.b16 %v256
    %v1078 = vunpack.c.h.b16 %v256
    %v1079 = vunpack.c.l.b16 %v257
    %v1080 = vunpack.c.h.b16 %v257
    %v1081 = vunpack.c.l.b16 %v258
    %v1082 = vunpack.c.h.b16 %v258
    %v1083 = vunpack.c.l.b16 %v259
    %v1084 = vunpack.c.h.b16 %v259
    %v1085 = vunpack.c.l.b16 %v260
    %v1086 = vunpack.c.h.b16 %v260
    %v1087 = vunpack.c.l.b16 %v261
    %v1088 = vunpack.c.h.b16 %v261
    %v1089 = vunpack.c.l.b16 %v262
    %v1090 = vunpack.c.h.b16 %v262
    %v1091 = vunpack.c.l.b16 %v263
    %v1092 = vunpack.c.h.b16 %v263
    %v1093 = vunpack.c.l.b16 %v264
    %v1094 = vunpack.c.h.b16 %v264
    %v1095 = vunpack.c.l.b16 %v265
    %v1096 = vunpack.c.h.b16 %v265
    %v1097 = vunpack.c.l.b16 %v266
    %v1098 = vunpack.c.h.b16 %v266
    %v1099 = vunpack.c.l.b16 %v267
    %v1100 = vunpack.c.h.b16 %v267
    %v1101 = vunpack.c.l.b16 %v268
    %v1102 = vunpack.c.h.b16 %v268
    %v1103 = vunpack.c.l.b16 %v269
    %v1104 = vunpack.c.h.b16 %v269
    %v1105 = vunpack.c.l.b16 %v270
    %v1106 = vunpack.c.h.b16 %v270
    %v1107 = vunpack.c.l.b16 %v271
    %v1108 = vunpack.c.h.b16 %v271
    %v1109 = vunpack.c.l.b16 %v272
    %v1110 = vunpack.c.h.b16 %v272
    %v1111 = vunpack.c.l.b16 %v273
    %v1112 = vunpack.c.h.b16 %v273
    %v1113 = vunpack.c.l.b16 %v274
    %v1114 = vunpack.c.h.b16 %v274
    %v1115 = vunpack.c.l.b16 %v275
    %v1116 = vunpack.c.h.b16 %v275
    %v1117 = vunpack.c.l.b16 %v276
    %v1118 = vunpack.c.h.b16 %v276
    %v1119 = vunpack.c.l.b16 %v277
    %v1120 = vunpack.c.h.b16 %v277
    %v1121 = vunpack.c.l.b16 %v278
    %v1122 = vunpack.c.h.b16 %v278
    %v1123 = vunpack.c.l.b16 %v279
    %v1124 = vunpack.c.h.b16 %v279
    %v1125 = vunpack.c.l.b16 %v280
    %v1126 = vunpack.c.h.b16 %v280
    %v1127 = vunpack.c.l.b16 %v281
    %v1128 = vunpack.c.h.b16 %v281
    %v1129 = vunpack.c.l.b16 %v282
    %v1130 = vunpack.c.h.b16 %v282
    %v1131 = vunpack.c.l.b16 %v283
    %v1132 = vunpack.c.h.b16 %v283
    %v1133 = vunpack.c.l.b16 %v284
    %v1134 = vunpack.c.h.b16 %v284
    %v1135 = vunpack.c.l.b16 %v285
    %v1136 = vunpack.c.h.b16 %v285
    %v1137 = vunpack.c.l.b16 %v286
    %v1138 = vunpack.c.h.b16 %v286
    %v1139 = vunpack.c.l.b16 %v287
    %v1140 = vunpack.c.h.b16 %v287
    %v1141 = vunpack.c.l.b16 %v288
    %v1142 = vunpack.c.h.b16 %v288
    %v1143 = vunpack.c.l.b16 %v289
    %v1144 = vunpack.c.h.b16 %v289
    %v1145 = vunpack.c.l.b16 %v290
    %v1146 = vunpack.c.h.b16 %v290
    %v1147 = vunpack.c.l.b16 %v291
    %v1148 = vunpack.c.h.b16 %v291
    %v1149 = vunpack.c.l.b16 %v292
    %v1150 = vunpack.c.h.b16 %v292
    %v1151 = vunpack.c.l.b16 %v293
    %v1152 = vunpack.c.h.b16 %v293
    %v1153 = vunpack.c.l.b16 %v294
    %v1154 = vunpack.c.h.b16 %v294
    %v1155 = vunpack.c.l.b16 %v295
    %v1156 = vunpack.c.h.b16 %v295
    %v1157 = vunpack.c.l.b16 %v296
    %v1158 = vunpack.c.h.b16 %v296
    %v1159 = vunpack.c.l.b16 %v297
    %v1160 = vunpack.c.h.b16 %v297
    %v1161 = vunpack.c.l.b16 %v298
    %v1162 = vunpack.c.h.b16 %v298
    %v1163 = vunpack.c.l.b16 %v299
    %v1164 = vunpack.c.h.b16 %v299
    %v1165 = vunpack.c.l.b16 %v300
    %v1166 = vunpack.c.h.b16 %v300
    %v1167 = vunpack.c.l.b16 %v301
    %v1168 = vunpack.c.h.b16 %v301
    %v1169 = vunpack.c.l.b16 %v302
    %v1170 = vunpack.c.h.b16 %v302
    %v1171 = vunpack.c.l.b16 %v303
    %v1172 = vunpack.c.h.b16 %v303
    %v1173 = vunpack.c.l.b16 %v304
    %v1174 = vunpack.c.h.b16 %v304
    %v1175 = vunpack.c.l.b16 %v305
    %v1176 = vunpack.c.h.b16 %v305
    %v1177 = vunpack.c.l.b16 %v306
    %v1178 = vunpack.c.h.b16 %v306
    %v1179 = vunpack.c.l.b16 %v307
    %v1180 = vunpack.c.h.b16 %v307
    %v1181 = vunpack.c.l.b16 %v308
    %v1182 = vunpack.c.h.b16 %v308
    %v1183 = vunpack.c.l.b16 %v309
    %v1184 = vunpack.c.h.b16 %v309
    %v1185 = vunpack.c.l.b16 %v310
    %v1186 = vunpack.c.h.b16 %v310
    %v1187 = vunpack.c.l.b16 %v311
    %v1188 = vunpack.c.h.b16 %v311
    %v1189 = vunpack.c.l.b16 %v312
    %v1190 = vunpack.c.h.b16 %v312
    %v1191 = vunpack.c.l.b16 %v313
    %v1192 = vunpack.c.h.b16 %v313
    %v1193 = vunpack.c.l.b16 %v314
    %v1194 = vunpack.c.h.b16 %v314
    %v1195 = vunpack.c.l.b16 %v315
    %v1196 = vunpack.c.h.b16 %v315
    %v1197 = vunpack.c.l.b16 %v316
    %v1198 = vunpack.c.h.b16 %v316
    %v1199 = vunpack.c.l.b16 %v317
    %v1200 = vunpack.c.h.b16 %v317
    %v1201 = vunpack.c.l.b16 %v318
    %v1202 = vunpack.c.h.b16 %v318
    %v1203 = vunpack.c.l.b16 %v319
    %v1204 = vunpack.c.h.b16 %v319
    %v1205 = vunpack.c.l.b16 %v320
    %v1206 = vunpack.c.h.b16 %v320
    %v1207 = vunpack.c.l.b16 %v321
    %v1208 = vunpack.c.h.b16 %v321
    %v1209 = vunpack.c.l.b16 %v322
    %v1210 = vunpack.c.h.b16 %v322
    %v1211 = vunpack.c.l.b16 %v323
    %v1212 = vunpack.c.h.b16 %v323
    %v1213 = vunpack.c.l.b16 %v324
    %v1214 = vunpack.c.h.b16 %v324
    %v1215 = vunpack.c.l.b16 %v325
    %v1216 = vunpack.c.h.b16 %v325
    %v1217 = vunpack.c.l.b16 %v326
    %v1218 = vunpack.c.h.b16 %v326
    %v1219 = vunpack.c.l.b16 %v327
    %v1220 = vunpack.c.h.b16 %v327
    %v1221 = vunpack.c.l.b16 %v328
    %v1222 = vunpack.c.h.b16 %v328
    %v1223 = vunpack.c.l.b16 %v329
    %v1224 = vunpack.c.h.b16 %v329
    %v1225 = vunpack.c.l.b16 %v330
    %v1226 = vunpack.c.h.b16 %v330
    %v1227 = vunpack.c.l.b16 %v331
    %v1228 = vunpack.c.h.b16 %v331
    %v1229 = vunpack.c.l.b16 %v332
    %v1230 = vunpack.c.h.b16 %v332
    %v1231 = vunpack.c.l.b16 %v333
    %v1232 = vunpack.c.h.b16 %v333
    %v1233 = vunpack.c.l.b16 %v334
    %v1234 = vunpack.c.h.b16 %v334
    %v1235 = vunpack.c.l.b16 %v335
    %v1236 = vunpack.c.h.b16 %v335
    %v1237 = vunpack.c.l.b16 %v336
    %v1238 = vunpack.c.h.b16 %v336
    %v1239 = vunpack.c.l.b16 %v337
    %v1240 = vunpack.c.h.b16 %v337
    %v1241 = vunpack.c.l.b16 %v338
    %v1242 = vunpack.c.h.b16 %v338
    %v1243 = vunpack.c.l.b16 %v339
    %v1244 = vunpack.c.h.b16 %v339
    %v1245 = vunpack.c.l.b16 %v340
    %v1246 = vunpack.c.h.b16 %v340
    %v1247 = vunpack.c.l.b16 %v341
    %v1248 = vunpack.c.h.b16 %v341
    %v1249 = vunpack.c.l.b16 %v342
    %v1250 = vunpack.c.h.b16 %v342
    %v1251 = vunpack.c.l.b16 %v343
    %v1252 = vunpack.c.h.b16 %v343
    %v1253 = vunpack.c.l.b16 %v344
    %v1254 = vunpack.c.h.b16 %v344
    %v1255 = vunpack.c.l.b16 %v345
    %v1256 = vunpack.c.h.b16 %v345
    %v1257 = vunpack.c.l.b16 %v346
    %v1258 = vunpack.c.h.b16 %v346
    %v1259 = vunpack.c.l.b16 %v347
    %v1260 = vunpack.c.h.b16 %v347
    %v1261 = vunpack.c.l.b16 %v348
    %v1262 = vunpack.c.h.b16 %v348
    %v1263 = vunpack.c.l.b16 %v349
    %v1264 = vunpack.c.h.b16 %v349
    %v1265 = vunpack.c.l.b16 %v350
    %v1266 = vunpack.c.h.b16 %v350
    %v1267 = vunpack.c.l.b16 %v351
    %v1268 = vunpack.c.h.b16 %v351
    %v1269 = vunpack.c.l.b16 %v352
    %v1270 = vunpack.c.h.b16 %v352
    %v1271 = vunpack.c.l.b16 %v353
    %v1272 = vunpack.c.h.b16 %v353
    %v1273 = vunpack.c.l.b16 %v354
    %v1274 = vunpack.c.h.b16 %v354
    %v1275 = vunpack.c.l.b16 %v355
    %v1276 = vunpack.c.h.b16 %v355
    %v1277 = vunpack.c.l.b16 %v356
    %v1278 = vunpack.c.h.b16 %v356
    %v1279 = vunpack.c.l.b16 %v357
    %v1280 = vunpack.c.h.b16 %v357
    %v1281 = vunpack.c.l.b16 %v358
    %v1282 = vunpack.c.h.b16 %v358
    %v1283 = vunpack.c.l.b16 %v359
    %v1284 = vunpack.c.h.b16 %v359
    %v1285 = vunpack.c.l.b16 %v360
    %v1286 = vunpack.c.h.b16 %v360
    %v1287 = vunpack.c.l.b16 %v361
    %v1288 = vunpack.c.h.b16 %v361
    %v1289 = vunpack.c.l.b16 %v362
    %v1290 = vunpack.c.h.b16 %v362
    %v1291 = vunpack.c.l.b16 %v363
    %v1292 = vunpack.c.h.b16 %v363
    %v1293 = vunpack.c.l.b16 %v364
    %v1294 = vunpack.c.h.b16 %v364
    %v1295 = vunpack.c.l.b16 %v365
    %v1296 = vunpack.c.h.b16 %v365
    %v1297 = vunpack.c.l.b16 %v366
    %v1298 = vunpack.c.h.b16 %v366
    %v1299 = vunpack.c.l.b16 %v367
    %v1300 = vunpack.c.h.b16 %v367
    %v1301 = vunpack.c.l.b16 %v368
    %v1302 = vunpack.c.h.b16 %v368
    %v1303 = vunpack.c.l.b16 %v369
    %v1304 = vunpack.c.h.b16 %v369
    %v1305 = vunpack.c.l.b16 %v370
    %v1306 = vunpack.c.h.b16 %v370
    %v1307 = vunpack.c.l.b16 %v371
    %v1308 = vunpack.c.h.b16 %v371
    %v1309 = vunpack.c.l.b16 %v372
    %v1310 = vunpack.c.h.b16 %v372
    %v1311 = vunpack.c.l.b16 %v373
    %v1312 = vunpack.c.h.b16 %v373
    %v1313 = vunpack.c.l.b16 %v374
    %v1314 = vunpack.c.h.b16 %v374
    %v1315 = vunpack.c.l.b16 %v375
    %v1316 = vunpack.c.h.b16 %v375
    %v1317 = vunpack.c.l.b16 %v376
    %v1318 = vunpack.c.h.b16 %v376
    %v1319 = vunpack.c.l.b16 %v377
    %v1320 = vunpack.c.h.b16 %v377
    %v1321 = vunpack.c.l.b16 %v378
    %v1322 = vunpack.c.h.b16 %v378
    %v1323 = vunpack.c.l.b16 %v379
    %v1324 = vunpack.c.h.b16 %v379
    %v1325 = vunpack.c.l.b16 %v380
    %v1326 = vunpack.c.h.b16 %v380
    %v1327 = vunpack.c.l.b16 %v381
    %v1328 = vunpack.c.h.b16 %v381
    %v1329 = vunpack.c.l.b16 %v382
    %v1330 = vunpack.c.h.b16 %v382
    %v1331 = vunpack.c.l.b16 %v383
    %v1332 = vunpack.c.h.b16 %v383
    %v1333 = vunpack.c.l.b16 %v384
    %v1334 = vunpack.c.h.b16 %v384
    %v1335 = vunpack.c.l.b16 %v385
    %v1336 = vunpack.c.h.b16 %v385
    %v1337 = vunpack.c.l.b16 %v386
    %v1338 = vunpack.c.h.b16 %v386
    %v1339 = vunpack.c.l.b16 %v387
    %v1340 = vunpack.c.h.b16 %v387
    %v1341 = vunpack.c.l.b16 %v388
    %v1342 = vunpack.c.h.b16 %v388
    %v1343 = vunpack.c.l.b16 %v389
    %v1344 = vunpack.c.h.b16 %v389
    %v1345 = vunpack.c.l.b16 %v390
    %v1346 = vunpack.c.h.b16 %v390
    %v1347 = vunpack.c.l.b16 %v391
    %v1348 = vunpack.c.h.b16 %v391
    %v1349 = vunpack.c.l.b16 %v392
    %v1350 = vunpack.c.h.b16 %v392
    %v1351 = vunpack.c.l.b16 %v393
    %v1352 = vunpack.c.h.b16 %v393
    %v1353 = vunpack.c.l.b16 %v394
    %v1354 = vunpack.c.h.b16 %v394
    %v1355 = vunpack.c.l.b16 %v395
    %v1356 = vunpack.c.h.b16 %v395
    %v1357 = vunpack.c.l.b16 %v396
    %v1358 = vunpack.c.h.b16 %v396
    %v1359 = vunpack.c.l.b16 %v397
    %v1360 = vunpack.c.h.b16 %v397
    %v1361 = vunpack.c.l.b16 %v398
    %v1362 = vunpack.c.h.b16 %v398
    %v1363 = vunpack.c.l.b16 %v399
    %v1364 = vunpack.c.h.b16 %v399
    %v1365 = vunpack.c.l.b16 %v400
    %v1366 = vunpack.c.h.b16 %v400
    %v1367 = vunpack.c.l.b16 %v401
    %v1368 = vunpack.c.h.b16 %v401
    %v1369 = vunpack.c.l.b16 %v402
    %v1370 = vunpack.c.h.b16 %v402
    %v1371 = vunpack.c.l.b16 %v403
    %v1372 = vunpack.c.h.b16 %v403
    %v1373 = vunpack.c.l.b16 %v404
    %v1374 = vunpack.c.h.b16 %v404
    %v1375 = vpack.c.b16 %v931, %v927
    %v1376 = vpack.c.b16 %v932, %v928
    %v1377 = vpack.c.b16 %v933, %v929
    %v1378 = vpack.c.b16 %v934, %v930
    %v1379 = vpack.c.b16 %v939, %v935
    %v1380 = vpack.c.b16 %v940, %v936
    %v1381 = vpack.c.b16 %v941, %v937
    %v1382 = vpack.c.b16 %v942, %v938
    %v1383 = vpack.c.b16 %v947, %v943
    %v1384 = vpack.c.b16 %v948, %v944
    %v1385 = vpack.c.b16 %v949, %v945
    %v1386 = vpack.c.b16 %v950, %v946
    %v1387 = vpack.c.b16 %v955, %v951
    %v1388 = vpack.c.b16 %v956, %v952
    %v1389 = vpack.c.b16 %v957, %v953
    %v1390 = vpack.c.b16 %v958, %v954
    %v1391 = vpack.c.b16 %v963, %v959
    %v1392 = vpack.c.b16 %v964, %v960
    %v1393 = vpack.c.b16 %v965, %v961
    %v1394 = vpack.c.b16 %v966, %v962
    %v1395 = vpack.c.b16 %v971, %v967
    %v1396 = vpack.c.b16 %v972, %v968
    %v1397 = vpack.c.b16 %v973, %v969
    %v1398 = vpack.c.b16 %v974, %v970
    %v1399 = vpack.c.b16 %v979, %v975
    %v1400 = vpack.c.b16 %v980, %v976
    %v1401 = vpack.c.b16 %v981, %v977
    %v1402 = vpack.c.b16 %v982, %v978
    %v1403 = vpack.c.b16 %v987, %v983
    %v1404 = vpack.c.b16 %v988, %v984
    %v1405 = vpack.c.b16 %v989, %v985
    %v1406 = vpack.c.b16 %v990, %v986
    %v1407 = vpack.c.b16 %v995, %v991
    %v1408 = vpack.c.b16 %v996, %v992
    %v1409 = vpack.c.b16 %v997, %v993
    %v1410 = vpack.c.b16 %v998, %v994
    %v1411 = vpack.c.b16 %v1003, %v999
    %v1412 = vpack.c.b16 %v1004, %v1000
    %v1413 = vpack.c.b16 %v1005, %v1001
    %v1414 = vpack.c.b16 %v1006, %v1002
    %v1415 = vpack.c.b16 %v1011, %v1007
    %v1416 = vpack.c.b16 %v1012, %v1008
    %v1417 = vpack.c.b16 %v1013, %v1009
    %v1418 = vpack.c.b16 %v1014, %v1010
    %v1419 = vpack.c.b16 %v1019, %v1015
    %v1420 = vpack.c.b16 %v1020, %v1016
    %v1421 = vpack.c.b16 %v1021, %v1017
    %v1422 = vpack.c.b16 %v1022, %v1018
    %v1423 = vpack.c.b16 %v1027, %v1023
    %v1424 = vpack.c.b16 %v1028, %v1024
    %v1425 = vpack.c.b16 %v1029, %v1025
    %v1426 = vpack.c.b16 %v1030, %v1026
    %v1427 = vpack.c.b16 %v1035, %v1031
    %v1428 = vpack.c.b16 %v1036, %v1032
    %v1429 = vpack.c.b16 %v1037, %v1033
    %v1430 = vpack.c.b16 %v1038, %v1034
    %v1431 = vpack.c.b16 %v1043, %v1039
    %v1432 = vpack.c.b16 %v1044, %v1040
    %v1433 = vpack.c.b16 %v1045, %v1041
    %v1434 = vpack.c.b16 %v1046, %v1042
    %v1435 = vpack.c.b16 %v1051, %v1047
    %v1436 = vpack.c.b16 %v1052, %v1048
    %v1437 = vpack.c.b16 %v1053, %v1049
    %v1438 = vpack.c.b16 %v1054, %v1050
    %v1439 = vpack.c.b16 %v1059, %v1055
    %v1440 = vpack.c.b16 %v1060, %v1056
    %v1441 = vpack.c.b16 %v1061, %v1057
    %v1442 = vpack.c.b16 %v1062, %v1058
    %v1443 = vpack.c.b16 %v1067, %v1063
    %v1444 = vpack.c.b16 %v1068, %v1064
    %v1445 = vpack.c.b16 %v1069, %v1065
    %v1446 = vpack.c.b16 %v1070, %v1066
    %v1447 = vpack.c.b16 %v1075, %v1071
    %v1448 = vpack.c.b16 %v1076, %v1072
    %v1449 = vpack.c.b16 %v1077, %v1073
    %v1450 = vpack.c.b16 %v1078, %v1074
    %v1451 = vpack.c.b16 %v1083, %v1079
    %v1452 = vpack.c.b16 %v1084, %v1080
    %v1453 = vpack.c.b16 %v1085, %v1081
    %v1454 = vpack.c.b16 %v1086, %v1082
    %v1455 = vpack.c.b16 %v1091, %v1087
    %v1456 = vpack.c.b16 %v1092, %v1088
    %v1457 = vpack.c.b16 %v1093, %v1089
    %v1458 = vpack.c.b16 %v1094, %v1090
    %v1459 = vpack.c.b16 %v1099, %v1095
    %v1460 = vpack.c.b16 %v1100, %v1096
    %v1461 = vpack.c.b16 %v1101, %v1097
    %v1462 = vpack.c.b16 %v1102, %v1098
    %v1463 = vpack.c.b16 %v1107, %v1103
    %v1464 = vpack.c.b16 %v1108, %v1104
    %v1465 = vpack.c.b16 %v1109, %v1105
    %v1466 = vpack.c.b16 %v1110, %v1106
    %v1467 = vpack.c.b16 %v1115, %v1111
    %v1468 = vpack.c.b16 %v1116, %v1112
    %v1469 = vpack.c.b16 %v1117, %v1113
    %v1470 = vpack.c.b16 %v1118, %v1114
    %v1471 = vpack.c.b16 %v1123, %v1119
    %v1472 = vpack.c.b16 %v1124, %v1120
    %v1473 = vpack.c.b16 %v1125, %v1121
    %v1474 = vpack.c.b16 %v1126, %v1122
    %v1475 = vpack.c.b16 %v1131, %v1127
    %v1476 = vpack.c.b16 %v1132, %v1128
    %v1477 = vpack.c.b16 %v1133, %v1129
    %v1478 = vpack.c.b16 %v1134, %v1130
    %v1479 = vpack.c.b16 %v1139, %v1135
    %v1480 = vpack.c.b16 %v1140, %v1136
    %v1481 = vpack.c.b16 %v1141, %v1137
    %v1482 = vpack.c.b16 %v1142, %v1138
    %v1483 = vpack.c.b16 %v1147, %v1143
    %v1484 = vpack.c.b16 %v1148, %v1144
    %v1485 = vpack.c.b16 %v1149, %v1145
    %v1486 = vpack.c.b16 %v1150, %v1146
    %v1487 = vpack.c.b16 %v1155, %v1151
    %v1488 = vpack.c.b16 %v1156, %v1152
    %v1489 = vpack.c.b16 %v1157, %v1153
    %v1490 = vpack.c.b16 %v1158, %v1154
    %v1491 = vpack.c.b16 %v1163, %v1159
    %v1492 = vpack.c.b16 %v1164, %v1160
    %v1493 = vpack.c.b16 %v1165, %v1161
    %v1494 = vpack.c.b16 %v1166, %v1162
    %v1495 = vpack.c.b16 %v1171, %v1167
    %v1496 = vpack.c.b16 %v1172, %v1168
    %v1497 = vpack.c.b16 %v1173, %v1169
    %v1498 = vpack.c.b16 %v1174, %v1170
    %v1499 = vpack.c.b16 %v1179, %v1175
    %v1500 = vpack.c.b16 %v1180, %v1176
    %v1501 = vpack.c.b16 %v1181, %v1177
    %v1502 = vpack.c.b16 %v1182, %v1178
    %v1503 = vpack.c.b16 %v1187, %v1183
    %v1504 = vpack.c.b16 %v1188, %v1184
    %v1505 = vpack.c.b16 %v1189, %v1185
    %v1506 = vpack.c.b16 %v1190, %v1186
    %v1507 = vpack.c.b16 %v1195, %v1191
    %v1508 = vpack.c.b16 %v1196, %v1192
    %v1509 = vpack.c.b16 %v1197, %v1193
    %v1510 = vpack.c.b16 %v1198, %v1194
    %v1511 = vpack.c.b16 %v1203, %v1199
    %v1512 = vpack.c.b16 %v1204, %v1200
    %v1513 = vpack.c.b16 %v1205, %v1201
    %v1514 = vpack.c.b16 %v1206, %v1202
    %v1515 = vpack.c.b16 %v1211, %v1207
    %v1516 = vpack.c.b16 %v1212, %v1208
    %v1517 = vpack.c.b16 %v1213, %v1209
    %v1518 = vpack.c.b16 %v1214, %v1210
    %v1519 = vpack.c.b16 %v1219, %v1215
    %v1520 = vpack.c.b16 %v1220, %v1216
    %v1521 = vpack.c.b16 %v1221, %v1217
    %v1522 = vpack.c.b16 %v1222, %v1218
    %v1523 = vpack.c.b16 %v1227, %v1223
    %v1524 = vpack.c.b16 %v1228, %v1224
    %v1525 = vpack.c.b16 %v1229, %v1225
    %v1526 = vpack.c.b16 %v1230, %v1226
    %v1527 = vpack.c.b16 %v1235, %v1231
    %v1528 = vpack.c.b16 %v1236, %v1232
    %v1529 = vpack.c.b16 %v1237, %v1233
    %v1530 = vpack.c.b16 %v1238, %v1234
    %v1531 = vpack.c.b16 %v1243, %v1239
    %v1532 = vpack.c.b16 %v1244, %v1240
    %v1533 = vpack.c.b16 %v1245, %v1241
    %v1534 = vpack.c.b16 %v1246, %v1242
    %v1535 = vpack.c.b16 %v1251, %v1247
    %v1536 = vpack.c.b16 %v1252, %v1248
    %v1537 = vpack.c.b16 %v1253, %v1249
    %v1538 = vpack.c.b16 %v1254, %v1250
    %v1539 = vpack.c.b16 %v1259, %v1255
    %v1540 = vpack.c.b16 %v1260, %v1256
    %v1541 = vpack.c.b16 %v1261, %v1257
    %v1542 = vpack.c.b16 %v1262, %v1258
    %v1543 = vpack.c.b16 %v1267, %v1263
    %v1544 = vpack.c.b16 %v1268, %v1264
    %v1545 = vpack.c.b16 %v1269, %v1265
    %v1546 = vpack.c.b16 %v1270, %v1266
    %v1547 = vpack.c.b16 %v1275, %v1271
    %v1548 = vpack.c.b16 %v1276, %v1272
    %v1549 = vpack.c.b16 %v1277, %v1273
    %v1550 = vpack.c.b16 %v1278, %v1274
    %v1551 = vpack.c.b16 %v1283, %v1279
    %v1552 = vpack.c.b16 %v1284, %v1280
    %v1553 = vpack.c.b16 %v1285, %v1281
    %v1554 = vpack.c.b16 %v1286, %v1282
    %v1555 = vpack.c.b16 %v1291, %v1287
    %v1556 = vpack.c.b16 %v1292, %v1288
    %v1557 = vpack.c.b16 %v1293, %v1289
    %v1558 = vpack.c.b16 %v1294, %v1290
    %v1559 = vpack.c.b16 %v1299, %v1295
    %v1560 = vpack.c.b16 %v1300, %v1296
    %v1561 = vpack.c.b16 %v1301, %v1297
    %v1562 = vpack.c.b16 %v1302, %v1298
    %v1563 = vpack.c.b16 %v1307, %v1303
    %v1564 = vpack.c.b16 %v1308, %v1304
    %v1565 = vpack.c.b16 %v1309, %v1305
    %v1566 = vpack.c.b16 %v1310, %v1306
    %v1567 = vpack.c.b16 %v1315, %v1311
    %v1568 = vpack.c.b16 %v1316, %v1312
    %v1569 = vpack.c.b16 %v1317, %v1313
    %v1570 = vpack.c.b16 %v1318, %v1314
    %v1571 = vpack.c.b16 %v1323, %v1319
    %v1572 = vpack.c.b16 %v1324, %v1320
    %v1573 = vpack.c.b16 %v1325, %v1321
    %v1574 = vpack.c.b16 %v1326, %v1322
    %v1575 = vpack.c.b16 %v1331, %v1327
    %v1576 = vpack.c.b16 %v1332, %v1328
    %v1577 = vpack.c.b16 %v1333, %v1329
    %v1578 = vpack.c.b16 %v1334, %v1330
    %v1579 = vpack.c.b16 %v1339, %v1335
    %v1580 = vpack.c.b16 %v1340, %v1336
    %v1581 = vpack.c.b16 %v1341, %v1337
    %v1582 = vpack.c.b16 %v1342, %v1338
    %v1583 = vpack.c.b16 %v1347, %v1343
    %v1584 = vpack.c.b16 %v1348, %v1344
    %v1585 = vpack.c.b16 %v1349, %v1345
    %v1586 = vpack.c.b16 %v1350, %v1346
    %v1587 = vpack.c.b16 %v1355, %v1351
    %v1588 = vpack.c.b16 %v1356, %v1352
    %v1589 = vpack.c.b16 %v1357, %v1353
    %v1590 = vpack.c.b16 %v1358, %v1354
    %v1591 = vpack.c.b16 %v1363, %v1359
    %v1592 = vpack.c.b16 %v1364, %v1360
    %v1593 = vpack.c.b16 %v1365, %v1361
    %v1594 = vpack.c.b16 %v1366, %v1362
    %v1595 = vpack.c.b16 %v1371, %v1367
    %v1596 = vpack.c.b16 %v1372, %v1368
    %v1597 = vpack.c.b16 %v1373, %v1369
    %v1598 = vpack.c.b16 %v1374, %v1370
    %1823 = vmatpush.bf16.msra.mxu0 %v1403
    %1824 = vmatpush.bf16.msra.mxu0 %v1399
    %1825 = vmatpush.bf16.msra.mxu0 %v1395
    %1826 = vmatpush.bf16.msra.mxu0 %v1391
    %1827 = vmatpush.bf16.msra.mxu0 %v1387
    %1828 = vmatpush.bf16.msra.mxu0 %v1383
    %1829 = vmatpush.bf16.msra.mxu0 %v1379
    %1830 = vmatpush.bf16.msra.mxu0 %v1375
    %1831 = vmatmul.bf16.gmra.mxu0 %v591
    %v1832 = vpop.f32.mrf.mxu0
    %v1833 = vadd.f32 %v407, %v1832
    %v1834 = vpop.f32.mrf.mxu0
    %v1835 = vadd.f32 %v407, %v1834
    %1836 = vmatmul.bf16.gmra.mxu0 %v598
    %v1837 = vpop.f32.mrf.mxu0
    %v1838 = vadd.f32 %v407, %v1837
    %v1839 = vpop.f32.mrf.mxu0
    %v1840 = vadd.f32 %v407, %v1839
    %1841 = vmatmul.bf16.gmra.mxu0 %v605
    %v1842 = vpop.f32.mrf.mxu0
    %v1843 = vadd.f32 %v407, %v1842
    %v1844 = vpop.f32.mrf.mxu0
    %v1845 = vadd.f32 %v407, %v1844
    %1846 = vmatmul.bf16.gmra.mxu0 %v612
    %v1847 = vpop.f32.mrf.mxu0
    %v1848 = vadd.f32 %v407, %v1847
    %v1849 = vpop.f32.mrf.mxu0
    %v1850 = vadd.f32 %v407, %v1849
    %1851 = vmatmul.bf16.gmra.mxu0 %v619
    %v1852 = vpop.f32.mrf.mxu0
    %v1853 = vadd.f32 %v407, %v1852
    %v1854 = vpop.f32.mrf.mxu0
    %v1855 = vadd.f32 %v407, %v1854
    %1856 = vmatmul.bf16.gmra.mxu0 %v626
    %v1857 = vpop.f32.mrf.mxu0
    %v1858 = vadd.f32 %v407, %v1857
    %v1859 = vpop.f32.mrf.mxu0
    %v1860 = vadd.f32 %v407, %v1859
    %1861 = vmatmul.bf16.gmra.mxu0 %v633
    %v1862 = vpop.f32.mrf.mxu0
    %v1863 = vadd.f32 %v407, %v1862
    %v1864 = vpop.f32.mrf.mxu0
    %v1865 = vadd.f32 %v407, %v1864
    %1866 = vmatmul.bf16.gmra.mxu0 %v640
    %v1867 = vpop.f32.mrf.mxu0
    %v1868 = vadd.f32 %v407, %v1867
    %v1869 = vpop.f32.mrf.mxu0
    %v1870 = vadd.f32 %v407, %v1869
    %1871 = vdwg.mxu0
    %1872 = vmatpush.bf16.msra.mxu0 %v1435
    %1873 = vmatpush.bf16.msra.mxu0 %v1431
    %1874 = vmatpush.bf16.msra.mxu0 %v1427
    %1875 = vmatpush.bf16.msra.mxu0 %v1423
    %1876 = vmatpush.bf16.msra.mxu0 %v1419
    %1877 = vmatpush.bf16.msra.mxu0 %v1415
    %1878 = vmatpush.bf16.msra.mxu0 %v1411
    %1879 = vmatpush.bf16.msra.mxu0 %v1407
    %1880 = vmatmul.bf16.gmra.mxu0 %v592
    %v1881 = vpop.f32.mrf.mxu0
    %v1882 = vadd.f32 %v1833, %v1881
    %v1883 = vpop.f32.mrf.mxu0
    %v1884 = vadd.f32 %v1835, %v1883
    %1885 = vmatmul.bf16.gmra.mxu0 %v599
    %v1886 = vpop.f32.mrf.mxu0
    %v1887 = vadd.f32 %v1838, %v1886
    %v1888 = vpop.f32.mrf.mxu0
    %v1889 = vadd.f32 %v1840, %v1888
    %1890 = vmatmul.bf16.gmra.mxu0 %v606
    %v1891 = vpop.f32.mrf.mxu0
    %v1892 = vadd.f32 %v1843, %v1891
    %v1893 = vpop.f32.mrf.mxu0
    %v1894 = vadd.f32 %v1845, %v1893
    %1895 = vmatmul.bf16.gmra.mxu0 %v613
    %v1896 = vpop.f32.mrf.mxu0
    %v1897 = vadd.f32 %v1848, %v1896
    %v1898 = vpop.f32.mrf.mxu0
    %v1899 = vadd.f32 %v1850, %v1898
    %1900 = vmatmul.bf16.gmra.mxu0 %v620
    %v1901 = vpop.f32.mrf.mxu0
    %v1902 = vadd.f32 %v1853, %v1901
    %v1903 = vpop.f32.mrf.mxu0
    %v1904 = vadd.f32 %v1855, %v1903
    %1905 = vmatmul.bf16.gmra.mxu0 %v627
    %v1906 = vpop.f32.mrf.mxu0
    %v1907 = vadd.f32 %v1858, %v1906
    %v1908 = vpop.f32.mrf.mxu0
    %v1909 = vadd.f32 %v1860, %v1908
    %1910 = vmatmul.bf16.gmra.mxu0 %v634
    %v1911 = vpop.f32.mrf.mxu0
    %v1912 = vadd.f32 %v1863, %v1911
    %v1913 = vpop.f32.mrf.mxu0
    %v1914 = vadd.f32 %v1865, %v1913
    %1915 = vmatmul.bf16.gmra.mxu0 %v641
    %v1916 = vpop.f32.mrf.mxu0
    %v1917 = vadd.f32 %v1868, %v1916
    %v1918 = vpop.f32.mrf.mxu0
    %v1919 = vadd.f32 %v1870, %v1918
    %1920 = vdwg.mxu0
    %1921 = vmatpush.bf16.msra.mxu0 %v1467
    %1922 = vmatpush.bf16.msra.mxu0 %v1463
    %1923 = vmatpush.bf16.msra.mxu0 %v1459
    %1924 = vmatpush.bf16.msra.mxu0 %v1455
    %1925 = vmatpush.bf16.msra.mxu0 %v1451
    %1926 = vmatpush.bf16.msra.mxu0 %v1447
    %1927 = vmatpush.bf16.msra.mxu0 %v1443
    %1928 = vmatpush.bf16.msra.mxu0 %v1439
    %1929 = vmatmul.bf16.gmra.mxu0 %v593
    %v1930 = vpop.f32.mrf.mxu0
    %v1931 = vadd.f32 %v1882, %v1930
    %v1932 = vpop.f32.mrf.mxu0
    %v1933 = vadd.f32 %v1884, %v1932
    %1934 = vmatmul.bf16.gmra.mxu0 %v600
    %v1935 = vpop.f32.mrf.mxu0
    %v1936 = vadd.f32 %v1887, %v1935
    %v1937 = vpop.f32.mrf.mxu0
    %v1938 = vadd.f32 %v1889, %v1937
    %1939 = vmatmul.bf16.gmra.mxu0 %v607
    %v1940 = vpop.f32.mrf.mxu0
    %v1941 = vadd.f32 %v1892, %v1940
    %v1942 = vpop.f32.mrf.mxu0
    %v1943 = vadd.f32 %v1894, %v1942
    %1944 = vmatmul.bf16.gmra.mxu0 %v614
    %v1945 = vpop.f32.mrf.mxu0
    %v1946 = vadd.f32 %v1897, %v1945
    %v1947 = vpop.f32.mrf.mxu0
    %v1948 = vadd.f32 %v1899, %v1947
    %1949 = vmatmul.bf16.gmra.mxu0 %v621
    %v1950 = vpop.f32.mrf.mxu0
    %v1951 = vadd.f32 %v1902, %v1950
    %v1952 = vpop.f32.mrf.mxu0
    %v1953 = vadd.f32 %v1904, %v1952
    %1954 = vmatmul.bf16.gmra.mxu0 %v628
    %v1955 = vpop.f32.mrf.mxu0
    %v1956 = vadd.f32 %v1907, %v1955
    %v1957 = vpop.f32.mrf.mxu0
    %v1958 = vadd.f32 %v1909, %v1957
    %1959 = vmatmul.bf16.gmra.mxu0 %v635
    %v1960 = vpop.f32.mrf.mxu0
    %v1961 = vadd.f32 %v1912, %v1960
    %v1962 = vpop.f32.mrf.mxu0
    %v1963 = vadd.f32 %v1914, %v1962
    %1964 = vmatmul.bf16.gmra.mxu0 %v642
    %v1965 = vpop.f32.mrf.mxu0
    %v1966 = vadd.f32 %v1917, %v1965
    %v1967 = vpop.f32.mrf.mxu0
    %v1968 = vadd.f32 %v1919, %v1967
    %1969 = vdwg.mxu0
    %1970 = vmatpush.bf16.msra.mxu0 %v1499
    %1971 = vmatpush.bf16.msra.mxu0 %v1495
    %1972 = vmatpush.bf16.msra.mxu0 %v1491
    %1973 = vmatpush.bf16.msra.mxu0 %v1487
    %1974 = vmatpush.bf16.msra.mxu0 %v1483
    %1975 = vmatpush.bf16.msra.mxu0 %v1479
    %1976 = vmatpush.bf16.msra.mxu0 %v1475
    %1977 = vmatpush.bf16.msra.mxu0 %v1471
    %1978 = vmatmul.bf16.gmra.mxu0 %v594
    %v1979 = vpop.f32.mrf.mxu0
    %v1980 = vadd.f32 %v1931, %v1979
    %v1981 = vpop.f32.mrf.mxu0
    %v1982 = vadd.f32 %v1933, %v1981
    %1983 = vmatmul.bf16.gmra.mxu0 %v601
    %v1984 = vpop.f32.mrf.mxu0
    %v1985 = vadd.f32 %v1936, %v1984
    %v1986 = vpop.f32.mrf.mxu0
    %v1987 = vadd.f32 %v1938, %v1986
    %1988 = vmatmul.bf16.gmra.mxu0 %v608
    %v1989 = vpop.f32.mrf.mxu0
    %v1990 = vadd.f32 %v1941, %v1989
    %v1991 = vpop.f32.mrf.mxu0
    %v1992 = vadd.f32 %v1943, %v1991
    %1993 = vmatmul.bf16.gmra.mxu0 %v615
    %v1994 = vpop.f32.mrf.mxu0
    %v1995 = vadd.f32 %v1946, %v1994
    %v1996 = vpop.f32.mrf.mxu0
    %v1997 = vadd.f32 %v1948, %v1996
    %1998 = vmatmul.bf16.gmra.mxu0 %v622
    %v1999 = vpop.f32.mrf.mxu0
    %v2000 = vadd.f32 %v1951, %v1999
    %v2001 = vpop.f32.mrf.mxu0
    %v2002 = vadd.f32 %v1953, %v2001
    %2003 = vmatmul.bf16.gmra.mxu0 %v629
    %v2004 = vpop.f32.mrf.mxu0
    %v2005 = vadd.f32 %v1956, %v2004
    %v2006 = vpop.f32.mrf.mxu0
    %v2007 = vadd.f32 %v1958, %v2006
    %2008 = vmatmul.bf16.gmra.mxu0 %v636
    %v2009 = vpop.f32.mrf.mxu0
    %v2010 = vadd.f32 %v1961, %v2009
    %v2011 = vpop.f32.mrf.mxu0
    %v2012 = vadd.f32 %v1963, %v2011
    %2013 = vmatmul.bf16.gmra.mxu0 %v643
    %v2014 = vpop.f32.mrf.mxu0
    %v2015 = vadd.f32 %v1966, %v2014
    %v2016 = vpop.f32.mrf.mxu0
    %v2017 = vadd.f32 %v1968, %v2016
    %2018 = vdwg.mxu0
    %2019 = vmatpush.bf16.msra.mxu0 %v1531
    %2020 = vmatpush.bf16.msra.mxu0 %v1527
    %2021 = vmatpush.bf16.msra.mxu0 %v1523
    %2022 = vmatpush.bf16.msra.mxu0 %v1519
    %2023 = vmatpush.bf16.msra.mxu0 %v1515
    %2024 = vmatpush.bf16.msra.mxu0 %v1511
    %2025 = vmatpush.bf16.msra.mxu0 %v1507
    %2026 = vmatpush.bf16.msra.mxu0 %v1503
    %2027 = vmatmul.bf16.gmra.mxu0 %v595
    %v2028 = vpop.f32.mrf.mxu0
    %v2029 = vadd.f32 %v1980, %v2028
    %v2030 = vpop.f32.mrf.mxu0
    %v2031 = vadd.f32 %v1982, %v2030
    %2032 = vmatmul.bf16.gmra.mxu0 %v602
    %v2033 = vpop.f32.mrf.mxu0
    %v2034 = vadd.f32 %v1985, %v2033
    %v2035 = vpop.f32.mrf.mxu0
    %v2036 = vadd.f32 %v1987, %v2035
    %2037 = vmatmul.bf16.gmra.mxu0 %v609
    %v2038 = vpop.f32.mrf.mxu0
    %v2039 = vadd.f32 %v1990, %v2038
    %v2040 = vpop.f32.mrf.mxu0
    %v2041 = vadd.f32 %v1992, %v2040
    %2042 = vmatmul.bf16.gmra.mxu0 %v616
    %v2043 = vpop.f32.mrf.mxu0
    %v2044 = vadd.f32 %v1995, %v2043
    %v2045 = vpop.f32.mrf.mxu0
    %v2046 = vadd.f32 %v1997, %v2045
    %2047 = vmatmul.bf16.gmra.mxu0 %v623
    %v2048 = vpop.f32.mrf.mxu0
    %v2049 = vadd.f32 %v2000, %v2048
    %v2050 = vpop.f32.mrf.mxu0
    %v2051 = vadd.f32 %v2002, %v2050
    %2052 = vmatmul.bf16.gmra.mxu0 %v630
    %v2053 = vpop.f32.mrf.mxu0
    %v2054 = vadd.f32 %v2005, %v2053
    %v2055 = vpop.f32.mrf.mxu0
    %v2056 = vadd.f32 %v2007, %v2055
    %2057 = vmatmul.bf16.gmra.mxu0 %v637
    %v2058 = vpop.f32.mrf.mxu0
    %v2059 = vadd.f32 %v2010, %v2058
    %v2060 = vpop.f32.mrf.mxu0
    %v2061 = vadd.f32 %v2012, %v2060
    %2062 = vmatmul.bf16.gmra.mxu0 %v644
    %v2063 = vpop.f32.mrf.mxu0
    %v2064 = vadd.f32 %v2015, %v2063
    %v2065 = vpop.f32.mrf.mxu0
    %v2066 = vadd.f32 %v2017, %v2065
    %2067 = vdwg.mxu0
    %2068 = vmatpush.bf16.msra.mxu0 %v1563
    %2069 = vmatpush.bf16.msra.mxu0 %v1559
    %2070 = vmatpush.bf16.msra.mxu0 %v1555
    %2071 = vmatpush.bf16.msra.mxu0 %v1551
    %2072 = vmatpush.bf16.msra.mxu0 %v1547
    %2073 = vmatpush.bf16.msra.mxu0 %v1543
    %2074 = vmatpush.bf16.msra.mxu0 %v1539
    %2075 = vmatpush.bf16.msra.mxu0 %v1535
    %2076 = vmatmul.bf16.gmra.mxu0 %v596
    %v2077 = vpop.f32.mrf.mxu0
    %v2078 = vadd.f32 %v2029, %v2077
    %v2079 = vpop.f32.mrf.mxu0
    %v2080 = vadd.f32 %v2031, %v2079
    %2081 = vmatmul.bf16.gmra.mxu0 %v603
    %v2082 = vpop.f32.mrf.mxu0
    %v2083 = vadd.f32 %v2034, %v2082
    %v2084 = vpop.f32.mrf.mxu0
    %v2085 = vadd.f32 %v2036, %v2084
    %2086 = vmatmul.bf16.gmra.mxu0 %v610
    %v2087 = vpop.f32.mrf.mxu0
    %v2088 = vadd.f32 %v2039, %v2087
    %v2089 = vpop.f32.mrf.mxu0
    %v2090 = vadd.f32 %v2041, %v2089
    %2091 = vmatmul.bf16.gmra.mxu0 %v617
    %v2092 = vpop.f32.mrf.mxu0
    %v2093 = vadd.f32 %v2044, %v2092
    %v2094 = vpop.f32.mrf.mxu0
    %v2095 = vadd.f32 %v2046, %v2094
    %2096 = vmatmul.bf16.gmra.mxu0 %v624
    %v2097 = vpop.f32.mrf.mxu0
    %v2098 = vadd.f32 %v2049, %v2097
    %v2099 = vpop.f32.mrf.mxu0
    %v2100 = vadd.f32 %v2051, %v2099
    %2101 = vmatmul.bf16.gmra.mxu0 %v631
    %v2102 = vpop.f32.mrf.mxu0
    %v2103 = vadd.f32 %v2054, %v2102
    %v2104 = vpop.f32.mrf.mxu0
    %v2105 = vadd.f32 %v2056, %v2104
    %2106 = vmatmul.bf16.gmra.mxu0 %v638
    %v2107 = vpop.f32.mrf.mxu0
    %v2108 = vadd.f32 %v2059, %v2107
    %v2109 = vpop.f32.mrf.mxu0
    %v2110 = vadd.f32 %v2061, %v2109
    %2111 = vmatmul.bf16.gmra.mxu0 %v645
    %v2112 = vpop.f32.mrf.mxu0
    %v2113 = vadd.f32 %v2064, %v2112
    %v2114 = vpop.f32.mrf.mxu0
    %v2115 = vadd.f32 %v2066, %v2114
    %2116 = vdwg.mxu0
    %2117 = vmatpush.bf16.msra.mxu0 %v1595
    %2118 = vmatpush.bf16.msra.mxu0 %v1591
    %2119 = vmatpush.bf16.msra.mxu0 %v1587
    %2120 = vmatpush.bf16.msra.mxu0 %v1583
    %2121 = vmatpush.bf16.msra.mxu0 %v1579
    %2122 = vmatpush.bf16.msra.mxu0 %v1575
    %2123 = vmatpush.bf16.msra.mxu0 %v1571
    %2124 = vmatpush.bf16.msra.mxu0 %v1567
    %2125 = vmatmul.bf16.gmra.mxu0 %v597
    %v2126 = vpop.f32.mrf.mxu0
    %v2127 = vadd.f32 %v2078, %v2126
    %v2128 = vpop.f32.mrf.mxu0
    %v2129 = vadd.f32 %v2080, %v2128
    %2130 = vmatmul.bf16.gmra.mxu0 %v604
    %v2131 = vpop.f32.mrf.mxu0
    %v2132 = vadd.f32 %v2083, %v2131
    %v2133 = vpop.f32.mrf.mxu0
    %v2134 = vadd.f32 %v2085, %v2133
    %2135 = vmatmul.bf16.gmra.mxu0 %v611
    %v2136 = vpop.f32.mrf.mxu0
    %v2137 = vadd.f32 %v2088, %v2136
    %v2138 = vpop.f32.mrf.mxu0
    %v2139 = vadd.f32 %v2090, %v2138
    %2140 = vmatmul.bf16.gmra.mxu0 %v618
    %v2141 = vpop.f32.mrf.mxu0
    %v2142 = vadd.f32 %v2093, %v2141
    %v2143 = vpop.f32.mrf.mxu0
    %v2144 = vadd.f32 %v2095, %v2143
    %2145 = vmatmul.bf16.gmra.mxu0 %v625
    %v2146 = vpop.f32.mrf.mxu0
    %v2147 = vadd.f32 %v2098, %v2146
    %v2148 = vpop.f32.mrf.mxu0
    %v2149 = vadd.f32 %v2100, %v2148
    %2150 = vmatmul.bf16.gmra.mxu0 %v632
    %v2151 = vpop.f32.mrf.mxu0
    %v2152 = vadd.f32 %v2103, %v2151
    %v2153 = vpop.f32.mrf.mxu0
    %v2154 = vadd.f32 %v2105, %v2153
    %2155 = vmatmul.bf16.gmra.mxu0 %v639
    %v2156 = vpop.f32.mrf.mxu0
    %v2157 = vadd.f32 %v2108, %v2156
    %v2158 = vpop.f32.mrf.mxu0
    %v2159 = vadd.f32 %v2110, %v2158
    %2160 = vmatmul.bf16.gmra.mxu0 %v646
    %v2161 = vpop.f32.mrf.mxu0
    %v2162 = vadd.f32 %v2113, %v2161
    %v2163 = vpop.f32.mrf.mxu0
    %v2164 = vadd.f32 %v2115, %v2163
    %2165 = vdwg.mxu0
    %2166 = vmatpush.bf16.msra.mxu0 %v1404
    %2167 = vmatpush.bf16.msra.mxu0 %v1400
    %2168 = vmatpush.bf16.msra.mxu0 %v1396
    %2169 = vmatpush.bf16.msra.mxu0 %v1392
    %2170 = vmatpush.bf16.msra.mxu0 %v1388
    %2171 = vmatpush.bf16.msra.mxu0 %v1384
    %2172 = vmatpush.bf16.msra.mxu0 %v1380
    %2173 = vmatpush.bf16.msra.mxu0 %v1376
    %2174 = vmatmul.bf16.gmra.mxu0 %v591
    %v2175 = vpop.f32.mrf.mxu0
    %v2176 = vadd.f32 %v408, %v2175
    %v2177 = vpop.f32.mrf.mxu0
    %v2178 = vadd.f32 %v408, %v2177
    %2179 = vmatmul.bf16.gmra.mxu0 %v598
    %v2180 = vpop.f32.mrf.mxu0
    %v2181 = vadd.f32 %v408, %v2180
    %v2182 = vpop.f32.mrf.mxu0
    %v2183 = vadd.f32 %v408, %v2182
    %2184 = vmatmul.bf16.gmra.mxu0 %v605
    %v2185 = vpop.f32.mrf.mxu0
    %v2186 = vadd.f32 %v408, %v2185
    %v2187 = vpop.f32.mrf.mxu0
    %v2188 = vadd.f32 %v408, %v2187
    %2189 = vmatmul.bf16.gmra.mxu0 %v612
    %v2190 = vpop.f32.mrf.mxu0
    %v2191 = vadd.f32 %v408, %v2190
    %v2192 = vpop.f32.mrf.mxu0
    %v2193 = vadd.f32 %v408, %v2192
    %2194 = vmatmul.bf16.gmra.mxu0 %v619
    %v2195 = vpop.f32.mrf.mxu0
    %v2196 = vadd.f32 %v408, %v2195
    %v2197 = vpop.f32.mrf.mxu0
    %v2198 = vadd.f32 %v408, %v2197
    %2199 = vmatmul.bf16.gmra.mxu0 %v626
    %v2200 = vpop.f32.mrf.mxu0
    %v2201 = vadd.f32 %v408, %v2200
    %v2202 = vpop.f32.mrf.mxu0
    %v2203 = vadd.f32 %v408, %v2202
    %2204 = vmatmul.bf16.gmra.mxu0 %v633
    %v2205 = vpop.f32.mrf.mxu0
    %v2206 = vadd.f32 %v408, %v2205
    %v2207 = vpop.f32.mrf.mxu0
    %v2208 = vadd.f32 %v408, %v2207
    %2209 = vmatmul.bf16.gmra.mxu0 %v640
    %v2210 = vpop.f32.mrf.mxu0
    %v2211 = vadd.f32 %v408, %v2210
    %v2212 = vpop.f32.mrf.mxu0
    %v2213 = vadd.f32 %v408, %v2212
    %2214 = vdwg.mxu0
    %2215 = vmatpush.bf16.msra.mxu0 %v1436
    %2216 = vmatpush.bf16.msra.mxu0 %v1432
    %2217 = vmatpush.bf16.msra.mxu0 %v1428
    %2218 = vmatpush.bf16.msra.mxu0 %v1424
    %2219 = vmatpush.bf16.msra.mxu0 %v1420
    %2220 = vmatpush.bf16.msra.mxu0 %v1416
    %2221 = vmatpush.bf16.msra.mxu0 %v1412
    %2222 = vmatpush.bf16.msra.mxu0 %v1408
    %2223 = vmatmul.bf16.gmra.mxu0 %v592
    %v2224 = vpop.f32.mrf.mxu0
    %v2225 = vadd.f32 %v2176, %v2224
    %v2226 = vpop.f32.mrf.mxu0
    %v2227 = vadd.f32 %v2178, %v2226
    %2228 = vmatmul.bf16.gmra.mxu0 %v599
    %v2229 = vpop.f32.mrf.mxu0
    %v2230 = vadd.f32 %v2181, %v2229
    %v2231 = vpop.f32.mrf.mxu0
    %v2232 = vadd.f32 %v2183, %v2231
    %2233 = vmatmul.bf16.gmra.mxu0 %v606
    %v2234 = vpop.f32.mrf.mxu0
    %v2235 = vadd.f32 %v2186, %v2234
    %v2236 = vpop.f32.mrf.mxu0
    %v2237 = vadd.f32 %v2188, %v2236
    %2238 = vmatmul.bf16.gmra.mxu0 %v613
    %v2239 = vpop.f32.mrf.mxu0
    %v2240 = vadd.f32 %v2191, %v2239
    %v2241 = vpop.f32.mrf.mxu0
    %v2242 = vadd.f32 %v2193, %v2241
    %2243 = vmatmul.bf16.gmra.mxu0 %v620
    %v2244 = vpop.f32.mrf.mxu0
    %v2245 = vadd.f32 %v2196, %v2244
    %v2246 = vpop.f32.mrf.mxu0
    %v2247 = vadd.f32 %v2198, %v2246
    %2248 = vmatmul.bf16.gmra.mxu0 %v627
    %v2249 = vpop.f32.mrf.mxu0
    %v2250 = vadd.f32 %v2201, %v2249
    %v2251 = vpop.f32.mrf.mxu0
    %v2252 = vadd.f32 %v2203, %v2251
    %2253 = vmatmul.bf16.gmra.mxu0 %v634
    %v2254 = vpop.f32.mrf.mxu0
    %v2255 = vadd.f32 %v2206, %v2254
    %v2256 = vpop.f32.mrf.mxu0
    %v2257 = vadd.f32 %v2208, %v2256
    %2258 = vmatmul.bf16.gmra.mxu0 %v641
    %v2259 = vpop.f32.mrf.mxu0
    %v2260 = vadd.f32 %v2211, %v2259
    %v2261 = vpop.f32.mrf.mxu0
    %v2262 = vadd.f32 %v2213, %v2261
    %2263 = vdwg.mxu0
    %2264 = vmatpush.bf16.msra.mxu0 %v1468
    %2265 = vmatpush.bf16.msra.mxu0 %v1464
    %2266 = vmatpush.bf16.msra.mxu0 %v1460
    %2267 = vmatpush.bf16.msra.mxu0 %v1456
    %2268 = vmatpush.bf16.msra.mxu0 %v1452
    %2269 = vmatpush.bf16.msra.mxu0 %v1448
    %2270 = vmatpush.bf16.msra.mxu0 %v1444
    %2271 = vmatpush.bf16.msra.mxu0 %v1440
    %2272 = vmatmul.bf16.gmra.mxu0 %v593
    %v2273 = vpop.f32.mrf.mxu0
    %v2274 = vadd.f32 %v2225, %v2273
    %v2275 = vpop.f32.mrf.mxu0
    %v2276 = vadd.f32 %v2227, %v2275
    %2277 = vmatmul.bf16.gmra.mxu0 %v600
    %v2278 = vpop.f32.mrf.mxu0
    %v2279 = vadd.f32 %v2230, %v2278
    %v2280 = vpop.f32.mrf.mxu0
    %v2281 = vadd.f32 %v2232, %v2280
    %2282 = vmatmul.bf16.gmra.mxu0 %v607
    %v2283 = vpop.f32.mrf.mxu0
    %v2284 = vadd.f32 %v2235, %v2283
    %v2285 = vpop.f32.mrf.mxu0
    %v2286 = vadd.f32 %v2237, %v2285
    %2287 = vmatmul.bf16.gmra.mxu0 %v614
    %v2288 = vpop.f32.mrf.mxu0
    %v2289 = vadd.f32 %v2240, %v2288
    %v2290 = vpop.f32.mrf.mxu0
    %v2291 = vadd.f32 %v2242, %v2290
    %2292 = vmatmul.bf16.gmra.mxu0 %v621
    %v2293 = vpop.f32.mrf.mxu0
    %v2294 = vadd.f32 %v2245, %v2293
    %v2295 = vpop.f32.mrf.mxu0
    %v2296 = vadd.f32 %v2247, %v2295
    %2297 = vmatmul.bf16.gmra.mxu0 %v628
    %v2298 = vpop.f32.mrf.mxu0
    %v2299 = vadd.f32 %v2250, %v2298
    %v2300 = vpop.f32.mrf.mxu0
    %v2301 = vadd.f32 %v2252, %v2300
    %2302 = vmatmul.bf16.gmra.mxu0 %v635
    %v2303 = vpop.f32.mrf.mxu0
    %v2304 = vadd.f32 %v2255, %v2303
    %v2305 = vpop.f32.mrf.mxu0
    %v2306 = vadd.f32 %v2257, %v2305
    %2307 = vmatmul.bf16.gmra.mxu0 %v642
    %v2308 = vpop.f32.mrf.mxu0
    %v2309 = vadd.f32 %v2260, %v2308
    %v2310 = vpop.f32.mrf.mxu0
    %v2311 = vadd.f32 %v2262, %v2310
    %2312 = vdwg.mxu0
    %2313 = vmatpush.bf16.msra.mxu0 %v1500
    %2314 = vmatpush.bf16.msra.mxu0 %v1496
    %2315 = vmatpush.bf16.msra.mxu0 %v1492
    %2316 = vmatpush.bf16.msra.mxu0 %v1488
    %2317 = vmatpush.bf16.msra.mxu0 %v1484
    %2318 = vmatpush.bf16.msra.mxu0 %v1480
    %2319 = vmatpush.bf16.msra.mxu0 %v1476
    %2320 = vmatpush.bf16.msra.mxu0 %v1472
    %2321 = vmatmul.bf16.gmra.mxu0 %v594
    %v2322 = vpop.f32.mrf.mxu0
    %v2323 = vadd.f32 %v2274, %v2322
    %v2324 = vpop.f32.mrf.mxu0
    %v2325 = vadd.f32 %v2276, %v2324
    %2326 = vmatmul.bf16.gmra.mxu0 %v601
    %v2327 = vpop.f32.mrf.mxu0
    %v2328 = vadd.f32 %v2279, %v2327
    %v2329 = vpop.f32.mrf.mxu0
    %v2330 = vadd.f32 %v2281, %v2329
    %2331 = vmatmul.bf16.gmra.mxu0 %v608
    %v2332 = vpop.f32.mrf.mxu0
    %v2333 = vadd.f32 %v2284, %v2332
    %v2334 = vpop.f32.mrf.mxu0
    %v2335 = vadd.f32 %v2286, %v2334
    %2336 = vmatmul.bf16.gmra.mxu0 %v615
    %v2337 = vpop.f32.mrf.mxu0
    %v2338 = vadd.f32 %v2289, %v2337
    %v2339 = vpop.f32.mrf.mxu0
    %v2340 = vadd.f32 %v2291, %v2339
    %2341 = vmatmul.bf16.gmra.mxu0 %v622
    %v2342 = vpop.f32.mrf.mxu0
    %v2343 = vadd.f32 %v2294, %v2342
    %v2344 = vpop.f32.mrf.mxu0
    %v2345 = vadd.f32 %v2296, %v2344
    %2346 = vmatmul.bf16.gmra.mxu0 %v629
    %v2347 = vpop.f32.mrf.mxu0
    %v2348 = vadd.f32 %v2299, %v2347
    %v2349 = vpop.f32.mrf.mxu0
    %v2350 = vadd.f32 %v2301, %v2349
    %2351 = vmatmul.bf16.gmra.mxu0 %v636
    %v2352 = vpop.f32.mrf.mxu0
    %v2353 = vadd.f32 %v2304, %v2352
    %v2354 = vpop.f32.mrf.mxu0
    %v2355 = vadd.f32 %v2306, %v2354
    %2356 = vmatmul.bf16.gmra.mxu0 %v643
    %v2357 = vpop.f32.mrf.mxu0
    %v2358 = vadd.f32 %v2309, %v2357
    %v2359 = vpop.f32.mrf.mxu0
    %v2360 = vadd.f32 %v2311, %v2359
    %2361 = vdwg.mxu0
    %2362 = vmatpush.bf16.msra.mxu0 %v1532
    %2363 = vmatpush.bf16.msra.mxu0 %v1528
    %2364 = vmatpush.bf16.msra.mxu0 %v1524
    %2365 = vmatpush.bf16.msra.mxu0 %v1520
    %2366 = vmatpush.bf16.msra.mxu0 %v1516
    %2367 = vmatpush.bf16.msra.mxu0 %v1512
    %2368 = vmatpush.bf16.msra.mxu0 %v1508
    %2369 = vmatpush.bf16.msra.mxu0 %v1504
    %2370 = vmatmul.bf16.gmra.mxu0 %v595
    %v2371 = vpop.f32.mrf.mxu0
    %v2372 = vadd.f32 %v2323, %v2371
    %v2373 = vpop.f32.mrf.mxu0
    %v2374 = vadd.f32 %v2325, %v2373
    %2375 = vmatmul.bf16.gmra.mxu0 %v602
    %v2376 = vpop.f32.mrf.mxu0
    %v2377 = vadd.f32 %v2328, %v2376
    %v2378 = vpop.f32.mrf.mxu0
    %v2379 = vadd.f32 %v2330, %v2378
    %2380 = vmatmul.bf16.gmra.mxu0 %v609
    %v2381 = vpop.f32.mrf.mxu0
    %v2382 = vadd.f32 %v2333, %v2381
    %v2383 = vpop.f32.mrf.mxu0
    %v2384 = vadd.f32 %v2335, %v2383
    %2385 = vmatmul.bf16.gmra.mxu0 %v616
    %v2386 = vpop.f32.mrf.mxu0
    %v2387 = vadd.f32 %v2338, %v2386
    %v2388 = vpop.f32.mrf.mxu0
    %v2389 = vadd.f32 %v2340, %v2388
    %2390 = vmatmul.bf16.gmra.mxu0 %v623
    %v2391 = vpop.f32.mrf.mxu0
    %v2392 = vadd.f32 %v2343, %v2391
    %v2393 = vpop.f32.mrf.mxu0
    %v2394 = vadd.f32 %v2345, %v2393
    %2395 = vmatmul.bf16.gmra.mxu0 %v630
    %v2396 = vpop.f32.mrf.mxu0
    %v2397 = vadd.f32 %v2348, %v2396
    %v2398 = vpop.f32.mrf.mxu0
    %v2399 = vadd.f32 %v2350, %v2398
    %2400 = vmatmul.bf16.gmra.mxu0 %v637
    %v2401 = vpop.f32.mrf.mxu0
    %v2402 = vadd.f32 %v2353, %v2401
    %v2403 = vpop.f32.mrf.mxu0
    %v2404 = vadd.f32 %v2355, %v2403
    %2405 = vmatmul.bf16.gmra.mxu0 %v644
    %v2406 = vpop.f32.mrf.mxu0
    %v2407 = vadd.f32 %v2358, %v2406
    %v2408 = vpop.f32.mrf.mxu0
    %v2409 = vadd.f32 %v2360, %v2408
    %2410 = vdwg.mxu0
    %2411 = vmatpush.bf16.msra.mxu0 %v1564
    %2412 = vmatpush.bf16.msra.mxu0 %v1560
    %2413 = vmatpush.bf16.msra.mxu0 %v1556
    %2414 = vmatpush.bf16.msra.mxu0 %v1552
    %2415 = vmatpush.bf16.msra.mxu0 %v1548
    %2416 = vmatpush.bf16.msra.mxu0 %v1544
    %2417 = vmatpush.bf16.msra.mxu0 %v1540
    %2418 = vmatpush.bf16.msra.mxu0 %v1536
    %2419 = vmatmul.bf16.gmra.mxu0 %v596
    %v2420 = vpop.f32.mrf.mxu0
    %v2421 = vadd.f32 %v2372, %v2420
    %v2422 = vpop.f32.mrf.mxu0
    %v2423 = vadd.f32 %v2374, %v2422
    %2424 = vmatmul.bf16.gmra.mxu0 %v603
    %v2425 = vpop.f32.mrf.mxu0
    %v2426 = vadd.f32 %v2377, %v2425
    %v2427 = vpop.f32.mrf.mxu0
    %v2428 = vadd.f32 %v2379, %v2427
    %2429 = vmatmul.bf16.gmra.mxu0 %v610
    %v2430 = vpop.f32.mrf.mxu0
    %v2431 = vadd.f32 %v2382, %v2430
    %v2432 = vpop.f32.mrf.mxu0
    %v2433 = vadd.f32 %v2384, %v2432
    %2434 = vmatmul.bf16.gmra.mxu0 %v617
    %v2435 = vpop.f32.mrf.mxu0
    %v2436 = vadd.f32 %v2387, %v2435
    %v2437 = vpop.f32.mrf.mxu0
    %v2438 = vadd.f32 %v2389, %v2437
    %2439 = vmatmul.bf16.gmra.mxu0 %v624
    %v2440 = vpop.f32.mrf.mxu0
    %v2441 = vadd.f32 %v2392, %v2440
    %v2442 = vpop.f32.mrf.mxu0
    %v2443 = vadd.f32 %v2394, %v2442
    %2444 = vmatmul.bf16.gmra.mxu0 %v631
    %v2445 = vpop.f32.mrf.mxu0
    %v2446 = vadd.f32 %v2397, %v2445
    %v2447 = vpop.f32.mrf.mxu0
    %v2448 = vadd.f32 %v2399, %v2447
    %2449 = vmatmul.bf16.gmra.mxu0 %v638
    %v2450 = vpop.f32.mrf.mxu0
    %v2451 = vadd.f32 %v2402, %v2450
    %v2452 = vpop.f32.mrf.mxu0
    %v2453 = vadd.f32 %v2404, %v2452
    %2454 = vmatmul.bf16.gmra.mxu0 %v645
    %v2455 = vpop.f32.mrf.mxu0
    %v2456 = vadd.f32 %v2407, %v2455
    %v2457 = vpop.f32.mrf.mxu0
    %v2458 = vadd.f32 %v2409, %v2457
    %2459 = vdwg.mxu0
    %2460 = vmatpush.bf16.msra.mxu0 %v1596
    %2461 = vmatpush.bf16.msra.mxu0 %v1592
    %2462 = vmatpush.bf16.msra.mxu0 %v1588
    %2463 = vmatpush.bf16.msra.mxu0 %v1584
    %2464 = vmatpush.bf16.msra.mxu0 %v1580
    %2465 = vmatpush.bf16.msra.mxu0 %v1576
    %2466 = vmatpush.bf16.msra.mxu0 %v1572
    %2467 = vmatpush.bf16.msra.mxu0 %v1568
    %2468 = vmatmul.bf16.gmra.mxu0 %v597
    %v2469 = vpop.f32.mrf.mxu0
    %v2470 = vadd.f32 %v2421, %v2469
    %v2471 = vpop.f32.mrf.mxu0
    %v2472 = vadd.f32 %v2423, %v2471
    %2473 = vmatmul.bf16.gmra.mxu0 %v604
    %v2474 = vpop.f32.mrf.mxu0
    %v2475 = vadd.f32 %v2426, %v2474
    %v2476 = vpop.f32.mrf.mxu0
    %v2477 = vadd.f32 %v2428, %v2476
    %2478 = vmatmul.bf16.gmra.mxu0 %v611
    %v2479 = vpop.f32.mrf.mxu0
    %v2480 = vadd.f32 %v2431, %v2479
    %v2481 = vpop.f32.mrf.mxu0
    %v2482 = vadd.f32 %v2433, %v2481
    %2483 = vmatmul.bf16.gmra.mxu0 %v618
    %v2484 = vpop.f32.mrf.mxu0
    %v2485 = vadd.f32 %v2436, %v2484
    %v2486 = vpop.f32.mrf.mxu0
    %v2487 = vadd.f32 %v2438, %v2486
    %2488 = vmatmul.bf16.gmra.mxu0 %v625
    %v2489 = vpop.f32.mrf.mxu0
    %v2490 = vadd.f32 %v2441, %v2489
    %v2491 = vpop.f32.mrf.mxu0
    %v2492 = vadd.f32 %v2443, %v2491
    %2493 = vmatmul.bf16.gmra.mxu0 %v632
    %v2494 = vpop.f32.mrf.mxu0
    %v2495 = vadd.f32 %v2446, %v2494
    %v2496 = vpop.f32.mrf.mxu0
    %v2497 = vadd.f32 %v2448, %v2496
    %2498 = vmatmul.bf16.gmra.mxu0 %v639
    %v2499 = vpop.f32.mrf.mxu0
    %v2500 = vadd.f32 %v2451, %v2499
    %v2501 = vpop.f32.mrf.mxu0
    %v2502 = vadd.f32 %v2453, %v2501
    %2503 = vmatmul.bf16.gmra.mxu0 %v646
    %v2504 = vpop.f32.mrf.mxu0
    %v2505 = vadd.f32 %v2456, %v2504
    %v2506 = vpop.f32.mrf.mxu0
    %v2507 = vadd.f32 %v2458, %v2506
    %2508 = vdwg.mxu0
    %2509 = vmatpush.bf16.msra.mxu0 %v1405
    %2510 = vmatpush.bf16.msra.mxu0 %v1401
    %2511 = vmatpush.bf16.msra.mxu0 %v1397
    %2512 = vmatpush.bf16.msra.mxu0 %v1393
    %2513 = vmatpush.bf16.msra.mxu0 %v1389
    %2514 = vmatpush.bf16.msra.mxu0 %v1385
    %2515 = vmatpush.bf16.msra.mxu0 %v1381
    %2516 = vmatpush.bf16.msra.mxu0 %v1377
    %2517 = vmatmul.bf16.gmra.mxu0 %v591
    %v2518 = vpop.f32.mrf.mxu0
    %v2519 = vadd.f32 %v409, %v2518
    %v2520 = vpop.f32.mrf.mxu0
    %v2521 = vadd.f32 %v409, %v2520
    %2522 = vmatmul.bf16.gmra.mxu0 %v598
    %v2523 = vpop.f32.mrf.mxu0
    %v2524 = vadd.f32 %v409, %v2523
    %v2525 = vpop.f32.mrf.mxu0
    %v2526 = vadd.f32 %v409, %v2525
    %2527 = vmatmul.bf16.gmra.mxu0 %v605
    %v2528 = vpop.f32.mrf.mxu0
    %v2529 = vadd.f32 %v409, %v2528
    %v2530 = vpop.f32.mrf.mxu0
    %v2531 = vadd.f32 %v409, %v2530
    %2532 = vmatmul.bf16.gmra.mxu0 %v612
    %v2533 = vpop.f32.mrf.mxu0
    %v2534 = vadd.f32 %v409, %v2533
    %v2535 = vpop.f32.mrf.mxu0
    %v2536 = vadd.f32 %v409, %v2535
    %2537 = vmatmul.bf16.gmra.mxu0 %v619
    %v2538 = vpop.f32.mrf.mxu0
    %v2539 = vadd.f32 %v409, %v2538
    %v2540 = vpop.f32.mrf.mxu0
    %v2541 = vadd.f32 %v409, %v2540
    %2542 = vmatmul.bf16.gmra.mxu0 %v626
    %v2543 = vpop.f32.mrf.mxu0
    %v2544 = vadd.f32 %v409, %v2543
    %v2545 = vpop.f32.mrf.mxu0
    %v2546 = vadd.f32 %v409, %v2545
    %2547 = vmatmul.bf16.gmra.mxu0 %v633
    %v2548 = vpop.f32.mrf.mxu0
    %v2549 = vadd.f32 %v409, %v2548
    %v2550 = vpop.f32.mrf.mxu0
    %v2551 = vadd.f32 %v409, %v2550
    %2552 = vmatmul.bf16.gmra.mxu0 %v640
    %v2553 = vpop.f32.mrf.mxu0
    %v2554 = vadd.f32 %v409, %v2553
    %v2555 = vpop.f32.mrf.mxu0
    %v2556 = vadd.f32 %v409, %v2555
    %2557 = vdwg.mxu0
    %2558 = vmatpush.bf16.msra.mxu0 %v1437
    %2559 = vmatpush.bf16.msra.mxu0 %v1433
    %2560 = vmatpush.bf16.msra.mxu0 %v1429
    %2561 = vmatpush.bf16.msra.mxu0 %v1425
    %2562 = vmatpush.bf16.msra.mxu0 %v1421
    %2563 = vmatpush.bf16.msra.mxu0 %v1417
    %2564 = vmatpush.bf16.msra.mxu0 %v1413
    %2565 = vmatpush.bf16.msra.mxu0 %v1409
    %2566 = vmatmul.bf16.gmra.mxu0 %v592
    %v2567 = vpop.f32.mrf.mxu0
    %v2568 = vadd.f32 %v2519, %v2567
    %v2569 = vpop.f32.mrf.mxu0
    %v2570 = vadd.f32 %v2521, %v2569
    %2571 = vmatmul.bf16.gmra.mxu0 %v599
    %v2572 = vpop.f32.mrf.mxu0
    %v2573 = vadd.f32 %v2524, %v2572
    %v2574 = vpop.f32.mrf.mxu0
    %v2575 = vadd.f32 %v2526, %v2574
    %2576 = vmatmul.bf16.gmra.mxu0 %v606
    %v2577 = vpop.f32.mrf.mxu0
    %v2578 = vadd.f32 %v2529, %v2577
    %v2579 = vpop.f32.mrf.mxu0
    %v2580 = vadd.f32 %v2531, %v2579
    %2581 = vmatmul.bf16.gmra.mxu0 %v613
    %v2582 = vpop.f32.mrf.mxu0
    %v2583 = vadd.f32 %v2534, %v2582
    %v2584 = vpop.f32.mrf.mxu0
    %v2585 = vadd.f32 %v2536, %v2584
    %2586 = vmatmul.bf16.gmra.mxu0 %v620
    %v2587 = vpop.f32.mrf.mxu0
    %v2588 = vadd.f32 %v2539, %v2587
    %v2589 = vpop.f32.mrf.mxu0
    %v2590 = vadd.f32 %v2541, %v2589
    %2591 = vmatmul.bf16.gmra.mxu0 %v627
    %v2592 = vpop.f32.mrf.mxu0
    %v2593 = vadd.f32 %v2544, %v2592
    %v2594 = vpop.f32.mrf.mxu0
    %v2595 = vadd.f32 %v2546, %v2594
    %2596 = vmatmul.bf16.gmra.mxu0 %v634
    %v2597 = vpop.f32.mrf.mxu0
    %v2598 = vadd.f32 %v2549, %v2597
    %v2599 = vpop.f32.mrf.mxu0
    %v2600 = vadd.f32 %v2551, %v2599
    %2601 = vmatmul.bf16.gmra.mxu0 %v641
    %v2602 = vpop.f32.mrf.mxu0
    %v2603 = vadd.f32 %v2554, %v2602
    %v2604 = vpop.f32.mrf.mxu0
    %v2605 = vadd.f32 %v2556, %v2604
    %2606 = vdwg.mxu0
    %2607 = vmatpush.bf16.msra.mxu0 %v1469
    %2608 = vmatpush.bf16.msra.mxu0 %v1465
    %2609 = vmatpush.bf16.msra.mxu0 %v1461
    %2610 = vmatpush.bf16.msra.mxu0 %v1457
    %2611 = vmatpush.bf16.msra.mxu0 %v1453
    %2612 = vmatpush.bf16.msra.mxu0 %v1449
    %2613 = vmatpush.bf16.msra.mxu0 %v1445
    %2614 = vmatpush.bf16.msra.mxu0 %v1441
    %2615 = vmatmul.bf16.gmra.mxu0 %v593
    %v2616 = vpop.f32.mrf.mxu0
    %v2617 = vadd.f32 %v2568, %v2616
    %v2618 = vpop.f32.mrf.mxu0
    %v2619 = vadd.f32 %v2570, %v2618
    %2620 = vmatmul.bf16.gmra.mxu0 %v600
    %v2621 = vpop.f32.mrf.mxu0
    %v2622 = vadd.f32 %v2573, %v2621
    %v2623 = vpop.f32.mrf.mxu0
    %v2624 = vadd.f32 %v2575, %v2623
    %2625 = vmatmul.bf16.gmra.mxu0 %v607
    %v2626 = vpop.f32.mrf.mxu0
    %v2627 = vadd.f32 %v2578, %v2626
    %v2628 = vpop.f32.mrf.mxu0
    %v2629 = vadd.f32 %v2580, %v2628
    %2630 = vmatmul.bf16.gmra.mxu0 %v614
    %v2631 = vpop.f32.mrf.mxu0
    %v2632 = vadd.f32 %v2583, %v2631
    %v2633 = vpop.f32.mrf.mxu0
    %v2634 = vadd.f32 %v2585, %v2633
    %2635 = vmatmul.bf16.gmra.mxu0 %v621
    %v2636 = vpop.f32.mrf.mxu0
    %v2637 = vadd.f32 %v2588, %v2636
    %v2638 = vpop.f32.mrf.mxu0
    %v2639 = vadd.f32 %v2590, %v2638
    %2640 = vmatmul.bf16.gmra.mxu0 %v628
    %v2641 = vpop.f32.mrf.mxu0
    %v2642 = vadd.f32 %v2593, %v2641
    %v2643 = vpop.f32.mrf.mxu0
    %v2644 = vadd.f32 %v2595, %v2643
    %2645 = vmatmul.bf16.gmra.mxu0 %v635
    %v2646 = vpop.f32.mrf.mxu0
    %v2647 = vadd.f32 %v2598, %v2646
    %v2648 = vpop.f32.mrf.mxu0
    %v2649 = vadd.f32 %v2600, %v2648
    %2650 = vmatmul.bf16.gmra.mxu0 %v642
    %v2651 = vpop.f32.mrf.mxu0
    %v2652 = vadd.f32 %v2603, %v2651
    %v2653 = vpop.f32.mrf.mxu0
    %v2654 = vadd.f32 %v2605, %v2653
    %2655 = vdwg.mxu0
    %2656 = vmatpush.bf16.msra.mxu0 %v1501
    %2657 = vmatpush.bf16.msra.mxu0 %v1497
    %2658 = vmatpush.bf16.msra.mxu0 %v1493
    %2659 = vmatpush.bf16.msra.mxu0 %v1489
    %2660 = vmatpush.bf16.msra.mxu0 %v1485
    %2661 = vmatpush.bf16.msra.mxu0 %v1481
    %2662 = vmatpush.bf16.msra.mxu0 %v1477
    %2663 = vmatpush.bf16.msra.mxu0 %v1473
    %2664 = vmatmul.bf16.gmra.mxu0 %v594
    %v2665 = vpop.f32.mrf.mxu0
    %v2666 = vadd.f32 %v2617, %v2665
    %v2667 = vpop.f32.mrf.mxu0
    %v2668 = vadd.f32 %v2619, %v2667
    %2669 = vmatmul.bf16.gmra.mxu0 %v601
    %v2670 = vpop.f32.mrf.mxu0
    %v2671 = vadd.f32 %v2622, %v2670
    %v2672 = vpop.f32.mrf.mxu0
    %v2673 = vadd.f32 %v2624, %v2672
    %2674 = vmatmul.bf16.gmra.mxu0 %v608
    %v2675 = vpop.f32.mrf.mxu0
    %v2676 = vadd.f32 %v2627, %v2675
    %v2677 = vpop.f32.mrf.mxu0
    %v2678 = vadd.f32 %v2629, %v2677
    %2679 = vmatmul.bf16.gmra.mxu0 %v615
    %v2680 = vpop.f32.mrf.mxu0
    %v2681 = vadd.f32 %v2632, %v2680
    %v2682 = vpop.f32.mrf.mxu0
    %v2683 = vadd.f32 %v2634, %v2682
    %2684 = vmatmul.bf16.gmra.mxu0 %v622
    %v2685 = vpop.f32.mrf.mxu0
    %v2686 = vadd.f32 %v2637, %v2685
    %v2687 = vpop.f32.mrf.mxu0
    %v2688 = vadd.f32 %v2639, %v2687
    %2689 = vmatmul.bf16.gmra.mxu0 %v629
    %v2690 = vpop.f32.mrf.mxu0
    %v2691 = vadd.f32 %v2642, %v2690
    %v2692 = vpop.f32.mrf.mxu0
    %v2693 = vadd.f32 %v2644, %v2692
    %2694 = vmatmul.bf16.gmra.mxu0 %v636
    %v2695 = vpop.f32.mrf.mxu0
    %v2696 = vadd.f32 %v2647, %v2695
    %v2697 = vpop.f32.mrf.mxu0
    %v2698 = vadd.f32 %v2649, %v2697
    %2699 = vmatmul.bf16.gmra.mxu0 %v643
    %v2700 = vpop.f32.mrf.mxu0
    %v2701 = vadd.f32 %v2652, %v2700
    %v2702 = vpop.f32.mrf.mxu0
    %v2703 = vadd.f32 %v2654, %v2702
    %2704 = vdwg.mxu0
    %2705 = vmatpush.bf16.msra.mxu0 %v1533
    %2706 = vmatpush.bf16.msra.mxu0 %v1529
    %2707 = vmatpush.bf16.msra.mxu0 %v1525
    %2708 = vmatpush.bf16.msra.mxu0 %v1521
    %2709 = vmatpush.bf16.msra.mxu0 %v1517
    %2710 = vmatpush.bf16.msra.mxu0 %v1513
    %2711 = vmatpush.bf16.msra.mxu0 %v1509
    %2712 = vmatpush.bf16.msra.mxu0 %v1505
    %2713 = vmatmul.bf16.gmra.mxu0 %v595
    %v2714 = vpop.f32.mrf.mxu0
    %v2715 = vadd.f32 %v2666, %v2714
    %v2716 = vpop.f32.mrf.mxu0
    %v2717 = vadd.f32 %v2668, %v2716
    %2718 = vmatmul.bf16.gmra.mxu0 %v602
    %v2719 = vpop.f32.mrf.mxu0
    %v2720 = vadd.f32 %v2671, %v2719
    %v2721 = vpop.f32.mrf.mxu0
    %v2722 = vadd.f32 %v2673, %v2721
    %2723 = vmatmul.bf16.gmra.mxu0 %v609
    %v2724 = vpop.f32.mrf.mxu0
    %v2725 = vadd.f32 %v2676, %v2724
    %v2726 = vpop.f32.mrf.mxu0
    %v2727 = vadd.f32 %v2678, %v2726
    %2728 = vmatmul.bf16.gmra.mxu0 %v616
    %v2729 = vpop.f32.mrf.mxu0
    %v2730 = vadd.f32 %v2681, %v2729
    %v2731 = vpop.f32.mrf.mxu0
    %v2732 = vadd.f32 %v2683, %v2731
    %2733 = vmatmul.bf16.gmra.mxu0 %v623
    %v2734 = vpop.f32.mrf.mxu0
    %v2735 = vadd.f32 %v2686, %v2734
    %v2736 = vpop.f32.mrf.mxu0
    %v2737 = vadd.f32 %v2688, %v2736
    %2738 = vmatmul.bf16.gmra.mxu0 %v630
    %v2739 = vpop.f32.mrf.mxu0
    %v2740 = vadd.f32 %v2691, %v2739
    %v2741 = vpop.f32.mrf.mxu0
    %v2742 = vadd.f32 %v2693, %v2741
    %2743 = vmatmul.bf16.gmra.mxu0 %v637
    %v2744 = vpop.f32.mrf.mxu0
    %v2745 = vadd.f32 %v2696, %v2744
    %v2746 = vpop.f32.mrf.mxu0
    %v2747 = vadd.f32 %v2698, %v2746
    %2748 = vmatmul.bf16.gmra.mxu0 %v644
    %v2749 = vpop.f32.mrf.mxu0
    %v2750 = vadd.f32 %v2701, %v2749
    %v2751 = vpop.f32.mrf.mxu0
    %v2752 = vadd.f32 %v2703, %v2751
    %2753 = vdwg.mxu0
    %2754 = vmatpush.bf16.msra.mxu0 %v1565
    %2755 = vmatpush.bf16.msra.mxu0 %v1561
    %2756 = vmatpush.bf16.msra.mxu0 %v1557
    %2757 = vmatpush.bf16.msra.mxu0 %v1553
    %2758 = vmatpush.bf16.msra.mxu0 %v1549
    %2759 = vmatpush.bf16.msra.mxu0 %v1545
    %2760 = vmatpush.bf16.msra.mxu0 %v1541
    %2761 = vmatpush.bf16.msra.mxu0 %v1537
    %2762 = vmatmul.bf16.gmra.mxu0 %v596
    %v2763 = vpop.f32.mrf.mxu0
    %v2764 = vadd.f32 %v2715, %v2763
    %v2765 = vpop.f32.mrf.mxu0
    %v2766 = vadd.f32 %v2717, %v2765
    %2767 = vmatmul.bf16.gmra.mxu0 %v603
    %v2768 = vpop.f32.mrf.mxu0
    %v2769 = vadd.f32 %v2720, %v2768
    %v2770 = vpop.f32.mrf.mxu0
    %v2771 = vadd.f32 %v2722, %v2770
    %2772 = vmatmul.bf16.gmra.mxu0 %v610
    %v2773 = vpop.f32.mrf.mxu0
    %v2774 = vadd.f32 %v2725, %v2773
    %v2775 = vpop.f32.mrf.mxu0
    %v2776 = vadd.f32 %v2727, %v2775
    %2777 = vmatmul.bf16.gmra.mxu0 %v617
    %v2778 = vpop.f32.mrf.mxu0
    %v2779 = vadd.f32 %v2730, %v2778
    %v2780 = vpop.f32.mrf.mxu0
    %v2781 = vadd.f32 %v2732, %v2780
    %2782 = vmatmul.bf16.gmra.mxu0 %v624
    %v2783 = vpop.f32.mrf.mxu0
    %v2784 = vadd.f32 %v2735, %v2783
    %v2785 = vpop.f32.mrf.mxu0
    %v2786 = vadd.f32 %v2737, %v2785
    %2787 = vmatmul.bf16.gmra.mxu0 %v631
    %v2788 = vpop.f32.mrf.mxu0
    %v2789 = vadd.f32 %v2740, %v2788
    %v2790 = vpop.f32.mrf.mxu0
    %v2791 = vadd.f32 %v2742, %v2790
    %2792 = vmatmul.bf16.gmra.mxu0 %v638
    %v2793 = vpop.f32.mrf.mxu0
    %v2794 = vadd.f32 %v2745, %v2793
    %v2795 = vpop.f32.mrf.mxu0
    %v2796 = vadd.f32 %v2747, %v2795
    %2797 = vmatmul.bf16.gmra.mxu0 %v645
    %v2798 = vpop.f32.mrf.mxu0
    %v2799 = vadd.f32 %v2750, %v2798
    %v2800 = vpop.f32.mrf.mxu0
    %v2801 = vadd.f32 %v2752, %v2800
    %2802 = vdwg.mxu0
    %2803 = vmatpush.bf16.msra.mxu0 %v1597
    %2804 = vmatpush.bf16.msra.mxu0 %v1593
    %2805 = vmatpush.bf16.msra.mxu0 %v1589
    %2806 = vmatpush.bf16.msra.mxu0 %v1585
    %2807 = vmatpush.bf16.msra.mxu0 %v1581
    %2808 = vmatpush.bf16.msra.mxu0 %v1577
    %2809 = vmatpush.bf16.msra.mxu0 %v1573
    %2810 = vmatpush.bf16.msra.mxu0 %v1569
    %2811 = vmatmul.bf16.gmra.mxu0 %v597
    %v2812 = vpop.f32.mrf.mxu0
    %v2813 = vadd.f32 %v2764, %v2812
    %v2814 = vpop.f32.mrf.mxu0
    %v2815 = vadd.f32 %v2766, %v2814
    %2816 = vmatmul.bf16.gmra.mxu0 %v604
    %v2817 = vpop.f32.mrf.mxu0
    %v2818 = vadd.f32 %v2769, %v2817
    %v2819 = vpop.f32.mrf.mxu0
    %v2820 = vadd.f32 %v2771, %v2819
    %2821 = vmatmul.bf16.gmra.mxu0 %v611
    %v2822 = vpop.f32.mrf.mxu0
    %v2823 = vadd.f32 %v2774, %v2822
    %v2824 = vpop.f32.mrf.mxu0
    %v2825 = vadd.f32 %v2776, %v2824
    %2826 = vmatmul.bf16.gmra.mxu0 %v618
    %v2827 = vpop.f32.mrf.mxu0
    %v2828 = vadd.f32 %v2779, %v2827
    %v2829 = vpop.f32.mrf.mxu0
    %v2830 = vadd.f32 %v2781, %v2829
    %2831 = vmatmul.bf16.gmra.mxu0 %v625
    %v2832 = vpop.f32.mrf.mxu0
    %v2833 = vadd.f32 %v2784, %v2832
    %v2834 = vpop.f32.mrf.mxu0
    %v2835 = vadd.f32 %v2786, %v2834
    %2836 = vmatmul.bf16.gmra.mxu0 %v632
    %v2837 = vpop.f32.mrf.mxu0
    %v2838 = vadd.f32 %v2789, %v2837
    %v2839 = vpop.f32.mrf.mxu0
    %v2840 = vadd.f32 %v2791, %v2839
    %2841 = vmatmul.bf16.gmra.mxu0 %v639
    %v2842 = vpop.f32.mrf.mxu0
    %v2843 = vadd.f32 %v2794, %v2842
    %v2844 = vpop.f32.mrf.mxu0
    %v2845 = vadd.f32 %v2796, %v2844
    %2846 = vmatmul.bf16.gmra.mxu0 %v646
    %v2847 = vpop.f32.mrf.mxu0
    %v2848 = vadd.f32 %v2799, %v2847
    %v2849 = vpop.f32.mrf.mxu0
    %v2850 = vadd.f32 %v2801, %v2849
    %2851 = vdwg.mxu0
    %2852 = vmatpush.bf16.msra.mxu0 %v1406
    %2853 = vmatpush.bf16.msra.mxu0 %v1402
    %2854 = vmatpush.bf16.msra.mxu0 %v1398
    %2855 = vmatpush.bf16.msra.mxu0 %v1394
    %2856 = vmatpush.bf16.msra.mxu0 %v1390
    %2857 = vmatpush.bf16.msra.mxu0 %v1386
    %2858 = vmatpush.bf16.msra.mxu0 %v1382
    %2859 = vmatpush.bf16.msra.mxu0 %v1378
    %2860 = vmatmul.bf16.gmra.mxu0 %v591
    %v2861 = vpop.f32.mrf.mxu0
    %v2862 = vadd.f32 %v410, %v2861
    %v2863 = vpop.f32.mrf.mxu0
    %v2864 = vadd.f32 %v410, %v2863
    %2865 = vmatmul.bf16.gmra.mxu0 %v598
    %v2866 = vpop.f32.mrf.mxu0
    %v2867 = vadd.f32 %v410, %v2866
    %v2868 = vpop.f32.mrf.mxu0
    %v2869 = vadd.f32 %v410, %v2868
    %2870 = vmatmul.bf16.gmra.mxu0 %v605
    %v2871 = vpop.f32.mrf.mxu0
    %v2872 = vadd.f32 %v410, %v2871
    %v2873 = vpop.f32.mrf.mxu0
    %v2874 = vadd.f32 %v410, %v2873
    %2875 = vmatmul.bf16.gmra.mxu0 %v612
    %v2876 = vpop.f32.mrf.mxu0
    %v2877 = vadd.f32 %v410, %v2876
    %v2878 = vpop.f32.mrf.mxu0
    %v2879 = vadd.f32 %v410, %v2878
    %2880 = vmatmul.bf16.gmra.mxu0 %v619
    %v2881 = vpop.f32.mrf.mxu0
    %v2882 = vadd.f32 %v410, %v2881
    %v2883 = vpop.f32.mrf.mxu0
    %v2884 = vadd.f32 %v410, %v2883
    %2885 = vmatmul.bf16.gmra.mxu0 %v626
    %v2886 = vpop.f32.mrf.mxu0
    %v2887 = vadd.f32 %v410, %v2886
    %v2888 = vpop.f32.mrf.mxu0
    %v2889 = vadd.f32 %v410, %v2888
    %2890 = vmatmul.bf16.gmra.mxu0 %v633
    %v2891 = vpop.f32.mrf.mxu0
    %v2892 = vadd.f32 %v410, %v2891
    %v2893 = vpop.f32.mrf.mxu0
    %v2894 = vadd.f32 %v410, %v2893
    %2895 = vmatmul.bf16.gmra.mxu0 %v640
    %v2896 = vpop.f32.mrf.mxu0
    %v2897 = vadd.f32 %v410, %v2896
    %v2898 = vpop.f32.mrf.mxu0
    %v2899 = vadd.f32 %v410, %v2898
    %2900 = vdwg.mxu0
    %2901 = vmatpush.bf16.msra.mxu0 %v1438
    %2902 = vmatpush.bf16.msra.mxu0 %v1434
    %2903 = vmatpush.bf16.msra.mxu0 %v1430
    %2904 = vmatpush.bf16.msra.mxu0 %v1426
    %2905 = vmatpush.bf16.msra.mxu0 %v1422
    %2906 = vmatpush.bf16.msra.mxu0 %v1418
    %2907 = vmatpush.bf16.msra.mxu0 %v1414
    %2908 = vmatpush.bf16.msra.mxu0 %v1410
    %2909 = vmatmul.bf16.gmra.mxu0 %v592
    %v2910 = vpop.f32.mrf.mxu0
    %v2911 = vadd.f32 %v2862, %v2910
    %v2912 = vpop.f32.mrf.mxu0
    %v2913 = vadd.f32 %v2864, %v2912
    %2914 = vmatmul.bf16.gmra.mxu0 %v599
    %v2915 = vpop.f32.mrf.mxu0
    %v2916 = vadd.f32 %v2867, %v2915
    %v2917 = vpop.f32.mrf.mxu0
    %v2918 = vadd.f32 %v2869, %v2917
    %2919 = vmatmul.bf16.gmra.mxu0 %v606
    %v2920 = vpop.f32.mrf.mxu0
    %v2921 = vadd.f32 %v2872, %v2920
    %v2922 = vpop.f32.mrf.mxu0
    %v2923 = vadd.f32 %v2874, %v2922
    %2924 = vmatmul.bf16.gmra.mxu0 %v613
    %v2925 = vpop.f32.mrf.mxu0
    %v2926 = vadd.f32 %v2877, %v2925
    %v2927 = vpop.f32.mrf.mxu0
    %v2928 = vadd.f32 %v2879, %v2927
    %2929 = vmatmul.bf16.gmra.mxu0 %v620
    %v2930 = vpop.f32.mrf.mxu0
    %v2931 = vadd.f32 %v2882, %v2930
    %v2932 = vpop.f32.mrf.mxu0
    %v2933 = vadd.f32 %v2884, %v2932
    %2934 = vmatmul.bf16.gmra.mxu0 %v627
    %v2935 = vpop.f32.mrf.mxu0
    %v2936 = vadd.f32 %v2887, %v2935
    %v2937 = vpop.f32.mrf.mxu0
    %v2938 = vadd.f32 %v2889, %v2937
    %2939 = vmatmul.bf16.gmra.mxu0 %v634
    %v2940 = vpop.f32.mrf.mxu0
    %v2941 = vadd.f32 %v2892, %v2940
    %v2942 = vpop.f32.mrf.mxu0
    %v2943 = vadd.f32 %v2894, %v2942
    %2944 = vmatmul.bf16.gmra.mxu0 %v641
    %v2945 = vpop.f32.mrf.mxu0
    %v2946 = vadd.f32 %v2897, %v2945
    %v2947 = vpop.f32.mrf.mxu0
    %v2948 = vadd.f32 %v2899, %v2947
    %2949 = vdwg.mxu0
    %2950 = vmatpush.bf16.msra.mxu0 %v1470
    %2951 = vmatpush.bf16.msra.mxu0 %v1466
    %2952 = vmatpush.bf16.msra.mxu0 %v1462
    %2953 = vmatpush.bf16.msra.mxu0 %v1458
    %2954 = vmatpush.bf16.msra.mxu0 %v1454
    %2955 = vmatpush.bf16.msra.mxu0 %v1450
    %2956 = vmatpush.bf16.msra.mxu0 %v1446
    %2957 = vmatpush.bf16.msra.mxu0 %v1442
    %2958 = vmatmul.bf16.gmra.mxu0 %v593
    %v2959 = vpop.f32.mrf.mxu0
    %v2960 = vadd.f32 %v2911, %v2959
    %v2961 = vpop.f32.mrf.mxu0
    %v2962 = vadd.f32 %v2913, %v2961
    %2963 = vmatmul.bf16.gmra.mxu0 %v600
    %v2964 = vpop.f32.mrf.mxu0
    %v2965 = vadd.f32 %v2916, %v2964
    %v2966 = vpop.f32.mrf.mxu0
    %v2967 = vadd.f32 %v2918, %v2966
    %2968 = vmatmul.bf16.gmra.mxu0 %v607
    %v2969 = vpop.f32.mrf.mxu0
    %v2970 = vadd.f32 %v2921, %v2969
    %v2971 = vpop.f32.mrf.mxu0
    %v2972 = vadd.f32 %v2923, %v2971
    %2973 = vmatmul.bf16.gmra.mxu0 %v614
    %v2974 = vpop.f32.mrf.mxu0
    %v2975 = vadd.f32 %v2926, %v2974
    %v2976 = vpop.f32.mrf.mxu0
    %v2977 = vadd.f32 %v2928, %v2976
    %2978 = vmatmul.bf16.gmra.mxu0 %v621
    %v2979 = vpop.f32.mrf.mxu0
    %v2980 = vadd.f32 %v2931, %v2979
    %v2981 = vpop.f32.mrf.mxu0
    %v2982 = vadd.f32 %v2933, %v2981
    %2983 = vmatmul.bf16.gmra.mxu0 %v628
    %v2984 = vpop.f32.mrf.mxu0
    %v2985 = vadd.f32 %v2936, %v2984
    %v2986 = vpop.f32.mrf.mxu0
    %v2987 = vadd.f32 %v2938, %v2986
    %2988 = vmatmul.bf16.gmra.mxu0 %v635
    %v2989 = vpop.f32.mrf.mxu0
    %v2990 = vadd.f32 %v2941, %v2989
    %v2991 = vpop.f32.mrf.mxu0
    %v2992 = vadd.f32 %v2943, %v2991
    %2993 = vmatmul.bf16.gmra.mxu0 %v642
    %v2994 = vpop.f32.mrf.mxu0
    %v2995 = vadd.f32 %v2946, %v2994
    %v2996 = vpop.f32.mrf.mxu0
    %v2997 = vadd.f32 %v2948, %v2996
    %2998 = vdwg.mxu0
    %2999 = vmatpush.bf16.msra.mxu0 %v1502
    %3000 = vmatpush.bf16.msra.mxu0 %v1498
    %3001 = vmatpush.bf16.msra.mxu0 %v1494
    %3002 = vmatpush.bf16.msra.mxu0 %v1490
    %3003 = vmatpush.bf16.msra.mxu0 %v1486
    %3004 = vmatpush.bf16.msra.mxu0 %v1482
    %3005 = vmatpush.bf16.msra.mxu0 %v1478
    %3006 = vmatpush.bf16.msra.mxu0 %v1474
    %3007 = vmatmul.bf16.gmra.mxu0 %v594
    %v3008 = vpop.f32.mrf.mxu0
    %v3009 = vadd.f32 %v2960, %v3008
    %v3010 = vpop.f32.mrf.mxu0
    %v3011 = vadd.f32 %v2962, %v3010
    %3012 = vmatmul.bf16.gmra.mxu0 %v601
    %v3013 = vpop.f32.mrf.mxu0
    %v3014 = vadd.f32 %v2965, %v3013
    %v3015 = vpop.f32.mrf.mxu0
    %v3016 = vadd.f32 %v2967, %v3015
    %3017 = vmatmul.bf16.gmra.mxu0 %v608
    %v3018 = vpop.f32.mrf.mxu0
    %v3019 = vadd.f32 %v2970, %v3018
    %v3020 = vpop.f32.mrf.mxu0
    %v3021 = vadd.f32 %v2972, %v3020
    %3022 = vmatmul.bf16.gmra.mxu0 %v615
    %v3023 = vpop.f32.mrf.mxu0
    %v3024 = vadd.f32 %v2975, %v3023
    %v3025 = vpop.f32.mrf.mxu0
    %v3026 = vadd.f32 %v2977, %v3025
    %3027 = vmatmul.bf16.gmra.mxu0 %v622
    %v3028 = vpop.f32.mrf.mxu0
    %v3029 = vadd.f32 %v2980, %v3028
    %v3030 = vpop.f32.mrf.mxu0
    %v3031 = vadd.f32 %v2982, %v3030
    %3032 = vmatmul.bf16.gmra.mxu0 %v629
    %v3033 = vpop.f32.mrf.mxu0
    %v3034 = vadd.f32 %v2985, %v3033
    %v3035 = vpop.f32.mrf.mxu0
    %v3036 = vadd.f32 %v2987, %v3035
    %3037 = vmatmul.bf16.gmra.mxu0 %v636
    %v3038 = vpop.f32.mrf.mxu0
    %v3039 = vadd.f32 %v2990, %v3038
    %v3040 = vpop.f32.mrf.mxu0
    %v3041 = vadd.f32 %v2992, %v3040
    %3042 = vmatmul.bf16.gmra.mxu0 %v643
    %v3043 = vpop.f32.mrf.mxu0
    %v3044 = vadd.f32 %v2995, %v3043
    %v3045 = vpop.f32.mrf.mxu0
    %v3046 = vadd.f32 %v2997, %v3045
    %3047 = vdwg.mxu0
    %3048 = vmatpush.bf16.msra.mxu0 %v1534
    %3049 = vmatpush.bf16.msra.mxu0 %v1530
    %3050 = vmatpush.bf16.msra.mxu0 %v1526
    %3051 = vmatpush.bf16.msra.mxu0 %v1522
    %3052 = vmatpush.bf16.msra.mxu0 %v1518
    %3053 = vmatpush.bf16.msra.mxu0 %v1514
    %3054 = vmatpush.bf16.msra.mxu0 %v1510
    %3055 = vmatpush.bf16.msra.mxu0 %v1506
    %3056 = vmatmul.bf16.gmra.mxu0 %v595
    %v3057 = vpop.f32.mrf.mxu0
    %v3058 = vadd.f32 %v3009, %v3057
    %v3059 = vpop.f32.mrf.mxu0
    %v3060 = vadd.f32 %v3011, %v3059
    %3061 = vmatmul.bf16.gmra.mxu0 %v602
    %v3062 = vpop.f32.mrf.mxu0
    %v3063 = vadd.f32 %v3014, %v3062
    %v3064 = vpop.f32.mrf.mxu0
    %v3065 = vadd.f32 %v3016, %v3064
    %3066 = vmatmul.bf16.gmra.mxu0 %v609
    %v3067 = vpop.f32.mrf.mxu0
    %v3068 = vadd.f32 %v3019, %v3067
    %v3069 = vpop.f32.mrf.mxu0
    %v3070 = vadd.f32 %v3021, %v3069
    %3071 = vmatmul.bf16.gmra.mxu0 %v616
    %v3072 = vpop.f32.mrf.mxu0
    %v3073 = vadd.f32 %v3024, %v3072
    %v3074 = vpop.f32.mrf.mxu0
    %v3075 = vadd.f32 %v3026, %v3074
    %3076 = vmatmul.bf16.gmra.mxu0 %v623
    %v3077 = vpop.f32.mrf.mxu0
    %v3078 = vadd.f32 %v3029, %v3077
    %v3079 = vpop.f32.mrf.mxu0
    %v3080 = vadd.f32 %v3031, %v3079
    %3081 = vmatmul.bf16.gmra.mxu0 %v630
    %v3082 = vpop.f32.mrf.mxu0
    %v3083 = vadd.f32 %v3034, %v3082
    %v3084 = vpop.f32.mrf.mxu0
    %v3085 = vadd.f32 %v3036, %v3084
    %3086 = vmatmul.bf16.gmra.mxu0 %v637
    %v3087 = vpop.f32.mrf.mxu0
    %v3088 = vadd.f32 %v3039, %v3087
    %v3089 = vpop.f32.mrf.mxu0
    %v3090 = vadd.f32 %v3041, %v3089
    %3091 = vmatmul.bf16.gmra.mxu0 %v644
    %v3092 = vpop.f32.mrf.mxu0
    %v3093 = vadd.f32 %v3044, %v3092
    %v3094 = vpop.f32.mrf.mxu0
    %v3095 = vadd.f32 %v3046, %v3094
    %3096 = vdwg.mxu0
    %3097 = vmatpush.bf16.msra.mxu0 %v1566
    %3098 = vmatpush.bf16.msra.mxu0 %v1562
    %3099 = vmatpush.bf16.msra.mxu0 %v1558
    %3100 = vmatpush.bf16.msra.mxu0 %v1554
    %3101 = vmatpush.bf16.msra.mxu0 %v1550
    %3102 = vmatpush.bf16.msra.mxu0 %v1546
    %3103 = vmatpush.bf16.msra.mxu0 %v1542
    %3104 = vmatpush.bf16.msra.mxu0 %v1538
    %3105 = vmatmul.bf16.gmra.mxu0 %v596
    %v3106 = vpop.f32.mrf.mxu0
    %v3107 = vadd.f32 %v3058, %v3106
    %v3108 = vpop.f32.mrf.mxu0
    %v3109 = vadd.f32 %v3060, %v3108
    %3110 = vmatmul.bf16.gmra.mxu0 %v603
    %v3111 = vpop.f32.mrf.mxu0
    %v3112 = vadd.f32 %v3063, %v3111
    %v3113 = vpop.f32.mrf.mxu0
    %v3114 = vadd.f32 %v3065, %v3113
    %3115 = vmatmul.bf16.gmra.mxu0 %v610
    %v3116 = vpop.f32.mrf.mxu0
    %v3117 = vadd.f32 %v3068, %v3116
    %v3118 = vpop.f32.mrf.mxu0
    %v3119 = vadd.f32 %v3070, %v3118
    %3120 = vmatmul.bf16.gmra.mxu0 %v617
    %v3121 = vpop.f32.mrf.mxu0
    %v3122 = vadd.f32 %v3073, %v3121
    %v3123 = vpop.f32.mrf.mxu0
    %v3124 = vadd.f32 %v3075, %v3123
    %3125 = vmatmul.bf16.gmra.mxu0 %v624
    %v3126 = vpop.f32.mrf.mxu0
    %v3127 = vadd.f32 %v3078, %v3126
    %v3128 = vpop.f32.mrf.mxu0
    %v3129 = vadd.f32 %v3080, %v3128
    %3130 = vmatmul.bf16.gmra.mxu0 %v631
    %v3131 = vpop.f32.mrf.mxu0
    %v3132 = vadd.f32 %v3083, %v3131
    %v3133 = vpop.f32.mrf.mxu0
    %v3134 = vadd.f32 %v3085, %v3133
    %3135 = vmatmul.bf16.gmra.mxu0 %v638
    %v3136 = vpop.f32.mrf.mxu0
    %v3137 = vadd.f32 %v3088, %v3136
    %v3138 = vpop.f32.mrf.mxu0
    %v3139 = vadd.f32 %v3090, %v3138
    %3140 = vmatmul.bf16.gmra.mxu0 %v645
    %v3141 = vpop.f32.mrf.mxu0
    %v3142 = vadd.f32 %v3093, %v3141
    %v3143 = vpop.f32.mrf.mxu0
    %v3144 = vadd.f32 %v3095, %v3143
    %3145 = vdwg.mxu0
    %3146 = vmatpush.bf16.msra.mxu0 %v1598
    %3147 = vmatpush.bf16.msra.mxu0 %v1594
    %3148 = vmatpush.bf16.msra.mxu0 %v1590
    %3149 = vmatpush.bf16.msra.mxu0 %v1586
    %3150 = vmatpush.bf16.msra.mxu0 %v1582
    %3151 = vmatpush.bf16.msra.mxu0 %v1578
    %3152 = vmatpush.bf16.msra.mxu0 %v1574
    %3153 = vmatpush.bf16.msra.mxu0 %v1570
    %3154 = vmatmul.bf16.gmra.mxu0 %v597
    %v3155 = vpop.f32.mrf.mxu0
    %v3156 = vadd.f32 %v3107, %v3155
    %v3157 = vpop.f32.mrf.mxu0
    %v3158 = vadd.f32 %v3109, %v3157
    %3159 = vmatmul.bf16.gmra.mxu0 %v604
    %v3160 = vpop.f32.mrf.mxu0
    %v3161 = vadd.f32 %v3112, %v3160
    %v3162 = vpop.f32.mrf.mxu0
    %v3163 = vadd.f32 %v3114, %v3162
    %3164 = vmatmul.bf16.gmra.mxu0 %v611
    %v3165 = vpop.f32.mrf.mxu0
    %v3166 = vadd.f32 %v3117, %v3165
    %v3167 = vpop.f32.mrf.mxu0
    %v3168 = vadd.f32 %v3119, %v3167
    %3169 = vmatmul.bf16.gmra.mxu0 %v618
    %v3170 = vpop.f32.mrf.mxu0
    %v3171 = vadd.f32 %v3122, %v3170
    %v3172 = vpop.f32.mrf.mxu0
    %v3173 = vadd.f32 %v3124, %v3172
    %3174 = vmatmul.bf16.gmra.mxu0 %v625
    %v3175 = vpop.f32.mrf.mxu0
    %v3176 = vadd.f32 %v3127, %v3175
    %v3177 = vpop.f32.mrf.mxu0
    %v3178 = vadd.f32 %v3129, %v3177
    %3179 = vmatmul.bf16.gmra.mxu0 %v632
    %v3180 = vpop.f32.mrf.mxu0
    %v3181 = vadd.f32 %v3132, %v3180
    %v3182 = vpop.f32.mrf.mxu0
    %v3183 = vadd.f32 %v3134, %v3182
    %3184 = vmatmul.bf16.gmra.mxu0 %v639
    %v3185 = vpop.f32.mrf.mxu0
    %v3186 = vadd.f32 %v3137, %v3185
    %v3187 = vpop.f32.mrf.mxu0
    %v3188 = vadd.f32 %v3139, %v3187
    %3189 = vmatmul.bf16.gmra.mxu0 %v646
    %v3190 = vpop.f32.mrf.mxu0
    %v3191 = vadd.f32 %v3142, %v3190
    %v3192 = vpop.f32.mrf.mxu0
    %v3193 = vadd.f32 %v3144, %v3192
    %3194 = vdwg.mxu0
    %v3195 = vmax.f32 %v2127, 0.0
    %v3196 = vmax.f32 %v2470, 0.0
    %v3197 = vmax.f32 %v2813, 0.0
    %v3198 = vmax.f32 %v3156, 0.0
    %v3199 = vmax.f32 %v2129, 0.0
    %v3200 = vmax.f32 %v2472, 0.0
    %v3201 = vmax.f32 %v2815, 0.0
    %v3202 = vmax.f32 %v3158, 0.0
    %v3203 = vmax.f32 %v2132, 0.0
    %v3204 = vmax.f32 %v2475, 0.0
    %v3205 = vmax.f32 %v2818, 0.0
    %v3206 = vmax.f32 %v3161, 0.0
    %v3207 = vmax.f32 %v2134, 0.0
    %v3208 = vmax.f32 %v2477, 0.0
    %v3209 = vmax.f32 %v2820, 0.0
    %v3210 = vmax.f32 %v3163, 0.0
    %v3211 = vmax.f32 %v2137, 0.0
    %v3212 = vmax.f32 %v2480, 0.0
    %v3213 = vmax.f32 %v2823, 0.0
    %v3214 = vmax.f32 %v3166, 0.0
    %v3215 = vmax.f32 %v2139, 0.0
    %v3216 = vmax.f32 %v2482, 0.0
    %v3217 = vmax.f32 %v2825, 0.0
    %v3218 = vmax.f32 %v3168, 0.0
    %v3219 = vmax.f32 %v2142, 0.0
    %v3220 = vmax.f32 %v2485, 0.0
    %v3221 = vmax.f32 %v2828, 0.0
    %v3222 = vmax.f32 %v3171, 0.0
    %v3223 = vmax.f32 %v2144, 0.0
    %v3224 = vmax.f32 %v2487, 0.0
    %v3225 = vmax.f32 %v2830, 0.0
    %v3226 = vmax.f32 %v3173, 0.0
    %v3227 = vmax.f32 %v2147, 0.0
    %v3228 = vmax.f32 %v2490, 0.0
    %v3229 = vmax.f32 %v2833, 0.0
    %v3230 = vmax.f32 %v3176, 0.0
    %v3231 = vmax.f32 %v2149, 0.0
    %v3232 = vmax.f32 %v2492, 0.0
    %v3233 = vmax.f32 %v2835, 0.0
    %v3234 = vmax.f32 %v3178, 0.0
    %v3235 = vmax.f32 %v2152, 0.0
    %v3236 = vmax.f32 %v2495, 0.0
    %v3237 = vmax.f32 %v2838, 0.0
    %v3238 = vmax.f32 %v3181, 0.0
    %v3239 = vmax.f32 %v2154, 0.0
    %v3240 = vmax.f32 %v2497, 0.0
    %v3241 = vmax.f32 %v2840, 0.0
    %v3242 = vmax.f32 %v3183, 0.0
    %v3243 = vmax.f32 %v2157, 0.0
    %v3244 = vmax.f32 %v2500, 0.0
    %v3245 = vmax.f32 %v2843, 0.0
    %v3246 = vmax.f32 %v3186, 0.0
    %v3247 = vmax.f32 %v2159, 0.0
    %v3248 = vmax.f32 %v2502, 0.0
    %v3249 = vmax.f32 %v2845, 0.0
    %v3250 = vmax.f32 %v3188, 0.0
    %v3251 = vmax.f32 %v2162, 0.0
    %v3252 = vmax.f32 %v2505, 0.0
    %v3253 = vmax.f32 %v2848, 0.0
    %v3254 = vmax.f32 %v3191, 0.0
    %v3255 = vmax.f32 %v2164, 0.0
    %v3256 = vmax.f32 %v2507, 0.0
    %v3257 = vmax.f32 %v2850, 0.0
    %v3258 = vmax.f32 %v3193, 0.0
    %v3259 = vpack.c.bf16 %v3199, %v3195
    %v3260 = vpack.c.bf16 %v3200, %v3196
    %v3261 = vpack.c.bf16 %v3201, %v3197
    %v3262 = vpack.c.bf16 %v3202, %v3198
    %v3263 = vpack.c.bf16 %v3207, %v3203
    %v3264 = vpack.c.bf16 %v3208, %v3204
    %v3265 = vpack.c.bf16 %v3209, %v3205
    %v3266 = vpack.c.bf16 %v3210, %v3206
    %v3267 = vpack.c.bf16 %v3215, %v3211
    %v3268 = vpack.c.bf16 %v3216, %v3212
    %v3269 = vpack.c.bf16 %v3217, %v3213
    %v3270 = vpack.c.bf16 %v3218, %v3214
    %v3271 = vpack.c.bf16 %v3223, %v3219
    %v3272 = vpack.c.bf16 %v3224, %v3220
    %v3273 = vpack.c.bf16 %v3225, %v3221
    %v3274 = vpack.c.bf16 %v3226, %v3222
    %v3275 = vpack.c.bf16 %v3231, %v3227
    %v3276 = vpack.c.bf16 %v3232, %v3228
    %v3277 = vpack.c.bf16 %v3233, %v3229
    %v3278 = vpack.c.bf16 %v3234, %v3230
    %v3279 = vpack.c.bf16 %v3239, %v3235
    %v3280 = vpack.c.bf16 %v3240, %v3236
    %v3281 = vpack.c.bf16 %v3241, %v3237
    %v3282 = vpack.c.bf16 %v3242, %v3238
    %v3283 = vpack.c.bf16 %v3247, %v3243
    %v3284 = vpack.c.bf16 %v3248, %v3244
    %v3285 = vpack.c.bf16 %v3249, %v3245
    %v3286 = vpack.c.bf16 %v3250, %v3246
    %v3287 = vpack.c.bf16 %v3255, %v3251
    %v3288 = vpack.c.bf16 %v3256, %v3252
    %v3289 = vpack.c.bf16 %v3257, %v3253
    %v3290 = vpack.c.bf16 %v3258, %v3254
    %v3291 = vld [vmem:[#allocation8] sm:$0xff]
    %v3292 = vld [vmem:[#allocation8 + $0x8] sm:$0xff]
    %v3293 = vld [vmem:[#allocation8 + $0x10] sm:$0xff]
    %v3294 = vld [vmem:[#allocation8 + $0x18] sm:$0xff]
    %v3295 = vld [vmem:[#allocation8 + $0x20] sm:$0xff]
    %v3296 = vld [vmem:[#allocation8 + $0x28] sm:$0xff]
    %v3297 = vld [vmem:[#allocation8 + $0x30] sm:$0xff]
    %v3298 = vld [vmem:[#allocation8 + $0x38] sm:$0xff]
    %v3299 = vld [vmem:[#allocation8 + $0x40] sm:$0xff]
    %v3300 = vld [vmem:[#allocation8 + $0x48] sm:$0xff]
    %v3301 = vld [vmem:[#allocation8 + $0x50] sm:$0xff]
    %v3302 = vld [vmem:[#allocation8 + $0x58] sm:$0xff]
    %v3303 = vld [vmem:[#allocation8 + $0x60] sm:$0xff]
    %v3304 = vld [vmem:[#allocation8 + $0x68] sm:$0xff]
    %v3305 = vld [vmem:[#allocation8 + $0x70] sm:$0xff]
    %v3306 = vld [vmem:[#allocation8 + $0x78] sm:$0xff]
    %v3307 = vld [vmem:[#allocation8 + $0x80] sm:$0xff]
    %v3308 = vld [vmem:[#allocation8 + $0x88] sm:$0xff]
    %v3309 = vld [vmem:[#allocation8 + $0x90] sm:$0xff]
    %v3310 = vld [vmem:[#allocation8 + $0x98] sm:$0xff]
    %v3311 = vld [vmem:[#allocation8 + $0xa0] sm:$0xff]
    %v3312 = vld [vmem:[#allocation8 + $0xa8] sm:$0xff]
    %v3313 = vld [vmem:[#allocation8 + $0xb0] sm:$0xff]
    %v3314 = vld [vmem:[#allocation8 + $0xb8] sm:$0xff]
    %v3315 = vld [vmem:[#allocation8 + $0xc0] sm:$0xff]
    %v3316 = vld [vmem:[#allocation8 + $0xc8] sm:$0xff]
    %v3317 = vld [vmem:[#allocation8 + $0xd0] sm:$0xff]
    %v3318 = vld [vmem:[#allocation8 + $0xd8] sm:$0xff]
    %v3319 = vld [vmem:[#allocation8 + $0xe0] sm:$0xff]
    %v3320 = vld [vmem:[#allocation8 + $0xe8] sm:$0xff]
    %v3321 = vld [vmem:[#allocation8 + $0xf0] sm:$0xff]
    %v3322 = vld [vmem:[#allocation8 + $0xf8] sm:$0xff]
    %v3323 = vld [vmem:[#allocation8 + $0x100] sm:$0xff]
    %v3324 = vld [vmem:[#allocation8 + $0x108] sm:$0xff]
    %v3325 = vld [vmem:[#allocation8 + $0x110] sm:$0xff]
    %v3326 = vld [vmem:[#allocation8 + $0x118] sm:$0xff]
    %v3327 = vld [vmem:[#allocation8 + $0x120] sm:$0xff]
    %v3328 = vld [vmem:[#allocation8 + $0x128] sm:$0xff]
    %v3329 = vld [vmem:[#allocation8 + $0x130] sm:$0xff]
    %v3330 = vld [vmem:[#allocation8 + $0x138] sm:$0xff]
    %v3331 = vld [vmem:[#allocation8 + $0x140] sm:$0xff]
    %v3332 = vld [vmem:[#allocation8 + $0x148] sm:$0xff]
    %v3333 = vld [vmem:[#allocation8 + $0x150] sm:$0xff]
    %v3334 = vld [vmem:[#allocation8 + $0x158] sm:$0xff]
    %v3335 = vld [vmem:[#allocation8 + $0x160] sm:$0xff]
    %v3336 = vld [vmem:[#allocation8 + $0x168] sm:$0xff]
    %v3337 = vld [vmem:[#allocation8 + $0x170] sm:$0xff]
    %v3338 = vld [vmem:[#allocation8 + $0x178] sm:$0xff]
    %v3339 = vld [vmem:[#allocation8 + $0x180] sm:$0xff]
    %v3340 = vld [vmem:[#allocation8 + $0x188] sm:$0xff]
    %v3341 = vld [vmem:[#allocation8 + $0x190] sm:$0xff]
    %v3342 = vld [vmem:[#allocation8 + $0x198] sm:$0xff]
    %v3343 = vld [vmem:[#allocation8 + $0x1a0] sm:$0xff]
    %v3344 = vld [vmem:[#allocation8 + $0x1a8] sm:$0xff]
    %v3345 = vld [vmem:[#allocation8 + $0x1b0] sm:$0xff]
    %v3346 = vld [vmem:[#allocation8 + $0x1b8] sm:$0xff]
    %v3347 = vld [vmem:[#allocation8 + $0x1c0] sm:$0xff]
    %v3348 = vld [vmem:[#allocation8 + $0x1c8] sm:$0xff]
    %v3349 = vld [vmem:[#allocation8 + $0x1d0] sm:$0xff]
    %v3350 = vld [vmem:[#allocation8 + $0x1d8] sm:$0xff]
    %v3351 = vld [vmem:[#allocation8 + $0x1e0] sm:$0xff]
    %v3352 = vld [vmem:[#allocation8 + $0x1e8] sm:$0xff]
    %v3353 = vld [vmem:[#allocation8 + $0x1f0] sm:$0xff]
    %v3354 = vld [vmem:[#allocation8 + $0x1f8] sm:$0xff]
    %v3355 = vld [vmem:[#allocation8 + $0x200] sm:$0xff]
    %v3356 = vld [vmem:[#allocation8 + $0x208] sm:$0xff]
    %v3357 = vld [vmem:[#allocation8 + $0x210] sm:$0xff]
    %v3358 = vld [vmem:[#allocation8 + $0x218] sm:$0xff]
    %v3359 = vld [vmem:[#allocation8 + $0x220] sm:$0xff]
    %v3360 = vld [vmem:[#allocation8 + $0x228] sm:$0xff]
    %v3361 = vld [vmem:[#allocation8 + $0x230] sm:$0xff]
    %v3362 = vld [vmem:[#allocation8 + $0x238] sm:$0xff]
    %v3363 = vld [vmem:[#allocation8 + $0x240] sm:$0xff]
    %v3364 = vld [vmem:[#allocation8 + $0x248] sm:$0xff]
    %v3365 = vld [vmem:[#allocation8 + $0x250] sm:$0xff]
    %v3366 = vld [vmem:[#allocation8 + $0x258] sm:$0xff]
    %v3367 = vld [vmem:[#allocation8 + $0x260] sm:$0xff]
    %v3368 = vld [vmem:[#allocation8 + $0x268] sm:$0xff]
    %v3369 = vld [vmem:[#allocation8 + $0x270] sm:$0xff]
    %v3370 = vld [vmem:[#allocation8 + $0x278] sm:$0xff]
    %v3371 = vld [vmem:[#allocation8 + $0x280] sm:$0xff]
    %v3372 = vld [vmem:[#allocation8 + $0x288] sm:$0xff]
    %v3373 = vld [vmem:[#allocation8 + $0x290] sm:$0xff]
    %v3374 = vld [vmem:[#allocation8 + $0x298] sm:$0xff]
    %v3375 = vld [vmem:[#allocation8 + $0x2a0] sm:$0xff]
    %v3376 = vld [vmem:[#allocation8 + $0x2a8] sm:$0xff]
    %v3377 = vld [vmem:[#allocation8 + $0x2b0] sm:$0xff]
    %v3378 = vld [vmem:[#allocation8 + $0x2b8] sm:$0xff]
    %v3379 = vld [vmem:[#allocation8 + $0x2c0] sm:$0xff]
    %v3380 = vld [vmem:[#allocation8 + $0x2c8] sm:$0xff]
    %v3381 = vld [vmem:[#allocation8 + $0x2d0] sm:$0xff]
    %v3382 = vld [vmem:[#allocation8 + $0x2d8] sm:$0xff]
    %v3383 = vld [vmem:[#allocation8 + $0x2e0] sm:$0xff]
    %v3384 = vld [vmem:[#allocation8 + $0x2e8] sm:$0xff]
    %v3385 = vld [vmem:[#allocation8 + $0x2f0] sm:$0xff]
    %v3386 = vld [vmem:[#allocation8 + $0x2f8] sm:$0xff]
    %v3387 = vld [vmem:[#allocation8 + $0x300] sm:$0xff]
    %v3388 = vld [vmem:[#allocation8 + $0x308] sm:$0xff]
    %v3389 = vld [vmem:[#allocation8 + $0x310] sm:$0xff]
    %v3390 = vld [vmem:[#allocation8 + $0x318] sm:$0xff]
    %v3391 = vld [vmem:[#allocation8 + $0x320] sm:$0xff]
    %v3392 = vld [vmem:[#allocation8 + $0x328] sm:$0xff]
    %v3393 = vld [vmem:[#allocation8 + $0x330] sm:$0xff]
    %v3394 = vld [vmem:[#allocation8 + $0x338] sm:$0xff]
    %v3395 = vld [vmem:[#allocation8 + $0x340] sm:$0xff]
    %v3396 = vld [vmem:[#allocation8 + $0x348] sm:$0xff]
    %v3397 = vld [vmem:[#allocation8 + $0x350] sm:$0xff]
    %v3398 = vld [vmem:[#allocation8 + $0x358] sm:$0xff]
    %v3399 = vld [vmem:[#allocation8 + $0x360] sm:$0xff]
    %v3400 = vld [vmem:[#allocation8 + $0x368] sm:$0xff]
    %v3401 = vld [vmem:[#allocation8 + $0x370] sm:$0xff]
    %v3402 = vld [vmem:[#allocation8 + $0x378] sm:$0xff]
    %v3403 = vld [vmem:[#allocation8 + $0x380] sm:$0xff]
    %v3404 = vld [vmem:[#allocation8 + $0x388] sm:$0xff]
    %v3405 = vld [vmem:[#allocation8 + $0x390] sm:$0xff]
    %v3406 = vld [vmem:[#allocation8 + $0x398] sm:$0xff]
    %v3407 = vld [vmem:[#allocation8 + $0x3a0] sm:$0xff]
    %v3408 = vld [vmem:[#allocation8 + $0x3a8] sm:$0xff]
    %v3409 = vld [vmem:[#allocation8 + $0x3b0] sm:$0xff]
    %v3410 = vld [vmem:[#allocation8 + $0x3b8] sm:$0xff]
    %v3411 = vld [vmem:[#allocation8 + $0x3c0] sm:$0xff]
    %v3412 = vld [vmem:[#allocation8 + $0x3c8] sm:$0xff]
    %v3413 = vld [vmem:[#allocation8 + $0x3d0] sm:$0xff]
    %v3414 = vld [vmem:[#allocation8 + $0x3d8] sm:$0xff]
    %v3415 = vld [vmem:[#allocation8 + $0x3e0] sm:$0xff]
    %v3416 = vld [vmem:[#allocation8 + $0x3e8] sm:$0xff]
    %v3417 = vld [vmem:[#allocation8 + $0x3f0] sm:$0xff]
    %v3418 = vld [vmem:[#allocation8 + $0x3f8] sm:$0xff]
    %v3419 = vld [vmem:[#allocation10] sm:$0xf]
    %v3421 = vperm.slane %v3419, 0
    %v3422 = vperm.slane %v3419, 1
    %v3423 = vperm.slane %v3419, 2
    %v3424 = vperm.slane %v3419, 3
    %v3557 = vunpack.c.l.b16 %v3291
    %v3558 = vunpack.c.h.b16 %v3291
    %v3559 = vunpack.c.l.b16 %v3292
    %v3560 = vunpack.c.h.b16 %v3292
    %v3561 = vunpack.c.l.b16 %v3293
    %v3562 = vunpack.c.h.b16 %v3293
    %v3563 = vunpack.c.l.b16 %v3294
    %v3564 = vunpack.c.h.b16 %v3294
    %v3565 = vunpack.c.l.b16 %v3295
    %v3566 = vunpack.c.h.b16 %v3295
    %v3567 = vunpack.c.l.b16 %v3296
    %v3568 = vunpack.c.h.b16 %v3296
    %v3569 = vunpack.c.l.b16 %v3297
    %v3570 = vunpack.c.h.b16 %v3297
    %v3571 = vunpack.c.l.b16 %v3298
    %v3572 = vunpack.c.h.b16 %v3298
    %v3573 = vunpack.c.l.b16 %v3299
    %v3574 = vunpack.c.h.b16 %v3299
    %v3575 = vunpack.c.l.b16 %v3300
    %v3576 = vunpack.c.h.b16 %v3300
    %v3577 = vunpack.c.l.b16 %v3301
    %v3578 = vunpack.c.h.b16 %v3301
    %v3579 = vunpack.c.l.b16 %v3302
    %v3580 = vunpack.c.h.b16 %v3302
    %v3581 = vunpack.c.l.b16 %v3303
    %v3582 = vunpack.c.h.b16 %v3303
    %v3583 = vunpack.c.l.b16 %v3304
    %v3584 = vunpack.c.h.b16 %v3304
    %v3585 = vunpack.c.l.b16 %v3305
    %v3586 = vunpack.c.h.b16 %v3305
    %v3587 = vunpack.c.l.b16 %v3306
    %v3588 = vunpack.c.h.b16 %v3306
    %v3589 = vunpack.c.l.b16 %v3307
    %v3590 = vunpack.c.h.b16 %v3307
    %v3591 = vunpack.c.l.b16 %v3308
    %v3592 = vunpack.c.h.b16 %v3308
    %v3593 = vunpack.c.l.b16 %v3309
    %v3594 = vunpack.c.h.b16 %v3309
    %v3595 = vunpack.c.l.b16 %v3310
    %v3596 = vunpack.c.h.b16 %v3310
    %v3597 = vunpack.c.l.b16 %v3311
    %v3598 = vunpack.c.h.b16 %v3311
    %v3599 = vunpack.c.l.b16 %v3312
    %v3600 = vunpack.c.h.b16 %v3312
    %v3601 = vunpack.c.l.b16 %v3313
    %v3602 = vunpack.c.h.b16 %v3313
    %v3603 = vunpack.c.l.b16 %v3314
    %v3604 = vunpack.c.h.b16 %v3314
    %v3605 = vunpack.c.l.b16 %v3315
    %v3606 = vunpack.c.h.b16 %v3315
    %v3607 = vunpack.c.l.b16 %v3316
    %v3608 = vunpack.c.h.b16 %v3316
    %v3609 = vunpack.c.l.b16 %v3317
    %v3610 = vunpack.c.h.b16 %v3317
    %v3611 = vunpack.c.l.b16 %v3318
    %v3612 = vunpack.c.h.b16 %v3318
    %v3613 = vunpack.c.l.b16 %v3319
    %v3614 = vunpack.c.h.b16 %v3319
    %v3615 = vunpack.c.l.b16 %v3320
    %v3616 = vunpack.c.h.b16 %v3320
    %v3617 = vunpack.c.l.b16 %v3321
    %v3618 = vunpack.c.h.b16 %v3321
    %v3619 = vunpack.c.l.b16 %v3322
    %v3620 = vunpack.c.h.b16 %v3322
    %v3621 = vunpack.c.l.b16 %v3323
    %v3622 = vunpack.c.h.b16 %v3323
    %v3623 = vunpack.c.l.b16 %v3324
    %v3624 = vunpack.c.h.b16 %v3324
    %v3625 = vunpack.c.l.b16 %v3325
    %v3626 = vunpack.c.h.b16 %v3325
    %v3627 = vunpack.c.l.b16 %v3326
    %v3628 = vunpack.c.h.b16 %v3326
    %v3629 = vunpack.c.l.b16 %v3327
    %v3630 = vunpack.c.h.b16 %v3327
    %v3631 = vunpack.c.l.b16 %v3328
    %v3632 = vunpack.c.h.b16 %v3328
    %v3633 = vunpack.c.l.b16 %v3329
    %v3634 = vunpack.c.h.b16 %v3329
    %v3635 = vunpack.c.l.b16 %v3330
    %v3636 = vunpack.c.h.b16 %v3330
    %v3637 = vunpack.c.l.b16 %v3331
    %v3638 = vunpack.c.h.b16 %v3331
    %v3639 = vunpack.c.l.b16 %v3332
    %v3640 = vunpack.c.h.b16 %v3332
    %v3641 = vunpack.c.l.b16 %v3333
    %v3642 = vunpack.c.h.b16 %v3333
    %v3643 = vunpack.c.l.b16 %v3334
    %v3644 = vunpack.c.h.b16 %v3334
    %v3645 = vunpack.c.l.b16 %v3335
    %v3646 = vunpack.c.h.b16 %v3335
    %v3647 = vunpack.c.l.b16 %v3336
    %v3648 = vunpack.c.h.b16 %v3336
    %v3649 = vunpack.c.l.b16 %v3337
    %v3650 = vunpack.c.h.b16 %v3337
    %v3651 = vunpack.c.l.b16 %v3338
    %v3652 = vunpack.c.h.b16 %v3338
    %v3653 = vunpack.c.l.b16 %v3339
    %v3654 = vunpack.c.h.b16 %v3339
    %v3655 = vunpack.c.l.b16 %v3340
    %v3656 = vunpack.c.h.b16 %v3340
    %v3657 = vunpack.c.l.b16 %v3341
    %v3658 = vunpack.c.h.b16 %v3341
    %v3659 = vunpack.c.l.b16 %v3342
    %v3660 = vunpack.c.h.b16 %v3342
    %v3661 = vunpack.c.l.b16 %v3343
    %v3662 = vunpack.c.h.b16 %v3343
    %v3663 = vunpack.c.l.b16 %v3344
    %v3664 = vunpack.c.h.b16 %v3344
    %v3665 = vunpack.c.l.b16 %v3345
    %v3666 = vunpack.c.h.b16 %v3345
    %v3667 = vunpack.c.l.b16 %v3346
    %v3668 = vunpack.c.h.b16 %v3346
    %v3669 = vunpack.c.l.b16 %v3347
    %v3670 = vunpack.c.h.b16 %v3347
    %v3671 = vunpack.c.l.b16 %v3348
    %v3672 = vunpack.c.h.b16 %v3348
    %v3673 = vunpack.c.l.b16 %v3349
    %v3674 = vunpack.c.h.b16 %v3349
    %v3675 = vunpack.c.l.b16 %v3350
    %v3676 = vunpack.c.h.b16 %v3350
    %v3677 = vunpack.c.l.b16 %v3351
    %v3678 = vunpack.c.h.b16 %v3351
    %v3679 = vunpack.c.l.b16 %v3352
    %v3680 = vunpack.c.h.b16 %v3352
    %v3681 = vunpack.c.l.b16 %v3353
    %v3682 = vunpack.c.h.b16 %v3353
    %v3683 = vunpack.c.l.b16 %v3354
    %v3684 = vunpack.c.h.b16 %v3354
    %v3685 = vunpack.c.l.b16 %v3355
    %v3686 = vunpack.c.h.b16 %v3355
    %v3687 = vunpack.c.l.b16 %v3356
    %v3688 = vunpack.c.h.b16 %v3356
    %v3689 = vunpack.c.l.b16 %v3357
    %v3690 = vunpack.c.h.b16 %v3357
    %v3691 = vunpack.c.l.b16 %v3358
    %v3692 = vunpack.c.h.b16 %v3358
    %v3693 = vunpack.c.l.b16 %v3359
    %v3694 = vunpack.c.h.b16 %v3359
    %v3695 = vunpack.c.l.b16 %v3360
    %v3696 = vunpack.c.h.b16 %v3360
    %v3697 = vunpack.c.l.b16 %v3361
    %v3698 = vunpack.c.h.b16 %v3361
    %v3699 = vunpack.c.l.b16 %v3362
    %v3700 = vunpack.c.h.b16 %v3362
    %v3701 = vunpack.c.l.b16 %v3363
    %v3702 = vunpack.c.h.b16 %v3363
    %v3703 = vunpack.c.l.b16 %v3364
    %v3704 = vunpack.c.h.b16 %v3364
    %v3705 = vunpack.c.l.b16 %v3365
    %v3706 = vunpack.c.h.b16 %v3365
    %v3707 = vunpack.c.l.b16 %v3366
    %v3708 = vunpack.c.h.b16 %v3366
    %v3709 = vunpack.c.l.b16 %v3367
    %v3710 = vunpack.c.h.b16 %v3367
    %v3711 = vunpack.c.l.b16 %v3368
    %v3712 = vunpack.c.h.b16 %v3368
    %v3713 = vunpack.c.l.b16 %v3369
    %v3714 = vunpack.c.h.b16 %v3369
    %v3715 = vunpack.c.l.b16 %v3370
    %v3716 = vunpack.c.h.b16 %v3370
    %v3717 = vunpack.c.l.b16 %v3371
    %v3718 = vunpack.c.h.b16 %v3371
    %v3719 = vunpack.c.l.b16 %v3372
    %v3720 = vunpack.c.h.b16 %v3372
    %v3721 = vunpack.c.l.b16 %v3373
    %v3722 = vunpack.c.h.b16 %v3373
    %v3723 = vunpack.c.l.b16 %v3374
    %v3724 = vunpack.c.h.b16 %v3374
    %v3725 = vunpack.c.l.b16 %v3375
    %v3726 = vunpack.c.h.b16 %v3375
    %v3727 = vunpack.c.l.b16 %v3376
    %v3728 = vunpack.c.h.b16 %v3376
    %v3729 = vunpack.c.l.b16 %v3377
    %v3730 = vunpack.c.h.b16 %v3377
    %v3731 = vunpack.c.l.b16 %v3378
    %v3732 = vunpack.c.h.b16 %v3378
    %v3733 = vunpack.c.l.b16 %v3379
    %v3734 = vunpack.c.h.b16 %v3379
    %v3735 = vunpack.c.l.b16 %v3380
    %v3736 = vunpack.c.h.b16 %v3380
    %v3737 = vunpack.c.l.b16 %v3381
    %v3738 = vunpack.c.h.b16 %v3381
    %v3739 = vunpack.c.l.b16 %v3382
    %v3740 = vunpack.c.h.b16 %v3382
    %v3741 = vunpack.c.l.b16 %v3383
    %v3742 = vunpack.c.h.b16 %v3383
    %v3743 = vunpack.c.l.b16 %v3384
    %v3744 = vunpack.c.h.b16 %v3384
    %v3745 = vunpack.c.l.b16 %v3385
    %v3746 = vunpack.c.h.b16 %v3385
    %v3747 = vunpack.c.l.b16 %v3386
    %v3748 = vunpack.c.h.b16 %v3386
    %v3749 = vunpack.c.l.b16 %v3387
    %v3750 = vunpack.c.h.b16 %v3387
    %v3751 = vunpack.c.l.b16 %v3388
    %v3752 = vunpack.c.h.b16 %v3388
    %v3753 = vunpack.c.l.b16 %v3389
    %v3754 = vunpack.c.h.b16 %v3389
    %v3755 = vunpack.c.l.b16 %v3390
    %v3756 = vunpack.c.h.b16 %v3390
    %v3757 = vunpack.c.l.b16 %v3391
    %v3758 = vunpack.c.h.b16 %v3391
    %v3759 = vunpack.c.l.b16 %v3392
    %v3760 = vunpack.c.h.b16 %v3392
    %v3761 = vunpack.c.l.b16 %v3393
    %v3762 = vunpack.c.h.b16 %v3393
    %v3763 = vunpack.c.l.b16 %v3394
    %v3764 = vunpack.c.h.b16 %v3394
    %v3765 = vunpack.c.l.b16 %v3395
    %v3766 = vunpack.c.h.b16 %v3395
    %v3767 = vunpack.c.l.b16 %v3396
    %v3768 = vunpack.c.h.b16 %v3396
    %v3769 = vunpack.c.l.b16 %v3397
    %v3770 = vunpack.c.h.b16 %v3397
    %v3771 = vunpack.c.l.b16 %v3398
    %v3772 = vunpack.c.h.b16 %v3398
    %v3773 = vunpack.c.l.b16 %v3399
    %v3774 = vunpack.c.h.b16 %v3399
    %v3775 = vunpack.c.l.b16 %v3400
    %v3776 = vunpack.c.h.b16 %v3400
    %v3777 = vunpack.c.l.b16 %v3401
    %v3778 = vunpack.c.h.b16 %v3401
    %v3779 = vunpack.c.l.b16 %v3402
    %v3780 = vunpack.c.h.b16 %v3402
    %v3781 = vunpack.c.l.b16 %v3403
    %v3782 = vunpack.c.h.b16 %v3403
    %v3783 = vunpack.c.l.b16 %v3404
    %v3784 = vunpack.c.h.b16 %v3404
    %v3785 = vunpack.c.l.b16 %v3405
    %v3786 = vunpack.c.h.b16 %v3405
    %v3787 = vunpack.c.l.b16 %v3406
    %v3788 = vunpack.c.h.b16 %v3406
    %v3789 = vunpack.c.l.b16 %v3407
    %v3790 = vunpack.c.h.b16 %v3407
    %v3791 = vunpack.c.l.b16 %v3408
    %v3792 = vunpack.c.h.b16 %v3408
    %v3793 = vunpack.c.l.b16 %v3409
    %v3794 = vunpack.c.h.b16 %v3409
    %v3795 = vunpack.c.l.b16 %v3410
    %v3796 = vunpack.c.h.b16 %v3410
    %v3797 = vunpack.c.l.b16 %v3411
    %v3798 = vunpack.c.h.b16 %v3411
    %v3799 = vunpack.c.l.b16 %v3412
    %v3800 = vunpack.c.h.b16 %v3412
    %v3801 = vunpack.c.l.b16 %v3413
    %v3802 = vunpack.c.h.b16 %v3413
    %v3803 = vunpack.c.l.b16 %v3414
    %v3804 = vunpack.c.h.b16 %v3414
    %v3805 = vunpack.c.l.b16 %v3415
    %v3806 = vunpack.c.h.b16 %v3415
    %v3807 = vunpack.c.l.b16 %v3416
    %v3808 = vunpack.c.h.b16 %v3416
    %v3809 = vunpack.c.l.b16 %v3417
    %v3810 = vunpack.c.h.b16 %v3417
    %v3811 = vunpack.c.l.b16 %v3418
    %v3812 = vunpack.c.h.b16 %v3418
    %v3813 = vpack.c.b16 %v3561, %v3557
    %v3814 = vpack.c.b16 %v3562, %v3558
    %v3815 = vpack.c.b16 %v3563, %v3559
    %v3816 = vpack.c.b16 %v3564, %v3560
    %v3817 = vpack.c.b16 %v3569, %v3565
    %v3818 = vpack.c.b16 %v3570, %v3566
    %v3819 = vpack.c.b16 %v3571, %v3567
    %v3820 = vpack.c.b16 %v3572, %v3568
    %v3821 = vpack.c.b16 %v3577, %v3573
    %v3822 = vpack.c.b16 %v3578, %v3574
    %v3823 = vpack.c.b16 %v3579, %v3575
    %v3824 = vpack.c.b16 %v3580, %v3576
    %v3825 = vpack.c.b16 %v3585, %v3581
    %v3826 = vpack.c.b16 %v3586, %v3582
    %v3827 = vpack.c.b16 %v3587, %v3583
    %v3828 = vpack.c.b16 %v3588, %v3584
    %v3829 = vpack.c.b16 %v3593, %v3589
    %v3830 = vpack.c.b16 %v3594, %v3590
    %v3831 = vpack.c.b16 %v3595, %v3591
    %v3832 = vpack.c.b16 %v3596, %v3592
    %v3833 = vpack.c.b16 %v3601, %v3597
    %v3834 = vpack.c.b16 %v3602, %v3598
    %v3835 = vpack.c.b16 %v3603, %v3599
    %v3836 = vpack.c.b16 %v3604, %v3600
    %v3837 = vpack.c.b16 %v3609, %v3605
    %v3838 = vpack.c.b16 %v3610, %v3606
    %v3839 = vpack.c.b16 %v3611, %v3607
    %v3840 = vpack.c.b16 %v3612, %v3608
    %v3841 = vpack.c.b16 %v3617, %v3613
    %v3842 = vpack.c.b16 %v3618, %v3614
    %v3843 = vpack.c.b16 %v3619, %v3615
    %v3844 = vpack.c.b16 %v3620, %v3616
    %v3845 = vpack.c.b16 %v3625, %v3621
    %v3846 = vpack.c.b16 %v3626, %v3622
    %v3847 = vpack.c.b16 %v3627, %v3623
    %v3848 = vpack.c.b16 %v3628, %v3624
    %v3849 = vpack.c.b16 %v3633, %v3629
    %v3850 = vpack.c.b16 %v3634, %v3630
    %v3851 = vpack.c.b16 %v3635, %v3631
    %v3852 = vpack.c.b16 %v3636, %v3632
    %v3853 = vpack.c.b16 %v3641, %v3637
    %v3854 = vpack.c.b16 %v3642, %v3638
    %v3855 = vpack.c.b16 %v3643, %v3639
    %v3856 = vpack.c.b16 %v3644, %v3640
    %v3857 = vpack.c.b16 %v3649, %v3645
    %v3858 = vpack.c.b16 %v3650, %v3646
    %v3859 = vpack.c.b16 %v3651, %v3647
    %v3860 = vpack.c.b16 %v3652, %v3648
    %v3861 = vpack.c.b16 %v3657, %v3653
    %v3862 = vpack.c.b16 %v3658, %v3654
    %v3863 = vpack.c.b16 %v3659, %v3655
    %v3864 = vpack.c.b16 %v3660, %v3656
    %v3865 = vpack.c.b16 %v3665, %v3661
    %v3866 = vpack.c.b16 %v3666, %v3662
    %v3867 = vpack.c.b16 %v3667, %v3663
    %v3868 = vpack.c.b16 %v3668, %v3664
    %v3869 = vpack.c.b16 %v3673, %v3669
    %v3870 = vpack.c.b16 %v3674, %v3670
    %v3871 = vpack.c.b16 %v3675, %v3671
    %v3872 = vpack.c.b16 %v3676, %v3672
    %v3873 = vpack.c.b16 %v3681, %v3677
    %v3874 = vpack.c.b16 %v3682, %v3678
    %v3875 = vpack.c.b16 %v3683, %v3679
    %v3876 = vpack.c.b16 %v3684, %v3680
    %v3877 = vpack.c.b16 %v3689, %v3685
    %v3878 = vpack.c.b16 %v3690, %v3686
    %v3879 = vpack.c.b16 %v3691, %v3687
    %v3880 = vpack.c.b16 %v3692, %v3688
    %v3881 = vpack.c.b16 %v3697, %v3693
    %v3882 = vpack.c.b16 %v3698, %v3694
    %v3883 = vpack.c.b16 %v3699, %v3695
    %v3884 = vpack.c.b16 %v3700, %v3696
    %v3885 = vpack.c.b16 %v3705, %v3701
    %v3886 = vpack.c.b16 %v3706, %v3702
    %v3887 = vpack.c.b16 %v3707, %v3703
    %v3888 = vpack.c.b16 %v3708, %v3704
    %v3889 = vpack.c.b16 %v3713, %v3709
    %v3890 = vpack.c.b16 %v3714, %v3710
    %v3891 = vpack.c.b16 %v3715, %v3711
    %v3892 = vpack.c.b16 %v3716, %v3712
    %v3893 = vpack.c.b16 %v3721, %v3717
    %v3894 = vpack.c.b16 %v3722, %v3718
    %v3895 = vpack.c.b16 %v3723, %v3719
    %v3896 = vpack.c.b16 %v3724, %v3720
    %v3897 = vpack.c.b16 %v3729, %v3725
    %v3898 = vpack.c.b16 %v3730, %v3726
    %v3899 = vpack.c.b16 %v3731, %v3727
    %v3900 = vpack.c.b16 %v3732, %v3728
    %v3901 = vpack.c.b16 %v3737, %v3733
    %v3902 = vpack.c.b16 %v3738, %v3734
    %v3903 = vpack.c.b16 %v3739, %v3735
    %v3904 = vpack.c.b16 %v3740, %v3736
    %v3905 = vpack.c.b16 %v3745, %v3741
    %v3906 = vpack.c.b16 %v3746, %v3742
    %v3907 = vpack.c.b16 %v3747, %v3743
    %v3908 = vpack.c.b16 %v3748, %v3744
    %v3909 = vpack.c.b16 %v3753, %v3749
    %v3910 = vpack.c.b16 %v3754, %v3750
    %v3911 = vpack.c.b16 %v3755, %v3751
    %v3912 = vpack.c.b16 %v3756, %v3752
    %v3913 = vpack.c.b16 %v3761, %v3757
    %v3914 = vpack.c.b16 %v3762, %v3758
    %v3915 = vpack.c.b16 %v3763, %v3759
    %v3916 = vpack.c.b16 %v3764, %v3760
    %v3917 = vpack.c.b16 %v3769, %v3765
    %v3918 = vpack.c.b16 %v3770, %v3766
    %v3919 = vpack.c.b16 %v3771, %v3767
    %v3920 = vpack.c.b16 %v3772, %v3768
    %v3921 = vpack.c.b16 %v3777, %v3773
    %v3922 = vpack.c.b16 %v3778, %v3774
    %v3923 = vpack.c.b16 %v3779, %v3775
    %v3924 = vpack.c.b16 %v3780, %v3776
    %v3925 = vpack.c.b16 %v3785, %v3781
    %v3926 = vpack.c.b16 %v3786, %v3782
    %v3927 = vpack.c.b16 %v3787, %v3783
    %v3928 = vpack.c.b16 %v3788, %v3784
    %v3929 = vpack.c.b16 %v3793, %v3789
    %v3930 = vpack.c.b16 %v3794, %v3790
    %v3931 = vpack.c.b16 %v3795, %v3791
    %v3932 = vpack.c.b16 %v3796, %v3792
    %v3933 = vpack.c.b16 %v3801, %v3797
    %v3934 = vpack.c.b16 %v3802, %v3798
    %v3935 = vpack.c.b16 %v3803, %v3799
    %v3936 = vpack.c.b16 %v3804, %v3800
    %v3937 = vpack.c.b16 %v3809, %v3805
    %v3938 = vpack.c.b16 %v3810, %v3806
    %v3939 = vpack.c.b16 %v3811, %v3807
    %v3940 = vpack.c.b16 %v3812, %v3808
    %4069 = vmatpush.bf16.msra.mxu0 %v3841
    %4070 = vmatpush.bf16.msra.mxu0 %v3837
    %4071 = vmatpush.bf16.msra.mxu0 %v3833
    %4072 = vmatpush.bf16.msra.mxu0 %v3829
    %4073 = vmatpush.bf16.msra.mxu0 %v3825
    %4074 = vmatpush.bf16.msra.mxu0 %v3821
    %4075 = vmatpush.bf16.msra.mxu0 %v3817
    %4076 = vmatpush.bf16.msra.mxu0 %v3813
    %4077 = vmatmul.bf16.gmra.mxu0 %v3259
    %v4078 = vpop.f32.mrf.mxu0
    %v4079 = vadd.f32 %v3421, %v4078
    %v4080 = vpop.f32.mrf.mxu0
    %v4081 = vadd.f32 %v3421, %v4080
    %4082 = vmatmul.bf16.gmra.mxu0 %v3263
    %v4083 = vpop.f32.mrf.mxu0
    %v4084 = vadd.f32 %v3421, %v4083
    %v4085 = vpop.f32.mrf.mxu0
    %v4086 = vadd.f32 %v3421, %v4085
    %4087 = vmatmul.bf16.gmra.mxu0 %v3267
    %v4088 = vpop.f32.mrf.mxu0
    %v4089 = vadd.f32 %v3421, %v4088
    %v4090 = vpop.f32.mrf.mxu0
    %v4091 = vadd.f32 %v3421, %v4090
    %4092 = vmatmul.bf16.gmra.mxu0 %v3271
    %v4093 = vpop.f32.mrf.mxu0
    %v4094 = vadd.f32 %v3421, %v4093
    %v4095 = vpop.f32.mrf.mxu0
    %v4096 = vadd.f32 %v3421, %v4095
    %4097 = vmatmul.bf16.gmra.mxu0 %v3275
    %v4098 = vpop.f32.mrf.mxu0
    %v4099 = vadd.f32 %v3421, %v4098
    %v4100 = vpop.f32.mrf.mxu0
    %v4101 = vadd.f32 %v3421, %v4100
    %4102 = vmatmul.bf16.gmra.mxu0 %v3279
    %v4103 = vpop.f32.mrf.mxu0
    %v4104 = vadd.f32 %v3421, %v4103
    %v4105 = vpop.f32.mrf.mxu0
    %v4106 = vadd.f32 %v3421, %v4105
    %4107 = vmatmul.bf16.gmra.mxu0 %v3283
    %v4108 = vpop.f32.mrf.mxu0
    %v4109 = vadd.f32 %v3421, %v4108
    %v4110 = vpop.f32.mrf.mxu0
    %v4111 = vadd.f32 %v3421, %v4110
    %4112 = vmatmul.bf16.gmra.mxu0 %v3287
    %v4113 = vpop.f32.mrf.mxu0
    %v4114 = vadd.f32 %v3421, %v4113
    %v4115 = vpop.f32.mrf.mxu0
    %v4116 = vadd.f32 %v3421, %v4115
    %4117 = vdwg.mxu0
    %4118 = vmatpush.bf16.msra.mxu0 %v3873
    %4119 = vmatpush.bf16.msra.mxu0 %v3869
    %4120 = vmatpush.bf16.msra.mxu0 %v3865
    %4121 = vmatpush.bf16.msra.mxu0 %v3861
    %4122 = vmatpush.bf16.msra.mxu0 %v3857
    %4123 = vmatpush.bf16.msra.mxu0 %v3853
    %4124 = vmatpush.bf16.msra.mxu0 %v3849
    %4125 = vmatpush.bf16.msra.mxu0 %v3845
    %4126 = vmatmul.bf16.gmra.mxu0 %v3260
    %v4127 = vpop.f32.mrf.mxu0
    %v4128 = vadd.f32 %v4079, %v4127
    %v4129 = vpop.f32.mrf.mxu0
    %v4130 = vadd.f32 %v4081, %v4129
    %4131 = vmatmul.bf16.gmra.mxu0 %v3264
    %v4132 = vpop.f32.mrf.mxu0
    %v4133 = vadd.f32 %v4084, %v4132
    %v4134 = vpop.f32.mrf.mxu0
    %v4135 = vadd.f32 %v4086, %v4134
    %4136 = vmatmul.bf16.gmra.mxu0 %v3268
    %v4137 = vpop.f32.mrf.mxu0
    %v4138 = vadd.f32 %v4089, %v4137
    %v4139 = vpop.f32.mrf.mxu0
    %v4140 = vadd.f32 %v4091, %v4139
    %4141 = vmatmul.bf16.gmra.mxu0 %v3272
    %v4142 = vpop.f32.mrf.mxu0
    %v4143 = vadd.f32 %v4094, %v4142
    %v4144 = vpop.f32.mrf.mxu0
    %v4145 = vadd.f32 %v4096, %v4144
    %4146 = vmatmul.bf16.gmra.mxu0 %v3276
    %v4147 = vpop.f32.mrf.mxu0
    %v4148 = vadd.f32 %v4099, %v4147
    %v4149 = vpop.f32.mrf.mxu0
    %v4150 = vadd.f32 %v4101, %v4149
    %4151 = vmatmul.bf16.gmra.mxu0 %v3280
    %v4152 = vpop.f32.mrf.mxu0
    %v4153 = vadd.f32 %v4104, %v4152
    %v4154 = vpop.f32.mrf.mxu0
    %v4155 = vadd.f32 %v4106, %v4154
    %4156 = vmatmul.bf16.gmra.mxu0 %v3284
    %v4157 = vpop.f32.mrf.mxu0
    %v4158 = vadd.f32 %v4109, %v4157
    %v4159 = vpop.f32.mrf.mxu0
    %v4160 = vadd.f32 %v4111, %v4159
    %4161 = vmatmul.bf16.gmra.mxu0 %v3288
    %v4162 = vpop.f32.mrf.mxu0
    %v4163 = vadd.f32 %v4114, %v4162
    %v4164 = vpop.f32.mrf.mxu0
    %v4165 = vadd.f32 %v4116, %v4164
    %4166 = vdwg.mxu0
    %4167 = vmatpush.bf16.msra.mxu0 %v3905
    %4168 = vmatpush.bf16.msra.mxu0 %v3901
    %4169 = vmatpush.bf16.msra.mxu0 %v3897
    %4170 = vmatpush.bf16.msra.mxu0 %v3893
    %4171 = vmatpush.bf16.msra.mxu0 %v3889
    %4172 = vmatpush.bf16.msra.mxu0 %v3885
    %4173 = vmatpush.bf16.msra.mxu0 %v3881
    %4174 = vmatpush.bf16.msra.mxu0 %v3877
    %4175 = vmatmul.bf16.gmra.mxu0 %v3261
    %v4176 = vpop.f32.mrf.mxu0
    %v4177 = vadd.f32 %v4128, %v4176
    %v4178 = vpop.f32.mrf.mxu0
    %v4179 = vadd.f32 %v4130, %v4178
    %4180 = vmatmul.bf16.gmra.mxu0 %v3265
    %v4181 = vpop.f32.mrf.mxu0
    %v4182 = vadd.f32 %v4133, %v4181
    %v4183 = vpop.f32.mrf.mxu0
    %v4184 = vadd.f32 %v4135, %v4183
    %4185 = vmatmul.bf16.gmra.mxu0 %v3269
    %v4186 = vpop.f32.mrf.mxu0
    %v4187 = vadd.f32 %v4138, %v4186
    %v4188 = vpop.f32.mrf.mxu0
    %v4189 = vadd.f32 %v4140, %v4188
    %4190 = vmatmul.bf16.gmra.mxu0 %v3273
    %v4191 = vpop.f32.mrf.mxu0
    %v4192 = vadd.f32 %v4143, %v4191
    %v4193 = vpop.f32.mrf.mxu0
    %v4194 = vadd.f32 %v4145, %v4193
    %4195 = vmatmul.bf16.gmra.mxu0 %v3277
    %v4196 = vpop.f32.mrf.mxu0
    %v4197 = vadd.f32 %v4148, %v4196
    %v4198 = vpop.f32.mrf.mxu0
    %v4199 = vadd.f32 %v4150, %v4198
    %4200 = vmatmul.bf16.gmra.mxu0 %v3281
    %v4201 = vpop.f32.mrf.mxu0
    %v4202 = vadd.f32 %v4153, %v4201
    %v4203 = vpop.f32.mrf.mxu0
    %v4204 = vadd.f32 %v4155, %v4203
    %4205 = vmatmul.bf16.gmra.mxu0 %v3285
    %v4206 = vpop.f32.mrf.mxu0
    %v4207 = vadd.f32 %v4158, %v4206
    %v4208 = vpop.f32.mrf.mxu0
    %v4209 = vadd.f32 %v4160, %v4208
    %4210 = vmatmul.bf16.gmra.mxu0 %v3289
    %v4211 = vpop.f32.mrf.mxu0
    %v4212 = vadd.f32 %v4163, %v4211
    %v4213 = vpop.f32.mrf.mxu0
    %v4214 = vadd.f32 %v4165, %v4213
    %4215 = vdwg.mxu0
    %4216 = vmatpush.bf16.msra.mxu0 %v3937
    %4217 = vmatpush.bf16.msra.mxu0 %v3933
    %4218 = vmatpush.bf16.msra.mxu0 %v3929
    %4219 = vmatpush.bf16.msra.mxu0 %v3925
    %4220 = vmatpush.bf16.msra.mxu0 %v3921
    %4221 = vmatpush.bf16.msra.mxu0 %v3917
    %4222 = vmatpush.bf16.msra.mxu0 %v3913
    %4223 = vmatpush.bf16.msra.mxu0 %v3909
    %4224 = vmatmul.bf16.gmra.mxu0 %v3262
    %v4225 = vpop.f32.mrf.mxu0
    %v4226 = vadd.f32 %v4177, %v4225
    %v4227 = vpop.f32.mrf.mxu0
    %v4228 = vadd.f32 %v4179, %v4227
    %4229 = vmatmul.bf16.gmra.mxu0 %v3266
    %v4230 = vpop.f32.mrf.mxu0
    %v4231 = vadd.f32 %v4182, %v4230
    %v4232 = vpop.f32.mrf.mxu0
    %v4233 = vadd.f32 %v4184, %v4232
    %4234 = vmatmul.bf16.gmra.mxu0 %v3270
    %v4235 = vpop.f32.mrf.mxu0
    %v4236 = vadd.f32 %v4187, %v4235
    %v4237 = vpop.f32.mrf.mxu0
    %v4238 = vadd.f32 %v4189, %v4237
    %4239 = vmatmul.bf16.gmra.mxu0 %v3274
    %v4240 = vpop.f32.mrf.mxu0
    %v4241 = vadd.f32 %v4192, %v4240
    %v4242 = vpop.f32.mrf.mxu0
    %v4243 = vadd.f32 %v4194, %v4242
    %4244 = vmatmul.bf16.gmra.mxu0 %v3278
    %v4245 = vpop.f32.mrf.mxu0
    %v4246 = vadd.f32 %v4197, %v4245
    %v4247 = vpop.f32.mrf.mxu0
    %v4248 = vadd.f32 %v4199, %v4247
    %4249 = vmatmul.bf16.gmra.mxu0 %v3282
    %v4250 = vpop.f32.mrf.mxu0
    %v4251 = vadd.f32 %v4202, %v4250
    %v4252 = vpop.f32.mrf.mxu0
    %v4253 = vadd.f32 %v4204, %v4252
    %4254 = vmatmul.bf16.gmra.mxu0 %v3286
    %v4255 = vpop.f32.mrf.mxu0
    %v4256 = vadd.f32 %v4207, %v4255
    %v4257 = vpop.f32.mrf.mxu0
    %v4258 = vadd.f32 %v4209, %v4257
    %4259 = vmatmul.bf16.gmra.mxu0 %v3290
    %v4260 = vpop.f32.mrf.mxu0
    %v4261 = vadd.f32 %v4212, %v4260
    %v4262 = vpop.f32.mrf.mxu0
    %v4263 = vadd.f32 %v4214, %v4262
    %4264 = vdwg.mxu0
    %4265 = vmatpush.bf16.msra.mxu0 %v3842
    %4266 = vmatpush.bf16.msra.mxu0 %v3838
    %4267 = vmatpush.bf16.msra.mxu0 %v3834
    %4268 = vmatpush.bf16.msra.mxu0 %v3830
    %4269 = vmatpush.bf16.msra.mxu0 %v3826
    %4270 = vmatpush.bf16.msra.mxu0 %v3822
    %4271 = vmatpush.bf16.msra.mxu0 %v3818
    %4272 = vmatpush.bf16.msra.mxu0 %v3814
    %4273 = vmatmul.bf16.gmra.mxu0 %v3259
    %v4274 = vpop.f32.mrf.mxu0
    %v4275 = vadd.f32 %v3422, %v4274
    %v4276 = vpop.f32.mrf.mxu0
    %v4277 = vadd.f32 %v3422, %v4276
    %4278 = vmatmul.bf16.gmra.mxu0 %v3263
    %v4279 = vpop.f32.mrf.mxu0
    %v4280 = vadd.f32 %v3422, %v4279
    %v4281 = vpop.f32.mrf.mxu0
    %v4282 = vadd.f32 %v3422, %v4281
    %4283 = vmatmul.bf16.gmra.mxu0 %v3267
    %v4284 = vpop.f32.mrf.mxu0
    %v4285 = vadd.f32 %v3422, %v4284
    %v4286 = vpop.f32.mrf.mxu0
    %v4287 = vadd.f32 %v3422, %v4286
    %4288 = vmatmul.bf16.gmra.mxu0 %v3271
    %v4289 = vpop.f32.mrf.mxu0
    %v4290 = vadd.f32 %v3422, %v4289
    %v4291 = vpop.f32.mrf.mxu0
    %v4292 = vadd.f32 %v3422, %v4291
    %4293 = vmatmul.bf16.gmra.mxu0 %v3275
    %v4294 = vpop.f32.mrf.mxu0
    %v4295 = vadd.f32 %v3422, %v4294
    %v4296 = vpop.f32.mrf.mxu0
    %v4297 = vadd.f32 %v3422, %v4296
    %4298 = vmatmul.bf16.gmra.mxu0 %v3279
    %v4299 = vpop.f32.mrf.mxu0
    %v4300 = vadd.f32 %v3422, %v4299
    %v4301 = vpop.f32.mrf.mxu0
    %v4302 = vadd.f32 %v3422, %v4301
    %4303 = vmatmul.bf16.gmra.mxu0 %v3283
    %v4304 = vpop.f32.mrf.mxu0
    %v4305 = vadd.f32 %v3422, %v4304
    %v4306 = vpop.f32.mrf.mxu0
    %v4307 = vadd.f32 %v3422, %v4306
    %4308 = vmatmul.bf16.gmra.mxu0 %v3287
    %v4309 = vpop.f32.mrf.mxu0
    %v4310 = vadd.f32 %v3422, %v4309
    %v4311 = vpop.f32.mrf.mxu0
    %v4312 = vadd.f32 %v3422, %v4311
    %4313 = vdwg.mxu0
    %4314 = vmatpush.bf16.msra.mxu0 %v3874
    %4315 = vmatpush.bf16.msra.mxu0 %v3870
    %4316 = vmatpush.bf16.msra.mxu0 %v3866
    %4317 = vmatpush.bf16.msra.mxu0 %v3862
    %4318 = vmatpush.bf16.msra.mxu0 %v3858
    %4319 = vmatpush.bf16.msra.mxu0 %v3854
    %4320 = vmatpush.bf16.msra.mxu0 %v3850
    %4321 = vmatpush.bf16.msra.mxu0 %v3846
    %4322 = vmatmul.bf16.gmra.mxu0 %v3260
    %v4323 = vpop.f32.mrf.mxu0
    %v4324 = vadd.f32 %v4275, %v4323
    %v4325 = vpop.f32.mrf.mxu0
    %v4326 = vadd.f32 %v4277, %v4325
    %4327 = vmatmul.bf16.gmra.mxu0 %v3264
    %v4328 = vpop.f32.mrf.mxu0
    %v4329 = vadd.f32 %v4280, %v4328
    %v4330 = vpop.f32.mrf.mxu0
    %v4331 = vadd.f32 %v4282, %v4330
    %4332 = vmatmul.bf16.gmra.mxu0 %v3268
    %v4333 = vpop.f32.mrf.mxu0
    %v4334 = vadd.f32 %v4285, %v4333
    %v4335 = vpop.f32.mrf.mxu0
    %v4336 = vadd.f32 %v4287, %v4335
    %4337 = vmatmul.bf16.gmra.mxu0 %v3272
    %v4338 = vpop.f32.mrf.mxu0
    %v4339 = vadd.f32 %v4290, %v4338
    %v4340 = vpop.f32.mrf.mxu0
    %v4341 = vadd.f32 %v4292, %v4340
    %4342 = vmatmul.bf16.gmra.mxu0 %v3276
    %v4343 = vpop.f32.mrf.mxu0
    %v4344 = vadd.f32 %v4295, %v4343
    %v4345 = vpop.f32.mrf.mxu0
    %v4346 = vadd.f32 %v4297, %v4345
    %4347 = vmatmul.bf16.gmra.mxu0 %v3280
    %v4348 = vpop.f32.mrf.mxu0
    %v4349 = vadd.f32 %v4300, %v4348
    %v4350 = vpop.f32.mrf.mxu0
    %v4351 = vadd.f32 %v4302, %v4350
    %4352 = vmatmul.bf16.gmra.mxu0 %v3284
    %v4353 = vpop.f32.mrf.mxu0
    %v4354 = vadd.f32 %v4305, %v4353
    %v4355 = vpop.f32.mrf.mxu0
    %v4356 = vadd.f32 %v4307, %v4355
    %4357 = vmatmul.bf16.gmra.mxu0 %v3288
    %v4358 = vpop.f32.mrf.mxu0
    %v4359 = vadd.f32 %v4310, %v4358
    %v4360 = vpop.f32.mrf.mxu0
    %v4361 = vadd.f32 %v4312, %v4360
    %4362 = vdwg.mxu0
    %4363 = vmatpush.bf16.msra.mxu0 %v3906
    %4364 = vmatpush.bf16.msra.mxu0 %v3902
    %4365 = vmatpush.bf16.msra.mxu0 %v3898
    %4366 = vmatpush.bf16.msra.mxu0 %v3894
    %4367 = vmatpush.bf16.msra.mxu0 %v3890
    %4368 = vmatpush.bf16.msra.mxu0 %v3886
    %4369 = vmatpush.bf16.msra.mxu0 %v3882
    %4370 = vmatpush.bf16.msra.mxu0 %v3878
    %4371 = vmatmul.bf16.gmra.mxu0 %v3261
    %v4372 = vpop.f32.mrf.mxu0
    %v4373 = vadd.f32 %v4324, %v4372
    %v4374 = vpop.f32.mrf.mxu0
    %v4375 = vadd.f32 %v4326, %v4374
    %4376 = vmatmul.bf16.gmra.mxu0 %v3265
    %v4377 = vpop.f32.mrf.mxu0
    %v4378 = vadd.f32 %v4329, %v4377
    %v4379 = vpop.f32.mrf.mxu0
    %v4380 = vadd.f32 %v4331, %v4379
    %4381 = vmatmul.bf16.gmra.mxu0 %v3269
    %v4382 = vpop.f32.mrf.mxu0
    %v4383 = vadd.f32 %v4334, %v4382
    %v4384 = vpop.f32.mrf.mxu0
    %v4385 = vadd.f32 %v4336, %v4384
    %4386 = vmatmul.bf16.gmra.mxu0 %v3273
    %v4387 = vpop.f32.mrf.mxu0
    %v4388 = vadd.f32 %v4339, %v4387
    %v4389 = vpop.f32.mrf.mxu0
    %v4390 = vadd.f32 %v4341, %v4389
    %4391 = vmatmul.bf16.gmra.mxu0 %v3277
    %v4392 = vpop.f32.mrf.mxu0
    %v4393 = vadd.f32 %v4344, %v4392
    %v4394 = vpop.f32.mrf.mxu0
    %v4395 = vadd.f32 %v4346, %v4394
    %4396 = vmatmul.bf16.gmra.mxu0 %v3281
    %v4397 = vpop.f32.mrf.mxu0
    %v4398 = vadd.f32 %v4349, %v4397
    %v4399 = vpop.f32.mrf.mxu0
    %v4400 = vadd.f32 %v4351, %v4399
    %4401 = vmatmul.bf16.gmra.mxu0 %v3285
    %v4402 = vpop.f32.mrf.mxu0
    %v4403 = vadd.f32 %v4354, %v4402
    %v4404 = vpop.f32.mrf.mxu0
    %v4405 = vadd.f32 %v4356, %v4404
    %4406 = vmatmul.bf16.gmra.mxu0 %v3289
    %v4407 = vpop.f32.mrf.mxu0
    %v4408 = vadd.f32 %v4359, %v4407
    %v4409 = vpop.f32.mrf.mxu0
    %v4410 = vadd.f32 %v4361, %v4409
    %4411 = vdwg.mxu0
    %4412 = vmatpush.bf16.msra.mxu0 %v3938
    %4413 = vmatpush.bf16.msra.mxu0 %v3934
    %4414 = vmatpush.bf16.msra.mxu0 %v3930
    %4415 = vmatpush.bf16.msra.mxu0 %v3926
    %4416 = vmatpush.bf16.msra.mxu0 %v3922
    %4417 = vmatpush.bf16.msra.mxu0 %v3918
    %4418 = vmatpush.bf16.msra.mxu0 %v3914
    %4419 = vmatpush.bf16.msra.mxu0 %v3910
    %4420 = vmatmul.bf16.gmra.mxu0 %v3262
    %v4421 = vpop.f32.mrf.mxu0
    %v4422 = vadd.f32 %v4373, %v4421
    %v4423 = vpop.f32.mrf.mxu0
    %v4424 = vadd.f32 %v4375, %v4423
    %4425 = vmatmul.bf16.gmra.mxu0 %v3266
    %v4426 = vpop.f32.mrf.mxu0
    %v4427 = vadd.f32 %v4378, %v4426
    %v4428 = vpop.f32.mrf.mxu0
    %v4429 = vadd.f32 %v4380, %v4428
    %4430 = vmatmul.bf16.gmra.mxu0 %v3270
    %v4431 = vpop.f32.mrf.mxu0
    %v4432 = vadd.f32 %v4383, %v4431
    %v4433 = vpop.f32.mrf.mxu0
    %v4434 = vadd.f32 %v4385, %v4433
    %4435 = vmatmul.bf16.gmra.mxu0 %v3274
    %v4436 = vpop.f32.mrf.mxu0
    %v4437 = vadd.f32 %v4388, %v4436
    %v4438 = vpop.f32.mrf.mxu0
    %v4439 = vadd.f32 %v4390, %v4438
    %4440 = vmatmul.bf16.gmra.mxu0 %v3278
    %v4441 = vpop.f32.mrf.mxu0
    %v4442 = vadd.f32 %v4393, %v4441
    %v4443 = vpop.f32.mrf.mxu0
    %v4444 = vadd.f32 %v4395, %v4443
    %4445 = vmatmul.bf16.gmra.mxu0 %v3282
    %v4446 = vpop.f32.mrf.mxu0
    %v4447 = vadd.f32 %v4398, %v4446
    %v4448 = vpop.f32.mrf.mxu0
    %v4449 = vadd.f32 %v4400, %v4448
    %4450 = vmatmul.bf16.gmra.mxu0 %v3286
    %v4451 = vpop.f32.mrf.mxu0
    %v4452 = vadd.f32 %v4403, %v4451
    %v4453 = vpop.f32.mrf.mxu0
    %v4454 = vadd.f32 %v4405, %v4453
    %4455 = vmatmul.bf16.gmra.mxu0 %v3290
    %v4456 = vpop.f32.mrf.mxu0
    %v4457 = vadd.f32 %v4408, %v4456
    %v4458 = vpop.f32.mrf.mxu0
    %v4459 = vadd.f32 %v4410, %v4458
    %4460 = vdwg.mxu0
    %4461 = vmatpush.bf16.msra.mxu0 %v3843
    %4462 = vmatpush.bf16.msra.mxu0 %v3839
    %4463 = vmatpush.bf16.msra.mxu0 %v3835
    %4464 = vmatpush.bf16.msra.mxu0 %v3831
    %4465 = vmatpush.bf16.msra.mxu0 %v3827
    %4466 = vmatpush.bf16.msra.mxu0 %v3823
    %4467 = vmatpush.bf16.msra.mxu0 %v3819
    %4468 = vmatpush.bf16.msra.mxu0 %v3815
    %4469 = vmatmul.bf16.gmra.mxu0 %v3259
    %v4470 = vpop.f32.mrf.mxu0
    %v4471 = vadd.f32 %v3423, %v4470
    %v4472 = vpop.f32.mrf.mxu0
    %v4473 = vadd.f32 %v3423, %v4472
    %4474 = vmatmul.bf16.gmra.mxu0 %v3263
    %v4475 = vpop.f32.mrf.mxu0
    %v4476 = vadd.f32 %v3423, %v4475
    %v4477 = vpop.f32.mrf.mxu0
    %v4478 = vadd.f32 %v3423, %v4477
    %4479 = vmatmul.bf16.gmra.mxu0 %v3267
    %v4480 = vpop.f32.mrf.mxu0
    %v4481 = vadd.f32 %v3423, %v4480
    %v4482 = vpop.f32.mrf.mxu0
    %v4483 = vadd.f32 %v3423, %v4482
    %4484 = vmatmul.bf16.gmra.mxu0 %v3271
    %v4485 = vpop.f32.mrf.mxu0
    %v4486 = vadd.f32 %v3423, %v4485
    %v4487 = vpop.f32.mrf.mxu0
    %v4488 = vadd.f32 %v3423, %v4487
    %4489 = vmatmul.bf16.gmra.mxu0 %v3275
    %v4490 = vpop.f32.mrf.mxu0
    %v4491 = vadd.f32 %v3423, %v4490
    %v4492 = vpop.f32.mrf.mxu0
    %v4493 = vadd.f32 %v3423, %v4492
    %4494 = vmatmul.bf16.gmra.mxu0 %v3279
    %v4495 = vpop.f32.mrf.mxu0
    %v4496 = vadd.f32 %v3423, %v4495
    %v4497 = vpop.f32.mrf.mxu0
    %v4498 = vadd.f32 %v3423, %v4497
    %4499 = vmatmul.bf16.gmra.mxu0 %v3283
    %v4500 = vpop.f32.mrf.mxu0
    %v4501 = vadd.f32 %v3423, %v4500
    %v4502 = vpop.f32.mrf.mxu0
    %v4503 = vadd.f32 %v3423, %v4502
    %4504 = vmatmul.bf16.gmra.mxu0 %v3287
    %v4505 = vpop.f32.mrf.mxu0
    %v4506 = vadd.f32 %v3423, %v4505
    %v4507 = vpop.f32.mrf.mxu0
    %v4508 = vadd.f32 %v3423, %v4507
    %4509 = vdwg.mxu0
    %4510 = vmatpush.bf16.msra.mxu0 %v3875
    %4511 = vmatpush.bf16.msra.mxu0 %v3871
    %4512 = vmatpush.bf16.msra.mxu0 %v3867
    %4513 = vmatpush.bf16.msra.mxu0 %v3863
    %4514 = vmatpush.bf16.msra.mxu0 %v3859
    %4515 = vmatpush.bf16.msra.mxu0 %v3855
    %4516 = vmatpush.bf16.msra.mxu0 %v3851
    %4517 = vmatpush.bf16.msra.mxu0 %v3847
    %4518 = vmatmul.bf16.gmra.mxu0 %v3260
    %v4519 = vpop.f32.mrf.mxu0
    %v4520 = vadd.f32 %v4471, %v4519
    %v4521 = vpop.f32.mrf.mxu0
    %v4522 = vadd.f32 %v4473, %v4521
    %4523 = vmatmul.bf16.gmra.mxu0 %v3264
    %v4524 = vpop.f32.mrf.mxu0
    %v4525 = vadd.f32 %v4476, %v4524
    %v4526 = vpop.f32.mrf.mxu0
    %v4527 = vadd.f32 %v4478, %v4526
    %4528 = vmatmul.bf16.gmra.mxu0 %v3268
    %v4529 = vpop.f32.mrf.mxu0
    %v4530 = vadd.f32 %v4481, %v4529
    %v4531 = vpop.f32.mrf.mxu0
    %v4532 = vadd.f32 %v4483, %v4531
    %4533 = vmatmul.bf16.gmra.mxu0 %v3272
    %v4534 = vpop.f32.mrf.mxu0
    %v4535 = vadd.f32 %v4486, %v4534
    %v4536 = vpop.f32.mrf.mxu0
    %v4537 = vadd.f32 %v4488, %v4536
    %4538 = vmatmul.bf16.gmra.mxu0 %v3276
    %v4539 = vpop.f32.mrf.mxu0
    %v4540 = vadd.f32 %v4491, %v4539
    %v4541 = vpop.f32.mrf.mxu0
    %v4542 = vadd.f32 %v4493, %v4541
    %4543 = vmatmul.bf16.gmra.mxu0 %v3280
    %v4544 = vpop.f32.mrf.mxu0
    %v4545 = vadd.f32 %v4496, %v4544
    %v4546 = vpop.f32.mrf.mxu0
    %v4547 = vadd.f32 %v4498, %v4546
    %4548 = vmatmul.bf16.gmra.mxu0 %v3284
    %v4549 = vpop.f32.mrf.mxu0
    %v4550 = vadd.f32 %v4501, %v4549
    %v4551 = vpop.f32.mrf.mxu0
    %v4552 = vadd.f32 %v4503, %v4551
    %4553 = vmatmul.bf16.gmra.mxu0 %v3288
    %v4554 = vpop.f32.mrf.mxu0
    %v4555 = vadd.f32 %v4506, %v4554
    %v4556 = vpop.f32.mrf.mxu0
    %v4557 = vadd.f32 %v4508, %v4556
    %4558 = vdwg.mxu0
    %4559 = vmatpush.bf16.msra.mxu0 %v3907
    %4560 = vmatpush.bf16.msra.mxu0 %v3903
    %4561 = vmatpush.bf16.msra.mxu0 %v3899
    %4562 = vmatpush.bf16.msra.mxu0 %v3895
    %4563 = vmatpush.bf16.msra.mxu0 %v3891
    %4564 = vmatpush.bf16.msra.mxu0 %v3887
    %4565 = vmatpush.bf16.msra.mxu0 %v3883
    %4566 = vmatpush.bf16.msra.mxu0 %v3879
    %4567 = vmatmul.bf16.gmra.mxu0 %v3261
    %v4568 = vpop.f32.mrf.mxu0
    %v4569 = vadd.f32 %v4520, %v4568
    %v4570 = vpop.f32.mrf.mxu0
    %v4571 = vadd.f32 %v4522, %v4570
    %4572 = vmatmul.bf16.gmra.mxu0 %v3265
    %v4573 = vpop.f32.mrf.mxu0
    %v4574 = vadd.f32 %v4525, %v4573
    %v4575 = vpop.f32.mrf.mxu0
    %v4576 = vadd.f32 %v4527, %v4575
    %4577 = vmatmul.bf16.gmra.mxu0 %v3269
    %v4578 = vpop.f32.mrf.mxu0
    %v4579 = vadd.f32 %v4530, %v4578
    %v4580 = vpop.f32.mrf.mxu0
    %v4581 = vadd.f32 %v4532, %v4580
    %4582 = vmatmul.bf16.gmra.mxu0 %v3273
    %v4583 = vpop.f32.mrf.mxu0
    %v4584 = vadd.f32 %v4535, %v4583
    %v4585 = vpop.f32.mrf.mxu0
    %v4586 = vadd.f32 %v4537, %v4585
    %4587 = vmatmul.bf16.gmra.mxu0 %v3277
    %v4588 = vpop.f32.mrf.mxu0
    %v4589 = vadd.f32 %v4540, %v4588
    %v4590 = vpop.f32.mrf.mxu0
    %v4591 = vadd.f32 %v4542, %v4590
    %4592 = vmatmul.bf16.gmra.mxu0 %v3281
    %v4593 = vpop.f32.mrf.mxu0
    %v4594 = vadd.f32 %v4545, %v4593
    %v4595 = vpop.f32.mrf.mxu0
    %v4596 = vadd.f32 %v4547, %v4595
    %4597 = vmatmul.bf16.gmra.mxu0 %v3285
    %v4598 = vpop.f32.mrf.mxu0
    %v4599 = vadd.f32 %v4550, %v4598
    %v4600 = vpop.f32.mrf.mxu0
    %v4601 = vadd.f32 %v4552, %v4600
    %4602 = vmatmul.bf16.gmra.mxu0 %v3289
    %v4603 = vpop.f32.mrf.mxu0
    %v4604 = vadd.f32 %v4555, %v4603
    %v4605 = vpop.f32.mrf.mxu0
    %v4606 = vadd.f32 %v4557, %v4605
    %4607 = vdwg.mxu0
    %4608 = vmatpush.bf16.msra.mxu0 %v3939
    %4609 = vmatpush.bf16.msra.mxu0 %v3935
    %4610 = vmatpush.bf16.msra.mxu0 %v3931
    %4611 = vmatpush.bf16.msra.mxu0 %v3927
    %4612 = vmatpush.bf16.msra.mxu0 %v3923
    %4613 = vmatpush.bf16.msra.mxu0 %v3919
    %4614 = vmatpush.bf16.msra.mxu0 %v3915
    %4615 = vmatpush.bf16.msra.mxu0 %v3911
    %4616 = vmatmul.bf16.gmra.mxu0 %v3262
    %v4617 = vpop.f32.mrf.mxu0
    %v4618 = vadd.f32 %v4569, %v4617
    %v4619 = vpop.f32.mrf.mxu0
    %v4620 = vadd.f32 %v4571, %v4619
    %4621 = vmatmul.bf16.gmra.mxu0 %v3266
    %v4622 = vpop.f32.mrf.mxu0
    %v4623 = vadd.f32 %v4574, %v4622
    %v4624 = vpop.f32.mrf.mxu0
    %v4625 = vadd.f32 %v4576, %v4624
    %4626 = vmatmul.bf16.gmra.mxu0 %v3270
    %v4627 = vpop.f32.mrf.mxu0
    %v4628 = vadd.f32 %v4579, %v4627
    %v4629 = vpop.f32.mrf.mxu0
    %v4630 = vadd.f32 %v4581, %v4629
    %4631 = vmatmul.bf16.gmra.mxu0 %v3274
    %v4632 = vpop.f32.mrf.mxu0
    %v4633 = vadd.f32 %v4584, %v4632
    %v4634 = vpop.f32.mrf.mxu0
    %v4635 = vadd.f32 %v4586, %v4634
    %4636 = vmatmul.bf16.gmra.mxu0 %v3278
    %v4637 = vpop.f32.mrf.mxu0
    %v4638 = vadd.f32 %v4589, %v4637
    %v4639 = vpop.f32.mrf.mxu0
    %v4640 = vadd.f32 %v4591, %v4639
    %4641 = vmatmul.bf16.gmra.mxu0 %v3282
    %v4642 = vpop.f32.mrf.mxu0
    %v4643 = vadd.f32 %v4594, %v4642
    %v4644 = vpop.f32.mrf.mxu0
    %v4645 = vadd.f32 %v4596, %v4644
    %4646 = vmatmul.bf16.gmra.mxu0 %v3286
    %v4647 = vpop.f32.mrf.mxu0
    %v4648 = vadd.f32 %v4599, %v4647
    %v4649 = vpop.f32.mrf.mxu0
    %v4650 = vadd.f32 %v4601, %v4649
    %4651 = vmatmul.bf16.gmra.mxu0 %v3290
    %v4652 = vpop.f32.mrf.mxu0
    %v4653 = vadd.f32 %v4604, %v4652
    %v4654 = vpop.f32.mrf.mxu0
    %v4655 = vadd.f32 %v4606, %v4654
    %4656 = vdwg.mxu0
    %4657 = vmatpush.bf16.msra.mxu0 %v3844
    %4658 = vmatpush.bf16.msra.mxu0 %v3840
    %4659 = vmatpush.bf16.msra.mxu0 %v3836
    %4660 = vmatpush.bf16.msra.mxu0 %v3832
    %4661 = vmatpush.bf16.msra.mxu0 %v3828
    %4662 = vmatpush.bf16.msra.mxu0 %v3824
    %4663 = vmatpush.bf16.msra.mxu0 %v3820
    %4664 = vmatpush.bf16.msra.mxu0 %v3816
    %4665 = vmatmul.bf16.gmra.mxu0 %v3259
    %v4666 = vpop.f32.mrf.mxu0
    %v4667 = vadd.f32 %v3424, %v4666
    %v4668 = vpop.f32.mrf.mxu0
    %v4669 = vadd.f32 %v3424, %v4668
    %4670 = vmatmul.bf16.gmra.mxu0 %v3263
    %v4671 = vpop.f32.mrf.mxu0
    %v4672 = vadd.f32 %v3424, %v4671
    %v4673 = vpop.f32.mrf.mxu0
    %v4674 = vadd.f32 %v3424, %v4673
    %4675 = vmatmul.bf16.gmra.mxu0 %v3267
    %v4676 = vpop.f32.mrf.mxu0
    %v4677 = vadd.f32 %v3424, %v4676
    %v4678 = vpop.f32.mrf.mxu0
    %v4679 = vadd.f32 %v3424, %v4678
    %4680 = vmatmul.bf16.gmra.mxu0 %v3271
    %v4681 = vpop.f32.mrf.mxu0
    %v4682 = vadd.f32 %v3424, %v4681
    %v4683 = vpop.f32.mrf.mxu0
    %v4684 = vadd.f32 %v3424, %v4683
    %4685 = vmatmul.bf16.gmra.mxu0 %v3275
    %v4686 = vpop.f32.mrf.mxu0
    %v4687 = vadd.f32 %v3424, %v4686
    %v4688 = vpop.f32.mrf.mxu0
    %v4689 = vadd.f32 %v3424, %v4688
    %4690 = vmatmul.bf16.gmra.mxu0 %v3279
    %v4691 = vpop.f32.mrf.mxu0
    %v4692 = vadd.f32 %v3424, %v4691
    %v4693 = vpop.f32.mrf.mxu0
    %v4694 = vadd.f32 %v3424, %v4693
    %4695 = vmatmul.bf16.gmra.mxu0 %v3283
    %v4696 = vpop.f32.mrf.mxu0
    %v4697 = vadd.f32 %v3424, %v4696
    %v4698 = vpop.f32.mrf.mxu0
    %v4699 = vadd.f32 %v3424, %v4698
    %4700 = vmatmul.bf16.gmra.mxu0 %v3287
    %v4701 = vpop.f32.mrf.mxu0
    %v4702 = vadd.f32 %v3424, %v4701
    %v4703 = vpop.f32.mrf.mxu0
    %v4704 = vadd.f32 %v3424, %v4703
    %4705 = vdwg.mxu0
    %4706 = vmatpush.bf16.msra.mxu0 %v3876
    %4707 = vmatpush.bf16.msra.mxu0 %v3872
    %4708 = vmatpush.bf16.msra.mxu0 %v3868
    %4709 = vmatpush.bf16.msra.mxu0 %v3864
    %4710 = vmatpush.bf16.msra.mxu0 %v3860
    %4711 = vmatpush.bf16.msra.mxu0 %v3856
    %4712 = vmatpush.bf16.msra.mxu0 %v3852
    %4713 = vmatpush.bf16.msra.mxu0 %v3848
    %4714 = vmatmul.bf16.gmra.mxu0 %v3260
    %v4715 = vpop.f32.mrf.mxu0
    %v4716 = vadd.f32 %v4667, %v4715
    %v4717 = vpop.f32.mrf.mxu0
    %v4718 = vadd.f32 %v4669, %v4717
    %4719 = vmatmul.bf16.gmra.mxu0 %v3264
    %v4720 = vpop.f32.mrf.mxu0
    %v4721 = vadd.f32 %v4672, %v4720
    %v4722 = vpop.f32.mrf.mxu0
    %v4723 = vadd.f32 %v4674, %v4722
    %4724 = vmatmul.bf16.gmra.mxu0 %v3268
    %v4725 = vpop.f32.mrf.mxu0
    %v4726 = vadd.f32 %v4677, %v4725
    %v4727 = vpop.f32.mrf.mxu0
    %v4728 = vadd.f32 %v4679, %v4727
    %4729 = vmatmul.bf16.gmra.mxu0 %v3272
    %v4730 = vpop.f32.mrf.mxu0
    %v4731 = vadd.f32 %v4682, %v4730
    %v4732 = vpop.f32.mrf.mxu0
    %v4733 = vadd.f32 %v4684, %v4732
    %4734 = vmatmul.bf16.gmra.mxu0 %v3276
    %v4735 = vpop.f32.mrf.mxu0
    %v4736 = vadd.f32 %v4687, %v4735
    %v4737 = vpop.f32.mrf.mxu0
    %v4738 = vadd.f32 %v4689, %v4737
    %4739 = vmatmul.bf16.gmra.mxu0 %v3280
    %v4740 = vpop.f32.mrf.mxu0
    %v4741 = vadd.f32 %v4692, %v4740
    %v4742 = vpop.f32.mrf.mxu0
    %v4743 = vadd.f32 %v4694, %v4742
    %4744 = vmatmul.bf16.gmra.mxu0 %v3284
    %v4745 = vpop.f32.mrf.mxu0
    %v4746 = vadd.f32 %v4697, %v4745
    %v4747 = vpop.f32.mrf.mxu0
    %v4748 = vadd.f32 %v4699, %v4747
    %4749 = vmatmul.bf16.gmra.mxu0 %v3288
    %v4750 = vpop.f32.mrf.mxu0
    %v4751 = vadd.f32 %v4702, %v4750
    %v4752 = vpop.f32.mrf.mxu0
    %v4753 = vadd.f32 %v4704, %v4752
    %4754 = vdwg.mxu0
    %4755 = vmatpush.bf16.msra.mxu0 %v3908
    %4756 = vmatpush.bf16.msra.mxu0 %v3904
    %4757 = vmatpush.bf16.msra.mxu0 %v3900
    %4758 = vmatpush.bf16.msra.mxu0 %v3896
    %4759 = vmatpush.bf16.msra.mxu0 %v3892
    %4760 = vmatpush.bf16.msra.mxu0 %v3888
    %4761 = vmatpush.bf16.msra.mxu0 %v3884
    %4762 = vmatpush.bf16.msra.mxu0 %v3880
    %4763 = vmatmul.bf16.gmra.mxu0 %v3261
    %v4764 = vpop.f32.mrf.mxu0
    %v4765 = vadd.f32 %v4716, %v4764
    %v4766 = vpop.f32.mrf.mxu0
    %v4767 = vadd.f32 %v4718, %v4766
    %4768 = vmatmul.bf16.gmra.mxu0 %v3265
    %v4769 = vpop.f32.mrf.mxu0
    %v4770 = vadd.f32 %v4721, %v4769
    %v4771 = vpop.f32.mrf.mxu0
    %v4772 = vadd.f32 %v4723, %v4771
    %4773 = vmatmul.bf16.gmra.mxu0 %v3269
    %v4774 = vpop.f32.mrf.mxu0
    %v4775 = vadd.f32 %v4726, %v4774
    %v4776 = vpop.f32.mrf.mxu0
    %v4777 = vadd.f32 %v4728, %v4776
    %4778 = vmatmul.bf16.gmra.mxu0 %v3273
    %v4779 = vpop.f32.mrf.mxu0
    %v4780 = vadd.f32 %v4731, %v4779
    %v4781 = vpop.f32.mrf.mxu0
    %v4782 = vadd.f32 %v4733, %v4781
    %4783 = vmatmul.bf16.gmra.mxu0 %v3277
    %v4784 = vpop.f32.mrf.mxu0
    %v4785 = vadd.f32 %v4736, %v4784
    %v4786 = vpop.f32.mrf.mxu0
    %v4787 = vadd.f32 %v4738, %v4786
    %4788 = vmatmul.bf16.gmra.mxu0 %v3281
    %v4789 = vpop.f32.mrf.mxu0
    %v4790 = vadd.f32 %v4741, %v4789
    %v4791 = vpop.f32.mrf.mxu0
    %v4792 = vadd.f32 %v4743, %v4791
    %4793 = vmatmul.bf16.gmra.mxu0 %v3285
    %v4794 = vpop.f32.mrf.mxu0
    %v4795 = vadd.f32 %v4746, %v4794
    %v4796 = vpop.f32.mrf.mxu0
    %v4797 = vadd.f32 %v4748, %v4796
    %4798 = vmatmul.bf16.gmra.mxu0 %v3289
    %v4799 = vpop.f32.mrf.mxu0
    %v4800 = vadd.f32 %v4751, %v4799
    %v4801 = vpop.f32.mrf.mxu0
    %v4802 = vadd.f32 %v4753, %v4801
    %4803 = vdwg.mxu0
    %4804 = vmatpush.bf16.msra.mxu0 %v3940
    %4805 = vmatpush.bf16.msra.mxu0 %v3936
    %4806 = vmatpush.bf16.msra.mxu0 %v3932
    %4807 = vmatpush.bf16.msra.mxu0 %v3928
    %4808 = vmatpush.bf16.msra.mxu0 %v3924
    %4809 = vmatpush.bf16.msra.mxu0 %v3920
    %4810 = vmatpush.bf16.msra.mxu0 %v3916
    %4811 = vmatpush.bf16.msra.mxu0 %v3912
    %4812 = vmatmul.bf16.gmra.mxu0 %v3262
    %v4813 = vpop.f32.mrf.mxu0
    %v4814 = vadd.f32 %v4765, %v4813
    %v4815 = vpop.f32.mrf.mxu0
    %v4816 = vadd.f32 %v4767, %v4815
    %4817 = vmatmul.bf16.gmra.mxu0 %v3266
    %v4818 = vpop.f32.mrf.mxu0
    %v4819 = vadd.f32 %v4770, %v4818
    %v4820 = vpop.f32.mrf.mxu0
    %v4821 = vadd.f32 %v4772, %v4820
    %4822 = vmatmul.bf16.gmra.mxu0 %v3270
    %v4823 = vpop.f32.mrf.mxu0
    %v4824 = vadd.f32 %v4775, %v4823
    %v4825 = vpop.f32.mrf.mxu0
    %v4826 = vadd.f32 %v4777, %v4825
    %4827 = vmatmul.bf16.gmra.mxu0 %v3274
    %v4828 = vpop.f32.mrf.mxu0
    %v4829 = vadd.f32 %v4780, %v4828
    %v4830 = vpop.f32.mrf.mxu0
    %v4831 = vadd.f32 %v4782, %v4830
    %4832 = vmatmul.bf16.gmra.mxu0 %v3278
    %v4833 = vpop.f32.mrf.mxu0
    %v4834 = vadd.f32 %v4785, %v4833
    %v4835 = vpop.f32.mrf.mxu0
    %v4836 = vadd.f32 %v4787, %v4835
    %4837 = vmatmul.bf16.gmra.mxu0 %v3282
    %v4838 = vpop.f32.mrf.mxu0
    %v4839 = vadd.f32 %v4790, %v4838
    %v4840 = vpop.f32.mrf.mxu0
    %v4841 = vadd.f32 %v4792, %v4840
    %4842 = vmatmul.bf16.gmra.mxu0 %v3286
    %v4843 = vpop.f32.mrf.mxu0
    %v4844 = vadd.f32 %v4795, %v4843
    %v4845 = vpop.f32.mrf.mxu0
    %v4846 = vadd.f32 %v4797, %v4845
    %4847 = vmatmul.bf16.gmra.mxu0 %v3290
    %v4848 = vpop.f32.mrf.mxu0
    %v4849 = vadd.f32 %v4800, %v4848
    %v4850 = vpop.f32.mrf.mxu0
    %v4851 = vadd.f32 %v4802, %v4850
    %4852 = vdwg.mxu0
    %v4853 = vmax.f32 %v4226, 0.0
    %v4854 = vmax.f32 %v4422, 0.0
    %v4855 = vmax.f32 %v4618, 0.0
    %v4856 = vmax.f32 %v4814, 0.0
    %v4857 = vmax.f32 %v4228, 0.0
    %v4858 = vmax.f32 %v4424, 0.0
    %v4859 = vmax.f32 %v4620, 0.0
    %v4860 = vmax.f32 %v4816, 0.0
    %v4861 = vmax.f32 %v4231, 0.0
    %v4862 = vmax.f32 %v4427, 0.0
    %v4863 = vmax.f32 %v4623, 0.0
    %v4864 = vmax.f32 %v4819, 0.0
    %v4865 = vmax.f32 %v4233, 0.0
    %v4866 = vmax.f32 %v4429, 0.0
    %v4867 = vmax.f32 %v4625, 0.0
    %v4868 = vmax.f32 %v4821, 0.0
    %v4869 = vmax.f32 %v4236, 0.0
    %v4870 = vmax.f32 %v4432, 0.0
    %v4871 = vmax.f32 %v4628, 0.0
    %v4872 = vmax.f32 %v4824, 0.0
    %v4873 = vmax.f32 %v4238, 0.0
    %v4874 = vmax.f32 %v4434, 0.0
    %v4875 = vmax.f32 %v4630, 0.0
    %v4876 = vmax.f32 %v4826, 0.0
    %v4877 = vmax.f32 %v4241, 0.0
    %v4878 = vmax.f32 %v4437, 0.0
    %v4879 = vmax.f32 %v4633, 0.0
    %v4880 = vmax.f32 %v4829, 0.0
    %v4881 = vmax.f32 %v4243, 0.0
    %v4882 = vmax.f32 %v4439, 0.0
    %v4883 = vmax.f32 %v4635, 0.0
    %v4884 = vmax.f32 %v4831, 0.0
    %v4885 = vmax.f32 %v4246, 0.0
    %v4886 = vmax.f32 %v4442, 0.0
    %v4887 = vmax.f32 %v4638, 0.0
    %v4888 = vmax.f32 %v4834, 0.0
    %v4889 = vmax.f32 %v4248, 0.0
    %v4890 = vmax.f32 %v4444, 0.0
    %v4891 = vmax.f32 %v4640, 0.0
    %v4892 = vmax.f32 %v4836, 0.0
    %v4893 = vmax.f32 %v4251, 0.0
    %v4894 = vmax.f32 %v4447, 0.0
    %v4895 = vmax.f32 %v4643, 0.0
    %v4896 = vmax.f32 %v4839, 0.0
    %v4897 = vmax.f32 %v4253, 0.0
    %v4898 = vmax.f32 %v4449, 0.0
    %v4899 = vmax.f32 %v4645, 0.0
    %v4900 = vmax.f32 %v4841, 0.0
    %v4901 = vmax.f32 %v4256, 0.0
    %v4902 = vmax.f32 %v4452, 0.0
    %v4903 = vmax.f32 %v4648, 0.0
    %v4904 = vmax.f32 %v4844, 0.0
    %v4905 = vmax.f32 %v4258, 0.0
    %v4906 = vmax.f32 %v4454, 0.0
    %v4907 = vmax.f32 %v4650, 0.0
    %v4908 = vmax.f32 %v4846, 0.0
    %v4909 = vmax.f32 %v4261, 0.0
    %v4910 = vmax.f32 %v4457, 0.0
    %v4911 = vmax.f32 %v4653, 0.0
    %v4912 = vmax.f32 %v4849, 0.0
    %v4913 = vmax.f32 %v4263, 0.0
    %v4914 = vmax.f32 %v4459, 0.0
    %v4915 = vmax.f32 %v4655, 0.0
    %v4916 = vmax.f32 %v4851, 0.0
    %v4917 = vpack.c.bf16 %v4857, %v4853
    %v4918 = vpack.c.bf16 %v4858, %v4854
    %v4919 = vpack.c.bf16 %v4859, %v4855
    %v4920 = vpack.c.bf16 %v4860, %v4856
    %v4921 = vpack.c.bf16 %v4865, %v4861
    %v4922 = vpack.c.bf16 %v4866, %v4862
    %v4923 = vpack.c.bf16 %v4867, %v4863
    %v4924 = vpack.c.bf16 %v4868, %v4864
    %v4925 = vpack.c.bf16 %v4873, %v4869
    %v4926 = vpack.c.bf16 %v4874, %v4870
    %v4927 = vpack.c.bf16 %v4875, %v4871
    %v4928 = vpack.c.bf16 %v4876, %v4872
    %v4929 = vpack.c.bf16 %v4881, %v4877
    %v4930 = vpack.c.bf16 %v4882, %v4878
    %v4931 = vpack.c.bf16 %v4883, %v4879
    %v4932 = vpack.c.bf16 %v4884, %v4880
    %v4933 = vpack.c.bf16 %v4889, %v4885
    %v4934 = vpack.c.bf16 %v4890, %v4886
    %v4935 = vpack.c.bf16 %v4891, %v4887
    %v4936 = vpack.c.bf16 %v4892, %v4888
    %v4937 = vpack.c.bf16 %v4897, %v4893
    %v4938 = vpack.c.bf16 %v4898, %v4894
    %v4939 = vpack.c.bf16 %v4899, %v4895
    %v4940 = vpack.c.bf16 %v4900, %v4896
    %v4941 = vpack.c.bf16 %v4905, %v4901
    %v4942 = vpack.c.bf16 %v4906, %v4902
    %v4943 = vpack.c.bf16 %v4907, %v4903
    %v4944 = vpack.c.bf16 %v4908, %v4904
    %v4945 = vpack.c.bf16 %v4913, %v4909
    %v4946 = vpack.c.bf16 %v4914, %v4910
    %v4947 = vpack.c.bf16 %v4915, %v4911
    %v4948 = vpack.c.bf16 %v4916, %v4912
    %v4949 = vld [vmem:[#allocation11] sm:$0xf]
    %v4950 = vld [vmem:[#allocation11 + $0x4] sm:$0xf]
    %v4951 = vld [vmem:[#allocation11 + $0x8] sm:$0xf]
    %v4952 = vld [vmem:[#allocation11 + $0xc] sm:$0xf]
    %v4953 = vld [vmem:[#allocation11 + $0x10] sm:$0xf]
    %v4954 = vld [vmem:[#allocation11 + $0x14] sm:$0xf]
    %v4955 = vld [vmem:[#allocation11 + $0x18] sm:$0xf]
    %v4956 = vld [vmem:[#allocation11 + $0x1c] sm:$0xf]
    %v4957 = vld [vmem:[#allocation11 + $0x20] sm:$0xf]
    %v4958 = vld [vmem:[#allocation11 + $0x24] sm:$0xf]
    %v4959 = vld [vmem:[#allocation11 + $0x28] sm:$0xf]
    %v4960 = vld [vmem:[#allocation11 + $0x2c] sm:$0xf]
    %v4961 = vld [vmem:[#allocation11 + $0x30] sm:$0xf]
    %v4962 = vld [vmem:[#allocation11 + $0x34] sm:$0xf]
    %v4963 = vld [vmem:[#allocation11 + $0x38] sm:$0xf]
    %v4964 = vld [vmem:[#allocation11 + $0x3c] sm:$0xf]
    %v4965 = vld [vmem:[#allocation11 + $0x40] sm:$0xf]
    %v4966 = vld [vmem:[#allocation11 + $0x44] sm:$0xf]
    %v4967 = vld [vmem:[#allocation11 + $0x48] sm:$0xf]
    %v4968 = vld [vmem:[#allocation11 + $0x4c] sm:$0xf]
    %v4969 = vld [vmem:[#allocation11 + $0x50] sm:$0xf]
    %v4970 = vld [vmem:[#allocation11 + $0x54] sm:$0xf]
    %v4971 = vld [vmem:[#allocation11 + $0x58] sm:$0xf]
    %v4972 = vld [vmem:[#allocation11 + $0x5c] sm:$0xf]
    %v4973 = vld [vmem:[#allocation11 + $0x60] sm:$0xf]
    %v4974 = vld [vmem:[#allocation11 + $0x64] sm:$0xf]
    %v4975 = vld [vmem:[#allocation11 + $0x68] sm:$0xf]
    %v4976 = vld [vmem:[#allocation11 + $0x6c] sm:$0xf]
    %v4977 = vld [vmem:[#allocation11 + $0x70] sm:$0xf]
    %v4978 = vld [vmem:[#allocation11 + $0x74] sm:$0xf]
    %v4979 = vld [vmem:[#allocation11 + $0x78] sm:$0xf]
    %v4980 = vld [vmem:[#allocation11 + $0x7c] sm:$0xf]
    %v4981 = vld [vmem:[#allocation11 + $0x80] sm:$0xf]
    %v4982 = vld [vmem:[#allocation11 + $0x84] sm:$0xf]
    %v4983 = vld [vmem:[#allocation11 + $0x88] sm:$0xf]
    %v4984 = vld [vmem:[#allocation11 + $0x8c] sm:$0xf]
    %v4985 = vld [vmem:[#allocation11 + $0x90] sm:$0xf]
    %v4986 = vld [vmem:[#allocation11 + $0x94] sm:$0xf]
    %v4987 = vld [vmem:[#allocation11 + $0x98] sm:$0xf]
    %v4988 = vld [vmem:[#allocation11 + $0x9c] sm:$0xf]
    %v4989 = vld [vmem:[#allocation11 + $0xa0] sm:$0xf]
    %v4990 = vld [vmem:[#allocation11 + $0xa4] sm:$0xf]
    %v4991 = vld [vmem:[#allocation11 + $0xa8] sm:$0xf]
    %v4992 = vld [vmem:[#allocation11 + $0xac] sm:$0xf]
    %v4993 = vld [vmem:[#allocation11 + $0xb0] sm:$0xf]
    %v4994 = vld [vmem:[#allocation11 + $0xb4] sm:$0xf]
    %v4995 = vld [vmem:[#allocation11 + $0xb8] sm:$0xf]
    %v4996 = vld [vmem:[#allocation11 + $0xbc] sm:$0xf]
    %v4997 = vld [vmem:[#allocation11 + $0xc0] sm:$0xf]
    %v4998 = vld [vmem:[#allocation11 + $0xc4] sm:$0xf]
    %v4999 = vld [vmem:[#allocation11 + $0xc8] sm:$0xf]
    %v5000 = vld [vmem:[#allocation11 + $0xcc] sm:$0xf]
    %v5001 = vld [vmem:[#allocation11 + $0xd0] sm:$0xf]
    %v5002 = vld [vmem:[#allocation11 + $0xd4] sm:$0xf]
    %v5003 = vld [vmem:[#allocation11 + $0xd8] sm:$0xf]
    %v5004 = vld [vmem:[#allocation11 + $0xdc] sm:$0xf]
    %v5005 = vld [vmem:[#allocation11 + $0xe0] sm:$0xf]
    %v5006 = vld [vmem:[#allocation11 + $0xe4] sm:$0xf]
    %v5007 = vld [vmem:[#allocation11 + $0xe8] sm:$0xf]
    %v5008 = vld [vmem:[#allocation11 + $0xec] sm:$0xf]
    %v5009 = vld [vmem:[#allocation11 + $0xf0] sm:$0xf]
    %v5010 = vld [vmem:[#allocation11 + $0xf4] sm:$0xf]
    %v5011 = vld [vmem:[#allocation11 + $0xf8] sm:$0xf]
    %v5012 = vld [vmem:[#allocation11 + $0xfc] sm:$0xf]
    %v5013 = vld [vmem:[%s6] sm:$0x1]
    %v5015 = vperm.slane %v5013, 0
    %v5081 = vunpack.c.l.b16 %v4949
    %v5082 = vunpack.c.l.b16 %v4950
    %v5083 = vunpack.c.l.b16 %v4951
    %v5084 = vunpack.c.l.b16 %v4952
    %v5085 = vunpack.c.l.b16 %v4953
    %v5086 = vunpack.c.l.b16 %v4954
    %v5087 = vunpack.c.l.b16 %v4955
    %v5088 = vunpack.c.l.b16 %v4956
    %v5089 = vunpack.c.l.b16 %v4957
    %v5090 = vunpack.c.l.b16 %v4958
    %v5091 = vunpack.c.l.b16 %v4959
    %v5092 = vunpack.c.l.b16 %v4960
    %v5093 = vunpack.c.l.b16 %v4961
    %v5094 = vunpack.c.l.b16 %v4962
    %v5095 = vunpack.c.l.b16 %v4963
    %v5096 = vunpack.c.l.b16 %v4964
    %v5097 = vunpack.c.l.b16 %v4965
    %v5098 = vunpack.c.l.b16 %v4966
    %v5099 = vunpack.c.l.b16 %v4967
    %v5100 = vunpack.c.l.b16 %v4968
    %v5101 = vunpack.c.l.b16 %v4969
    %v5102 = vunpack.c.l.b16 %v4970
    %v5103 = vunpack.c.l.b16 %v4971
    %v5104 = vunpack.c.l.b16 %v4972
    %v5105 = vunpack.c.l.b16 %v4973
    %v5106 = vunpack.c.l.b16 %v4974
    %v5107 = vunpack.c.l.b16 %v4975
    %v5108 = vunpack.c.l.b16 %v4976
    %v5109 = vunpack.c.l.b16 %v4977
    %v5110 = vunpack.c.l.b16 %v4978
    %v5111 = vunpack.c.l.b16 %v4979
    %v5112 = vunpack.c.l.b16 %v4980
    %v5113 = vunpack.c.l.b16 %v4981
    %v5114 = vunpack.c.l.b16 %v4982
    %v5115 = vunpack.c.l.b16 %v4983
    %v5116 = vunpack.c.l.b16 %v4984
    %v5117 = vunpack.c.l.b16 %v4985
    %v5118 = vunpack.c.l.b16 %v4986
    %v5119 = vunpack.c.l.b16 %v4987
    %v5120 = vunpack.c.l.b16 %v4988
    %v5121 = vunpack.c.l.b16 %v4989
    %v5122 = vunpack.c.l.b16 %v4990
    %v5123 = vunpack.c.l.b16 %v4991
    %v5124 = vunpack.c.l.b16 %v4992
    %v5125 = vunpack.c.l.b16 %v4993
    %v5126 = vunpack.c.l.b16 %v4994
    %v5127 = vunpack.c.l.b16 %v4995
    %v5128 = vunpack.c.l.b16 %v4996
    %v5129 = vunpack.c.l.b16 %v4997
    %v5130 = vunpack.c.l.b16 %v4998
    %v5131 = vunpack.c.l.b16 %v4999
    %v5132 = vunpack.c.l.b16 %v5000
    %v5133 = vunpack.c.l.b16 %v5001
    %v5134 = vunpack.c.l.b16 %v5002
    %v5135 = vunpack.c.l.b16 %v5003
    %v5136 = vunpack.c.l.b16 %v5004
    %v5137 = vunpack.c.l.b16 %v5005
    %v5138 = vunpack.c.l.b16 %v5006
    %v5139 = vunpack.c.l.b16 %v5007
    %v5140 = vunpack.c.l.b16 %v5008
    %v5141 = vunpack.c.l.b16 %v5009
    %v5142 = vunpack.c.l.b16 %v5010
    %v5143 = vunpack.c.l.b16 %v5011
    %v5144 = vunpack.c.l.b16 %v5012
    %v5145 = vpack.c.b16 %v5082, %v5081
    %v5146 = vpack.c.b16 %v5084, %v5083
    %v5147 = vpack.c.b16 %v5086, %v5085
    %v5148 = vpack.c.b16 %v5088, %v5087
    %v5149 = vpack.c.b16 %v5090, %v5089
    %v5150 = vpack.c.b16 %v5092, %v5091
    %v5151 = vpack.c.b16 %v5094, %v5093
    %v5152 = vpack.c.b16 %v5096, %v5095
    %v5153 = vpack.c.b16 %v5098, %v5097
    %v5154 = vpack.c.b16 %v5100, %v5099
    %v5155 = vpack.c.b16 %v5102, %v5101
    %v5156 = vpack.c.b16 %v5104, %v5103
    %v5157 = vpack.c.b16 %v5106, %v5105
    %v5158 = vpack.c.b16 %v5108, %v5107
    %v5159 = vpack.c.b16 %v5110, %v5109
    %v5160 = vpack.c.b16 %v5112, %v5111
    %v5161 = vpack.c.b16 %v5114, %v5113
    %v5162 = vpack.c.b16 %v5116, %v5115
    %v5163 = vpack.c.b16 %v5118, %v5117
    %v5164 = vpack.c.b16 %v5120, %v5119
    %v5165 = vpack.c.b16 %v5122, %v5121
    %v5166 = vpack.c.b16 %v5124, %v5123
    %v5167 = vpack.c.b16 %v5126, %v5125
    %v5168 = vpack.c.b16 %v5128, %v5127
    %v5169 = vpack.c.b16 %v5130, %v5129
    %v5170 = vpack.c.b16 %v5132, %v5131
    %v5171 = vpack.c.b16 %v5134, %v5133
    %v5172 = vpack.c.b16 %v5136, %v5135
    %v5173 = vpack.c.b16 %v5138, %v5137
    %v5174 = vpack.c.b16 %v5140, %v5139
    %v5175 = vpack.c.b16 %v5142, %v5141
    %v5176 = vpack.c.b16 %v5144, %v5143
    %5209 = vmatpush.bf16.msra.mxu0 %v5152
    %5210 = vmatpush.bf16.msra.mxu0 %v5151
    %5211 = vmatpush.bf16.msra.mxu0 %v5150
    %5212 = vmatpush.bf16.msra.mxu0 %v5149
    %5213 = vmatpush.bf16.msra.mxu0 %v5148
    %5214 = vmatpush.bf16.msra.mxu0 %v5147
    %5215 = vmatpush.bf16.msra.mxu0 %v5146
    %5216 = vmatpush.bf16.msra.mxu0 %v5145
    %5217 = vmatmul.bf16.gmra.mxu0 %v4917
    %v5218 = vpop.f32.mrf.mxu0
    %v5219 = vadd.f32 %v5015, %v5218
    %v5220 = vpop.f32.mrf.mxu0
    %v5221 = vadd.f32 %v5015, %v5220
    %5222 = vmatmul.bf16.gmra.mxu0 %v4921
    %v5223 = vpop.f32.mrf.mxu0
    %v5224 = vadd.f32 %v5015, %v5223
    %v5225 = vpop.f32.mrf.mxu0
    %v5226 = vadd.f32 %v5015, %v5225
    %5227 = vmatmul.bf16.gmra.mxu0 %v4925
    %v5228 = vpop.f32.mrf.mxu0
    %v5229 = vadd.f32 %v5015, %v5228
    %v5230 = vpop.f32.mrf.mxu0
    %v5231 = vadd.f32 %v5015, %v5230
    %5232 = vmatmul.bf16.gmra.mxu0 %v4929
    %v5233 = vpop.f32.mrf.mxu0
    %v5234 = vadd.f32 %v5015, %v5233
    %v5235 = vpop.f32.mrf.mxu0
    %v5236 = vadd.f32 %v5015, %v5235
    %5237 = vmatmul.bf16.gmra.mxu0 %v4933
    %v5238 = vpop.f32.mrf.mxu0
    %v5239 = vadd.f32 %v5015, %v5238
    %v5240 = vpop.f32.mrf.mxu0
    %v5241 = vadd.f32 %v5015, %v5240
    %5242 = vmatmul.bf16.gmra.mxu0 %v4937
    %v5243 = vpop.f32.mrf.mxu0
    %v5244 = vadd.f32 %v5015, %v5243
    %v5245 = vpop.f32.mrf.mxu0
    %v5246 = vadd.f32 %v5015, %v5245
    %5247 = vmatmul.bf16.gmra.mxu0 %v4941
    %v5248 = vpop.f32.mrf.mxu0
    %v5249 = vadd.f32 %v5015, %v5248
    %v5250 = vpop.f32.mrf.mxu0
    %v5251 = vadd.f32 %v5015, %v5250
    %5252 = vmatmul.bf16.gmra.mxu0 %v4945
    %v5253 = vpop.f32.mrf.mxu0
    %v5254 = vadd.f32 %v5015, %v5253
    %v5255 = vpop.f32.mrf.mxu0
    %v5256 = vadd.f32 %v5015, %v5255
    %5257 = vdwg.mxu0
    %5258 = vmatpush.bf16.msra.mxu0 %v5160
    %5259 = vmatpush.bf16.msra.mxu0 %v5159
    %5260 = vmatpush.bf16.msra.mxu0 %v5158
    %5261 = vmatpush.bf16.msra.mxu0 %v5157
    %5262 = vmatpush.bf16.msra.mxu0 %v5156
    %5263 = vmatpush.bf16.msra.mxu0 %v5155
    %5264 = vmatpush.bf16.msra.mxu0 %v5154
    %5265 = vmatpush.bf16.msra.mxu0 %v5153
    %5266 = vmatmul.bf16.gmra.mxu0 %v4918
    %v5267 = vpop.f32.mrf.mxu0
    %v5268 = vadd.f32 %v5219, %v5267
    %v5269 = vpop.f32.mrf.mxu0
    %v5270 = vadd.f32 %v5221, %v5269
    %5271 = vmatmul.bf16.gmra.mxu0 %v4922
    %v5272 = vpop.f32.mrf.mxu0
    %v5273 = vadd.f32 %v5224, %v5272
    %v5274 = vpop.f32.mrf.mxu0
    %v5275 = vadd.f32 %v5226, %v5274
    %5276 = vmatmul.bf16.gmra.mxu0 %v4926
    %v5277 = vpop.f32.mrf.mxu0
    %v5278 = vadd.f32 %v5229, %v5277
    %v5279 = vpop.f32.mrf.mxu0
    %v5280 = vadd.f32 %v5231, %v5279
    %5281 = vmatmul.bf16.gmra.mxu0 %v4930
    %v5282 = vpop.f32.mrf.mxu0
    %v5283 = vadd.f32 %v5234, %v5282
    %v5284 = vpop.f32.mrf.mxu0
    %v5285 = vadd.f32 %v5236, %v5284
    %5286 = vmatmul.bf16.gmra.mxu0 %v4934
    %v5287 = vpop.f32.mrf.mxu0
    %v5288 = vadd.f32 %v5239, %v5287
    %v5289 = vpop.f32.mrf.mxu0
    %v5290 = vadd.f32 %v5241, %v5289
    %5291 = vmatmul.bf16.gmra.mxu0 %v4938
    %v5292 = vpop.f32.mrf.mxu0
    %v5293 = vadd.f32 %v5244, %v5292
    %v5294 = vpop.f32.mrf.mxu0
    %v5295 = vadd.f32 %v5246, %v5294
    %5296 = vmatmul.bf16.gmra.mxu0 %v4942
    %v5297 = vpop.f32.mrf.mxu0
    %v5298 = vadd.f32 %v5249, %v5297
    %v5299 = vpop.f32.mrf.mxu0
    %v5300 = vadd.f32 %v5251, %v5299
    %5301 = vmatmul.bf16.gmra.mxu0 %v4946
    %v5302 = vpop.f32.mrf.mxu0
    %v5303 = vadd.f32 %v5254, %v5302
    %v5304 = vpop.f32.mrf.mxu0
    %v5305 = vadd.f32 %v5256, %v5304
    %5306 = vdwg.mxu0
    %5307 = vmatpush.bf16.msra.mxu0 %v5168
    %5308 = vmatpush.bf16.msra.mxu0 %v5167
    %5309 = vmatpush.bf16.msra.mxu0 %v5166
    %5310 = vmatpush.bf16.msra.mxu0 %v5165
    %5311 = vmatpush.bf16.msra.mxu0 %v5164
    %5312 = vmatpush.bf16.msra.mxu0 %v5163
    %5313 = vmatpush.bf16.msra.mxu0 %v5162
    %5314 = vmatpush.bf16.msra.mxu0 %v5161
    %5315 = vmatmul.bf16.gmra.mxu0 %v4919
    %v5316 = vpop.f32.mrf.mxu0
    %v5317 = vadd.f32 %v5268, %v5316
    %v5318 = vpop.f32.mrf.mxu0
    %v5319 = vadd.f32 %v5270, %v5318
    %5320 = vmatmul.bf16.gmra.mxu0 %v4923
    %v5321 = vpop.f32.mrf.mxu0
    %v5322 = vadd.f32 %v5273, %v5321
    %v5323 = vpop.f32.mrf.mxu0
    %v5324 = vadd.f32 %v5275, %v5323
    %5325 = vmatmul.bf16.gmra.mxu0 %v4927
    %v5326 = vpop.f32.mrf.mxu0
    %v5327 = vadd.f32 %v5278, %v5326
    %v5328 = vpop.f32.mrf.mxu0
    %v5329 = vadd.f32 %v5280, %v5328
    %5330 = vmatmul.bf16.gmra.mxu0 %v4931
    %v5331 = vpop.f32.mrf.mxu0
    %v5332 = vadd.f32 %v5283, %v5331
    %v5333 = vpop.f32.mrf.mxu0
    %v5334 = vadd.f32 %v5285, %v5333
    %5335 = vmatmul.bf16.gmra.mxu0 %v4935
    %v5336 = vpop.f32.mrf.mxu0
    %v5337 = vadd.f32 %v5288, %v5336
    %v5338 = vpop.f32.mrf.mxu0
    %v5339 = vadd.f32 %v5290, %v5338
    %5340 = vmatmul.bf16.gmra.mxu0 %v4939
    %v5341 = vpop.f32.mrf.mxu0
    %v5342 = vadd.f32 %v5293, %v5341
    %v5343 = vpop.f32.mrf.mxu0
    %v5344 = vadd.f32 %v5295, %v5343
    %5345 = vmatmul.bf16.gmra.mxu0 %v4943
    %v5346 = vpop.f32.mrf.mxu0
    %v5347 = vadd.f32 %v5298, %v5346
    %v5348 = vpop.f32.mrf.mxu0
    %v5349 = vadd.f32 %v5300, %v5348
    %5350 = vmatmul.bf16.gmra.mxu0 %v4947
    %v5351 = vpop.f32.mrf.mxu0
    %v5352 = vadd.f32 %v5303, %v5351
    %v5353 = vpop.f32.mrf.mxu0
    %v5354 = vadd.f32 %v5305, %v5353
    %5355 = vdwg.mxu0
    %5356 = vmatpush.bf16.msra.mxu0 %v5176
    %5357 = vmatpush.bf16.msra.mxu0 %v5175
    %5358 = vmatpush.bf16.msra.mxu0 %v5174
    %5359 = vmatpush.bf16.msra.mxu0 %v5173
    %5360 = vmatpush.bf16.msra.mxu0 %v5172
    %5361 = vmatpush.bf16.msra.mxu0 %v5171
    %5362 = vmatpush.bf16.msra.mxu0 %v5170
    %5363 = vmatpush.bf16.msra.mxu0 %v5169
    %5364 = vmatmul.bf16.gmra.mxu0 %v4920
    %v5365 = vpop.f32.mrf.mxu0
    %v5366 = vadd.f32 %v5317, %v5365
    %v5367 = vpop.f32.mrf.mxu0
    %v5368 = vadd.f32 %v5319, %v5367
    %5369 = vmatmul.bf16.gmra.mxu0 %v4924
    %v5370 = vpop.f32.mrf.mxu0
    %v5371 = vadd.f32 %v5322, %v5370
    %v5372 = vpop.f32.mrf.mxu0
    %v5373 = vadd.f32 %v5324, %v5372
    %5374 = vmatmul.bf16.gmra.mxu0 %v4928
    %v5375 = vpop.f32.mrf.mxu0
    %v5376 = vadd.f32 %v5327, %v5375
    %v5377 = vpop.f32.mrf.mxu0
    %v5378 = vadd.f32 %v5329, %v5377
    %5379 = vmatmul.bf16.gmra.mxu0 %v4932
    %v5380 = vpop.f32.mrf.mxu0
    %v5381 = vadd.f32 %v5332, %v5380
    %v5382 = vpop.f32.mrf.mxu0
    %v5383 = vadd.f32 %v5334, %v5382
    %5384 = vmatmul.bf16.gmra.mxu0 %v4936
    %v5385 = vpop.f32.mrf.mxu0
    %v5386 = vadd.f32 %v5337, %v5385
    %v5387 = vpop.f32.mrf.mxu0
    %v5388 = vadd.f32 %v5339, %v5387
    %5389 = vmatmul.bf16.gmra.mxu0 %v4940
    %v5390 = vpop.f32.mrf.mxu0
    %v5391 = vadd.f32 %v5342, %v5390
    %v5392 = vpop.f32.mrf.mxu0
    %v5393 = vadd.f32 %v5344, %v5392
    %5394 = vmatmul.bf16.gmra.mxu0 %v4944
    %v5395 = vpop.f32.mrf.mxu0
    %v5396 = vadd.f32 %v5347, %v5395
    %v5397 = vpop.f32.mrf.mxu0
    %v5398 = vadd.f32 %v5349, %v5397
    %5399 = vmatmul.bf16.gmra.mxu0 %v4948
    %v5400 = vpop.f32.mrf.mxu0
    %v5401 = vadd.f32 %v5352, %v5400
    %v5402 = vpop.f32.mrf.mxu0
    %v5403 = vadd.f32 %v5354, %v5402
    %5404 = vdwg.mxu0
    %5405 = vst [vmem:[#allocation13] sm:$0xff] %v5366
    %5406 = vst [vmem:[#allocation13 + $0x8] sm:$0xff] %v5368
    %5407 = vst [vmem:[#allocation13 + $0x10] sm:$0xff] %v5371
    %5408 = vst [vmem:[#allocation13 + $0x18] sm:$0xff] %v5373
    %5409 = vst [vmem:[#allocation13 + $0x20] sm:$0xff] %v5376
    %5410 = vst [vmem:[#allocation13 + $0x28] sm:$0xff] %v5378
    %5411 = vst [vmem:[#allocation13 + $0x30] sm:$0xff] %v5381
    %5412 = vst [vmem:[#allocation13 + $0x38] sm:$0xff] %v5383
    %5413 = vst [vmem:[#allocation13 + $0x40] sm:$0xff] %v5386
    %5414 = vst [vmem:[#allocation13 + $0x48] sm:$0xff] %v5388
    %5415 = vst [vmem:[#allocation13 + $0x50] sm:$0xff] %v5391
    %5416 = vst [vmem:[#allocation13 + $0x58] sm:$0xff] %v5393
    %5417 = vst [vmem:[#allocation13 + $0x60] sm:$0xff] %v5396
    %5418 = vst [vmem:[#allocation13 + $0x68] sm:$0xff] %v5398
    %5419 = vst [vmem:[#allocation13 + $0x70] sm:$0xff] %v5401
    %5420 = vst [vmem:[#allocation13 + $0x78] sm:$0xff] %v5403
    // Predicated region
    $region54: #{tpu_custom_call.1} parent=1 // pred_check
      _
    $region55: #{tpu_custom_call.1} parent=1 // pred_check_branch
      %5422 = sbr.rel (0) target = $region57
    $region56: #{tpu_custom_call.1} parent=1 // pred_region
      %5424 = vsyncadd [#allocation4], 0
      %s5425 = sshll.u32 [#allocation13], 4
      %s5426 = int_to_ptr.vmem [resolvable:$true] %s5425
      %s5427 = sshll.u32 %s7, 4
      %s5428 = int_to_ptr.hbm [resolvable:$true] %s5427
      %5433 = dma.vmem_to_hbm [thread:$0]  %s5426, 2048, %s5428, [#allocation4], 128, 128, 8
    $region57: #{tpu_custom_call.1} parent=1 // pred_fallthru
      _
    // Predicated region
    $region58: #{tpu_custom_call.1} parent=1 // pred_check
      _
    $region59: #{tpu_custom_call.1} parent=1 // pred_check_branch
      %5435 = sbr.rel (0) target = $region61
    $region60: #{tpu_custom_call.1} parent=1 // pred_region
      %5437 = dma.done [#allocation4], 2048
    $region61: #{tpu_custom_call.1} parent=1 // pred_fallthru
      _
    %5438 = vsyncpa [#allocation3], 1
    %5439 = vsyncpa [#allocation6], 1
    %5440 = vsyncpa [#allocation9], 1
    %5441 = vsyncpa [#allocation12], 1
    %5442 = vsyncpa [#allocation4], 1

</llo_original>
